<compile_context>
chip_gen: v7x
topology: tpu7x:2x2x1
jax: 0.10.0
libtpu: 0.0.40
codegen_flags: <defaults>
</compile_context>

<pallas_src>
import numpy as np
import jax
import jax.numpy as jnp
from jax.experimental import pallas as pl
from jax.experimental.pallas import tpu as pltpu

# ----------------------- config (matches Decoder.__init__) -----------------------
IN_CHANNELS = 4
HIDDEN_CHANNELS = 16
KERNEL_SIZE = 3
DILATION_RATE = 2
NUM_FLOW_BLOCKS = 2
NUM_COUPLING_LAYERS = 2
NUM_SPLITS = 4
NUM_SQUEEZE = 2
SIGMOID_SCALE = False


# ------------------------------- glue: squeeze ops -------------------------------
def squeeze_jax(x, x_mask, num_sqz=2):
    b, c, t = x.shape
    t = (t // num_sqz) * num_sqz
    x = x[:, :, :t]
    x_sqz = x.reshape(b, c, t // num_sqz, num_sqz)
    x_sqz = jnp.transpose(x_sqz, (0, 3, 1, 2)).reshape(b, c * num_sqz, t // num_sqz)
    x_mask = x_mask[:, :, num_sqz - 1::num_sqz]
    return x_sqz * x_mask, x_mask


def unsqueeze_jax(x, x_mask, num_sqz=2):
    b, c, t = x.shape
    x_unsqz = x.reshape(b, num_sqz, c // num_sqz, t)
    x_unsqz = jnp.transpose(x_unsqz, (0, 2, 3, 1)).reshape(b, c // num_sqz, t * num_sqz)
    x_mask = jnp.repeat(x_mask[..., None], num_sqz, axis=-1).reshape(b, 1, t * num_sqz)
    return x_unsqz * x_mask, x_mask


# --------------------------- InvConvNear weight expansion -------------------------
def _expand_invconv(w, C, S):
    """Expand the (S,S) InvConvNear weight + channel regrouping into a dense (C,C)
    channel-mixing matrix so the whole op becomes one in-kernel matmul (the old
    per-call JAX reshape/permute round trips of the activation are eliminated)."""
    G = C // S
    half = S // 2
    M = jnp.zeros((C, C), w.dtype)
    for g in range(G):
        ch = np.array([(sp // half) * (G * half) + g * half + (sp % half)
                       for sp in range(S)])
        P = jnp.asarray(np.eye(C, dtype=np.float32)[:, ch])  # (C, S) channel selector
        M = M + P @ w @ P.T
    return M


def _lane_shift(v, off, n):
    """result[:, j] = v[:, (j + off) % n]; the circular wrap is masked by the caller.
    Stays in vregs (lane slice + concat); pltpu.roll/XLU is the alternative at large T."""
    k = off % n
    if k == 0:
        return v
    return jnp.concatenate([v[:, k:], v[:, :k]], axis=-1)


# ------------------------- fused decoder flow-stack kernel ------------------------
def _make_decoder_kernel(NB, L, K, dil_rate, C, H, B, T):
    Ch = C // 2
    BT = B * T

    def kernel(x_ref, m_ref, logs_ref, bias_ref, invw_ref,
               w_start_ref, b_start_ref, w_in_ref, b_in_ref,
               w_rs_ref, b_rs_ref, w_end_ref, b_end_ref,
               z_ref, ldc_ref):
        x = x_ref[...].astype(jnp.float32)          # (C, BT)   batch folded into lanes
        m = m_ref[...].astype(jnp.float32)          # (1, BT)

        # Hoisted once: per-(layer, tap) validity masks for the dilated conv on the
        # batch-folded lane axis.  A tap at offset `off` is only valid when the read
        # stays inside the same batch segment (mirrors the Conv1d zero padding).
        t_in_b = jax.lax.broadcasted_iota(jnp.int32, (1, BT), 1) % T
        tap_off, tap_mask = {}, {}
        for i in range(L):
            d = dil_rate ** i
            pad = d * (K - 1) // 2
            for k in range(K):
                off = k * d - pad
                tap_off[(i, k)] = off
                if off != 0:
                    ok = jnp.logical_and(t_in_b + off >= 0, t_in_b + off < T)
                    tap_mask[(i, k)] = ok.astype(jnp.float32)

        for blk in range(NB):
            # ---------------- ActNorm (elementwise affine) ----------------
            x = (bias_ref[blk] + jnp.exp(logs_ref[blk]) * x) * m
            # ------- InvConvNear: grouped 1x1 conv as a dense CxC mix ------
            x = jnp.dot(invw_ref[blk], x, preferred_element_type=jnp.float32) * m
            # ---------------- CouplingBlock (WaveNet, g=None) ---------------
            x0 = x[:Ch, :]
            x1 = x[Ch:, :]
            h = (jnp.dot(w_start_ref[blk], x0, preferred_element_type=jnp.float32)
                 + b_start_ref[blk]) * m                           # (H, BT)
            skip = jnp.zeros((H, BT), jnp.float32)
            for i in range(L):
                # K dilated taps fused into a single (2H, K*H) x (K*H, BT) matmul.
                segs = []
                for k in range(K):
                    off = tap_off[(i, k)]
                    if off == 0:
                        segs.append(h)
                    else:
                        segs.append(_lane_shift(h, off, BT) * tap_mask[(i, k)])
                hstack = jnp.concatenate(segs, axis=0)             # (K*H, BT)
                x_in = (jnp.dot(w_in_ref[blk * L + i], hstack,
                                preferred_element_type=jnp.float32)
                        + b_in_ref[blk * L + i])                   # (2H, BT)
                acts = jnp.tanh(x_in[:H, :]) * jax.nn.sigmoid(x_in[H:, :])
                rs = (jnp.dot(w_rs_ref[blk * L + i], acts,
                              preferred_element_type=jnp.float32)
                      + b_rs_ref[blk * L + i])                     # (2H, BT)
                if i < L - 1:
                    h = (h + rs[:H, :]) * m
                    skip = skip + rs[H:, :]
                else:
                    skip = skip + rs[:H, :]
            skip = skip * m
            out = (jnp.dot(w_end_ref[blk], skip, preferred_element_type=jnp.float32)
                   + b_end_ref[blk])                               # (C, BT)
            t_shift = out[:Ch, :]
            s = out[Ch:, :]
            z1 = (t_shift + jnp.exp(s) * x1) * m                   # sigmoid_scale=False
            # per-block logdet contribution: channel-reduced in-kernel (tiny output)
            ldc_ref[blk] = jnp.sum(s * m, axis=0, keepdims=True)
            if blk < NB - 1:
                x = jnp.concatenate([x0, z1], axis=0)              # stays in vregs
            else:
                # write the two halves directly (no final concat copy)
                z_ref[:Ch, :] = x0.astype(z_ref.dtype)
                z_ref[Ch:, :] = z1.astype(z_ref.dtype)

    return kernel


def _full_spec(shape):
    zeros = (0,) * len(shape)
    return pl.BlockSpec(shape, lambda i, _z=zeros: _z)


# ------------------------------------ Decoder -------------------------------------
def decoder_forward(x, x_mask, params):
    B, Cin, _ = x.shape
    C = Cin * NUM_SQUEEZE
    H, K, L = HIDDEN_CHANNELS, KERNEL_SIZE, NUM_COUPLING_LAYERS
    NB, S = NUM_FLOW_BLOCKS, NUM_SPLITS

    xs, ms = squeeze_jax(x, x_mask, NUM_SQUEEZE)       # (B, C, Tq), (B, 1, Tq)
    Tq = xs.shape[-1]
    BT = B * Tq

    # fold batch into the lane axis -> lane-dense (C, B*Tq) tile
    xf = jnp.transpose(xs, (1, 0, 2)).reshape(C, BT)
    mf = jnp.transpose(ms, (1, 0, 2)).reshape(1, BT)

    invM = jnp.stack([_expand_invconv(params["invconv_w"][i], C, S) for i in range(NB)])

    operands = (
        xf, mf,
        params["actnorm_logs"], params["actnorm_bias"], invM,
        params["w_start"], params["b_start"],
        params["w_in"], params["b_in"],
        params["w_rs"], params["b_rs"],
        params["w_end"], params["b_end"],
    )

    kernel = _make_decoder_kernel(NB=NB, L=L, K=K, dil_rate=DILATION_RATE,
                                  C=C, H=H, B=B, T=Tq)

    zf, ldc = pl.pallas_call(
        kernel,
        out_shape=(jax.ShapeDtypeStruct((C, BT), xs.dtype),
                   jax.ShapeDtypeStruct((NB, 1, BT), jnp.float32)),
        grid=(1,),
        in_specs=[_full_spec(op.shape) for op in operands],
        out_specs=(_full_spec((C, BT)), _full_spec((NB, 1, BT))),
        compiler_params=pltpu.CompilerParams(dimension_semantics=("arbitrary",)),
    )(*operands)

    # unfold batch and unsqueeze back to (B, Cin, T)
    zs = jnp.transpose(zf.reshape(C, B, Tq), (1, 0, 2))
    z, _ = unsqueeze_jax(zs, ms, NUM_SQUEEZE)

    # logdets: actnorm / invconv parts are scalar * x_len (tiny, JAX side);
    # coupling part comes pre-reduced over channels from the kernel.
    x_len = jnp.sum(ms, axis=(1, 2))                               # (B,)
    ld_act = jnp.sum(params["actnorm_logs"], axis=(1, 2))          # (NB,)
    sign, logabs = jnp.linalg.slogdet(params["invconv_w"])         # (NB,), (NB,)
    logabs = jnp.where(sign > 0, logabs, jnp.nan)                  # mirror torch.logdet
    ld_scalar = jnp.sum(ld_act) + jnp.sum(logabs) * (C / S)
    ld_coupling = jnp.sum(ldc.reshape(NB, B, Tq), axis=(0, 2))     # (B,)
    logdet_tot = ld_scalar * x_len + ld_coupling
    return z, logdet_tot


# --------------------- pure-JAX reference (mirrors the torch module) ---------------------
def decoder_reference(x, x_mask, params):
    C = IN_CHANNELS * NUM_SQUEEZE
    H, K, L = HIDDEN_CHANNELS, KERNEL_SIZE, NUM_COUPLING_LAYERS
    S = NUM_SPLITS
    Ch = C // 2
    hi = jax.lax.Precision.HIGHEST

    xs, ms = squeeze_jax(x, x_mask, NUM_SQUEEZE)
    B, _, T = xs.shape
    x_len = jnp.sum(ms, axis=(1, 2))
    logdet_tot = jnp.zeros((B,), jnp.float32)
    h = xs
    for blk in range(NUM_FLOW_BLOCKS):
        # ActNorm
        logs = params["actnorm_logs"][blk]
        bias = params["actnorm_bias"][blk]
        h = (bias[None] + jnp.exp(logs)[None] * h) * ms
        logdet_tot = logdet_tot + jnp.sum(logs) * x_len
        # InvConvNear
        W = params["invconv_w"][blk]
        G = C // S
        hg = h.reshape(B, 2, G, S // 2, T)
        hg = jnp.transpose(hg, (0, 1, 3, 2, 4)).reshape(B, S, G, T)
        zg = jnp.einsum("os,bsgt->bogt", W, hg, precision=hi)
        zg = zg.reshape(B, 2, S // 2, G, T)
        h = jnp.transpose(zg, (0, 1, 3, 2, 4)).reshape(B, C, T) * ms
        sign, logabs = jnp.linalg.slogdet(W)
        logdet_tot = logdet_tot + jnp.where(sign > 0, logabs, jnp.nan) * (C / S) * x_len
        # CouplingBlock (WaveNet, g=None, dropout=0)
        x0, x1 = h[:, :Ch], h[:, Ch:]
        wn = (jnp.einsum("oc,bct->bot", params["w_start"][blk], x0, precision=hi)
              + params["b_start"][blk][None]) * ms
        out_acc = jnp.zeros((B, H, T), jnp.float32)
        for i in range(L):
            d = DILATION_RATE ** i
            pad = d * (K - 1) // 2
            wp = jnp.pad(wn, ((0, 0), (0, 0), (pad, pad)))
            w_pk = params["w_in"][blk * L + i]      # (2H, K*H): tap k at cols [k*H,(k+1)*H)
            x_in = params["b_in"][blk * L + i][None]
            for k in range(K):
                x_in = x_in + jnp.einsum("oh,bht->bot", w_pk[:, k * H:(k + 1) * H],
                                         wp[:, :, k * d:k * d + T], precision=hi)
            acts = jnp.tanh(x_in[:, :H]) * jax.nn.sigmoid(x_in[:, H:])
            rs = (jnp.einsum("oh,bht->bot", params["w_rs"][blk * L + i], acts, precision=hi)
                  + params["b_rs"][blk * L + i][None])
            if i < L - 1:
                wn = (wn + rs[:, :H]) * ms
                out_acc = out_acc + rs[:, H:]
            else:
                out_acc = out_acc + rs[:, :H]
        out_acc = out_acc * ms
        out = (jnp.einsum("oh,bht->bot", params["w_end"][blk], out_acc, precision=hi)
               + params["b_end"][blk][None])
        t_sh, s = out[:, :Ch], out[:, Ch:]
        z1 = (t_sh + jnp.exp(s) * x1) * ms
        h = jnp.concatenate([x0, z1], axis=1)
        logdet_tot = logdet_tot + jnp.sum(s * ms, axis=(1, 2))
    z, _ = unsqueeze_jax(h, ms, NUM_SQUEEZE)
    return z, logdet_tot


# --------------------------- deterministic parameter init -------------------------
def init_params(key):
    C = IN_CHANNELS * NUM_SQUEEZE
    H = HIDDEN_CHANNELS
    Ch = C // 2
    K = KERNEL_SIZE
    L = NUM_COUPLING_LAYERS
    NB = NUM_FLOW_BLOCKS
    keys = jax.random.split(key, 11)

    # InvConvNear: per-block orthogonal init with det > 0 (as in torch __init__)
    ws = []
    for wk in jax.random.split(keys[2], NB):
        q, _ = jnp.linalg.qr(jax.random.normal(wk, (NUM_SPLITS, NUM_SPLITS), jnp.float32))
        q = q.at[:, 0].multiply(jnp.where(jnp.linalg.det(q) < 0, -1.0, 1.0))
        ws.append(q)

    # NOTE: torch zero-inits the `end` conv; small random values are used so the
    # affine-coupling math is exercised while keeping exp(s) well-behaved.
    # w_in is stored packed as (2H, K*H): columns [k*H,(k+1)*H) == torch conv weight[:, :, k].
    params = {
        "actnorm_logs": 0.1 * jax.random.normal(keys[0], (NB, C, 1), jnp.float32),
        "actnorm_bias": 0.1 * jax.random.normal(keys[1], (NB, C, 1), jnp.float32),
        "invconv_w": jnp.stack(ws),
        "w_start": jax.random.normal(keys[3], (NB, H, Ch), jnp.float32) / jnp.sqrt(Ch),
        "b_start": 0.01 * jax.random.normal(keys[4], (NB, H, 1), jnp.float32),
        "w_in": jax.random.normal(keys[5], (NB * L, 2 * H, K * H), jnp.float32) / jnp.sqrt(H * K),
        "b_in": 0.01 * jax.random.normal(keys[6], (NB * L, 2 * H, 1), jnp.float32),
        "w_rs": jax.random.normal(keys[7], (NB * L, 2 * H, H), jnp.float32) / jnp.sqrt(H),
        "b_rs": 0.01 * jax.random.normal(keys[8], (NB * L, 2 * H, 1), jnp.float32),
        "w_end": 0.02 * jax.random.normal(keys[9], (NB, C, H), jnp.float32),
        "b_end": 0.01 * jax.random.normal(keys[10], (NB, C, 1), jnp.float32),
    }
    return params


if __name__ == "__main__":
    key = jax.random.PRNGKey(0)
    kx, kp = jax.random.split(key)
    B, Cin, T = 2, IN_CHANNELS, 16
    x = jax.random.normal(kx, (B, Cin, T), jnp.float32)
    lengths = jnp.array([16, 12], jnp.int32)
    x_mask = (jnp.arange(T)[None, :] < lengths[:, None]).astype(jnp.float32)[:, None, :]
    params = init_params(kp)

    z, logdet = jax.jit(decoder_forward)(x, x_mask, params)
    jax.block_until_ready((z, logdet))

    assert z.shape == (B, Cin, T), z.shape
    assert logdet.shape == (B,), logdet.shape
    assert bool(jnp.all(jnp.isfinite(z))) and bool(jnp.all(jnp.isfinite(logdet)))

    # correctness vs a pure-JAX mirror of the torch module
    z_ref, logdet_ref = jax.jit(decoder_reference)(x, x_mask, params)
    jax.block_until_ready((z_ref, logdet_ref))
    assert bool(jnp.allclose(z, z_ref, rtol=2e-3, atol=2e-3)), \
        float(jnp.max(jnp.abs(z - z_ref)))
    assert bool(jnp.allclose(logdet, logdet_ref, rtol=2e-3, atol=2e-3)), \
        float(jnp.max(jnp.abs(logdet - logdet_ref)))

    print("KERNEL_OK")
</pallas_src>

<mosaic_0001>
module attributes {stable_mosaic.version = 11 : i64} {
  func.func @kernel(%arg0: i32, %arg1: memref<8x16xf32, #tpu.memory_space<vmem>>, %arg2: memref<1x16xf32, #tpu.memory_space<vmem>>, %arg3: memref<2x8x1xf32, #tpu.memory_space<vmem>>, %arg4: memref<2x8x1xf32, #tpu.memory_space<vmem>>, %arg5: memref<2x8x8xf32, #tpu.memory_space<vmem>>, %arg6: memref<2x16x4xf32, #tpu.memory_space<vmem>>, %arg7: memref<2x16x1xf32, #tpu.memory_space<vmem>>, %arg8: memref<4x32x48xf32, #tpu.memory_space<vmem>>, %arg9: memref<4x32x1xf32, #tpu.memory_space<vmem>>, %arg10: memref<4x32x16xf32, #tpu.memory_space<vmem>>, %arg11: memref<4x32x1xf32, #tpu.memory_space<vmem>>, %arg12: memref<2x8x16xf32, #tpu.memory_space<vmem>>, %arg13: memref<2x8x1xf32, #tpu.memory_space<vmem>>, %arg14: memref<8x16xf32, #tpu.memory_space<vmem>>, %arg15: memref<2x1x16xf32, #tpu.memory_space<vmem>>) attributes {dimension_semantics = [#tpu.dimension_semantics<arbitrary>], iteration_bounds = array<i64: 1>, scalar_prefetch = 0 : i64, scratch_operands = 0 : i64, tpu.core_type = #tpu.core_type<tc>, window_params = [{pipeline_mode = #tpu.pipeline_mode<synchronous>, transform_indices = @transform_0, window_bounds = array<i64: 8, 16>}, {pipeline_mode = #tpu.pipeline_mode<synchronous>, transform_indices = @transform_1, window_bounds = array<i64: 1, 16>}, {pipeline_mode = #tpu.pipeline_mode<synchronous>, transform_indices = @transform_2, window_bounds = array<i64: 2, 8, 1>}, {pipeline_mode = #tpu.pipeline_mode<synchronous>, transform_indices = @transform_3, window_bounds = array<i64: 2, 8, 1>}, {pipeline_mode = #tpu.pipeline_mode<synchronous>, transform_indices = @transform_4, window_bounds = array<i64: 2, 8, 8>}, {pipeline_mode = #tpu.pipeline_mode<synchronous>, transform_indices = @transform_5, window_bounds = array<i64: 2, 16, 4>}, {pipeline_mode = #tpu.pipeline_mode<synchronous>, transform_indices = @transform_6, window_bounds = array<i64: 2, 16, 1>}, {pipeline_mode = #tpu.pipeline_mode<synchronous>, transform_indices = @transform_7, window_bounds = array<i64: 4, 32, 48>}, {pipeline_mode = #tpu.pipeline_mode<synchronous>, transform_indices = @transform_8, window_bounds = array<i64: 4, 32, 1>}, {pipeline_mode = #tpu.pipeline_mode<synchronous>, transform_indices = @transform_9, window_bounds = array<i64: 4, 32, 16>}, {pipeline_mode = #tpu.pipeline_mode<synchronous>, transform_indices = @transform_10, window_bounds = array<i64: 4, 32, 1>}, {pipeline_mode = #tpu.pipeline_mode<synchronous>, transform_indices = @transform_11, window_bounds = array<i64: 2, 8, 16>}, {pipeline_mode = #tpu.pipeline_mode<synchronous>, transform_indices = @transform_12, window_bounds = array<i64: 2, 8, 1>}, {pipeline_mode = #tpu.pipeline_mode<synchronous>, transform_indices = @transform_13, window_bounds = array<i64: 8, 16>}, {pipeline_mode = #tpu.pipeline_mode<synchronous>, transform_indices = @transform_14, window_bounds = array<i64: 2, 1, 16>}]} {
    %c0 = arith.constant 0 : index
    %c0_0 = arith.constant 0 : index
    %0 = vector.load %arg1[%c0, %c0_0] : memref<8x16xf32, #tpu.memory_space<vmem>>, vector<8x16xf32>
    %c0_1 = arith.constant 0 : index
    %c0_2 = arith.constant 0 : index
    %1 = vector.load %arg2[%c0_1, %c0_2] : memref<1x16xf32, #tpu.memory_space<vmem>>, vector<1x16xf32>
    %2 = tpu.iota {dimensions = array<i32: 1>} : vector<1x16xi32>
    %c8_i32 = arith.constant 8 : i32
    %c0_i32 = arith.constant 0 : i32
    %3 = arith.cmpi eq, %c8_i32, %c0_i32 : i32
    %c1_i32 = arith.constant 1 : i32
    %4 = arith.select %3, %c1_i32, %c8_i32 : i32
    %5 = vector.broadcast %4 : i32 to vector<1x16xi32>
    %6 = arith.remsi %2, %5 : vector<1x16xi32>
    %c0_i32_3 = arith.constant 0 : i32
    %7 = vector.broadcast %c0_i32_3 : i32 to vector<1x16xi32>
    %8 = arith.cmpi ne, %6, %7 : vector<1x16xi32>
    %c0_i32_4 = arith.constant 0 : i32
    %9 = vector.broadcast %c0_i32_4 : i32 to vector<1x16xi32>
    %10 = arith.cmpi slt, %6, %9 : vector<1x16xi32>
    %c0_i32_5 = arith.constant 0 : i32
    %11 = arith.cmpi slt, %4, %c0_i32_5 : i32
    %12 = vector.broadcast %11 : i1 to vector<1x16xi1>
    %13 = vector.broadcast %12 : vector<1x16xi1> to vector<1x16xi1>
    %14 = arith.xori %10, %13 : vector<1x16xi1>
    %15 = arith.andi %14, %8 : vector<1x16xi1>
    %16 = vector.broadcast %4 : i32 to vector<1x16xi32>
    %17 = arith.addi %6, %16 : vector<1x16xi32>
    %18 = arith.select %15, %17, %6 : vector<1x16xi1>, vector<1x16xi32>
    %c-1_i32 = arith.constant -1 : i32
    %19 = vector.broadcast %c-1_i32 : i32 to vector<1x16xi32>
    %20 = arith.addi %18, %19 : vector<1x16xi32>
    %c0_i32_6 = arith.constant 0 : i32
    %21 = vector.broadcast %c0_i32_6 : i32 to vector<1x16xi32>
    %22 = arith.cmpi sge, %20, %21 : vector<1x16xi32>
    %c-1_i32_7 = arith.constant -1 : i32
    %23 = vector.broadcast %c-1_i32_7 : i32 to vector<1x16xi32>
    %24 = arith.addi %18, %23 : vector<1x16xi32>
    %c8_i32_8 = arith.constant 8 : i32
    %25 = vector.broadcast %c8_i32_8 : i32 to vector<1x16xi32>
    %26 = arith.cmpi slt, %24, %25 : vector<1x16xi32>
    %27 = arith.andi %22, %26 : vector<1x16xi1>
    %28 = arith.extui %27 : vector<1x16xi1> to vector<1x16xi32>
    %29 = arith.sitofp %28 : vector<1x16xi32> to vector<1x16xf32>
    %c1_i32_9 = arith.constant 1 : i32
    %30 = vector.broadcast %c1_i32_9 : i32 to vector<1x16xi32>
    %31 = arith.addi %18, %30 : vector<1x16xi32>
    %c0_i32_10 = arith.constant 0 : i32
    %32 = vector.broadcast %c0_i32_10 : i32 to vector<1x16xi32>
    %33 = arith.cmpi sge, %31, %32 : vector<1x16xi32>
    %c1_i32_11 = arith.constant 1 : i32
    %34 = vector.broadcast %c1_i32_11 : i32 to vector<1x16xi32>
    %35 = arith.addi %18, %34 : vector<1x16xi32>
    %c8_i32_12 = arith.constant 8 : i32
    %36 = vector.broadcast %c8_i32_12 : i32 to vector<1x16xi32>
    %37 = arith.cmpi slt, %35, %36 : vector<1x16xi32>
    %38 = arith.andi %33, %37 : vector<1x16xi1>
    %39 = arith.extui %38 : vector<1x16xi1> to vector<1x16xi32>
    %40 = arith.sitofp %39 : vector<1x16xi32> to vector<1x16xf32>
    %c-2_i32 = arith.constant -2 : i32
    %41 = vector.broadcast %c-2_i32 : i32 to vector<1x16xi32>
    %42 = arith.addi %18, %41 : vector<1x16xi32>
    %c0_i32_13 = arith.constant 0 : i32
    %43 = vector.broadcast %c0_i32_13 : i32 to vector<1x16xi32>
    %44 = arith.cmpi sge, %42, %43 : vector<1x16xi32>
    %c-2_i32_14 = arith.constant -2 : i32
    %45 = vector.broadcast %c-2_i32_14 : i32 to vector<1x16xi32>
    %46 = arith.addi %18, %45 : vector<1x16xi32>
    %c8_i32_15 = arith.constant 8 : i32
    %47 = vector.broadcast %c8_i32_15 : i32 to vector<1x16xi32>
    %48 = arith.cmpi slt, %46, %47 : vector<1x16xi32>
    %49 = arith.andi %44, %48 : vector<1x16xi1>
    %50 = arith.extui %49 : vector<1x16xi1> to vector<1x16xi32>
    %51 = arith.sitofp %50 : vector<1x16xi32> to vector<1x16xf32>
    %c2_i32 = arith.constant 2 : i32
    %52 = vector.broadcast %c2_i32 : i32 to vector<1x16xi32>
    %53 = arith.addi %18, %52 : vector<1x16xi32>
    %c0_i32_16 = arith.constant 0 : i32
    %54 = vector.broadcast %c0_i32_16 : i32 to vector<1x16xi32>
    %55 = arith.cmpi sge, %53, %54 : vector<1x16xi32>
    %c2_i32_17 = arith.constant 2 : i32
    %56 = vector.broadcast %c2_i32_17 : i32 to vector<1x16xi32>
    %57 = arith.addi %18, %56 : vector<1x16xi32>
    %c8_i32_18 = arith.constant 8 : i32
    %58 = vector.broadcast %c8_i32_18 : i32 to vector<1x16xi32>
    %59 = arith.cmpi slt, %57, %58 : vector<1x16xi32>
    %60 = arith.andi %55, %59 : vector<1x16xi1>
    %61 = arith.extui %60 : vector<1x16xi1> to vector<1x16xi32>
    %62 = arith.sitofp %61 : vector<1x16xi32> to vector<1x16xf32>
    %c0_19 = arith.constant 0 : index
    %c0_20 = arith.constant 0 : index
    %c0_21 = arith.constant 0 : index
    %63 = vector.load %arg4[%c0_19, %c0_20, %c0_21] : memref<2x8x1xf32, #tpu.memory_space<vmem>>, vector<1x8x1xf32>
    %64 = vector.shape_cast %63 : vector<1x8x1xf32> to vector<8x1xf32>
    %c0_22 = arith.constant 0 : index
    %c0_23 = arith.constant 0 : index
    %c0_24 = arith.constant 0 : index
    %65 = vector.load %arg3[%c0_22, %c0_23, %c0_24] : memref<2x8x1xf32, #tpu.memory_space<vmem>>, vector<1x8x1xf32>
    %66 = vector.shape_cast %65 : vector<1x8x1xf32> to vector<8x1xf32>
    %67 = math.exp %66 : vector<8x1xf32>
    %68 = vector.broadcast %67 : vector<8x1xf32> to vector<8x16xf32>
    %69 = arith.mulf %68, %0 : vector<8x16xf32>
    %70 = vector.broadcast %64 : vector<8x1xf32> to vector<8x16xf32>
    %71 = arith.addf %70, %69 : vector<8x16xf32>
    %72 = vector.broadcast %1 : vector<1x16xf32> to vector<8x16xf32>
    %73 = arith.mulf %71, %72 : vector<8x16xf32>
    %c0_25 = arith.constant 0 : index
    %c0_26 = arith.constant 0 : index
    %c0_27 = arith.constant 0 : index
    %74 = vector.load %arg5[%c0_25, %c0_26, %c0_27] : memref<2x8x8xf32, #tpu.memory_space<vmem>>, vector<1x8x8xf32>
    %75 = vector.shape_cast %74 : vector<1x8x8xf32> to vector<8x8xf32>
    %cst = arith.constant dense<0.000000e+00> : vector<8x16xf32>
    %76 = tpu.matmul %75, %73, %cst {dimension_numbers = #tpu.dot_dimension_numbers<[1], [0], [0], [1], [0, 0, 1, 1], [], []>} : vector<8x8xf32>, vector<8x16xf32>, vector<8x16xf32> -> vector<8x16xf32>
    %77 = vector.broadcast %1 : vector<1x16xf32> to vector<8x16xf32>
    %78 = arith.mulf %76, %77 : vector<8x16xf32>
    %79 = vector.extract_strided_slice %78 {offsets = [0, 0], sizes = [4, 16], strides = [1, 1]} : vector<8x16xf32> to vector<4x16xf32>
    %80 = vector.extract_strided_slice %78 {offsets = [4, 0], sizes = [4, 16], strides = [1, 1]} : vector<8x16xf32> to vector<4x16xf32>
    %c0_28 = arith.constant 0 : index
    %c0_29 = arith.constant 0 : index
    %c0_30 = arith.constant 0 : index
    %81 = vector.load %arg6[%c0_28, %c0_29, %c0_30] : memref<2x16x4xf32, #tpu.memory_space<vmem>>, vector<1x16x4xf32>
    %82 = vector.shape_cast %81 : vector<1x16x4xf32> to vector<16x4xf32>
    %cst_31 = arith.constant dense<0.000000e+00> : vector<16x16xf32>
    %83 = tpu.matmul %82, %79, %cst_31 {dimension_numbers = #tpu.dot_dimension_numbers<[1], [0], [0], [1], [0, 0, 1, 1], [], []>} : vector<16x4xf32>, vector<4x16xf32>, vector<16x16xf32> -> vector<16x16xf32>
    %c0_32 = arith.constant 0 : index
    %c0_33 = arith.constant 0 : index
    %c0_34 = arith.constant 0 : index
    %84 = vector.load %arg7[%c0_32, %c0_33, %c0_34] : memref<2x16x1xf32, #tpu.memory_space<vmem>>, vector<1x16x1xf32>
    %85 = vector.shape_cast %84 : vector<1x16x1xf32> to vector<16x1xf32>
    %86 = vector.broadcast %85 : vector<16x1xf32> to vector<16x16xf32>
    %87 = arith.addf %83, %86 : vector<16x16xf32>
    %88 = vector.broadcast %1 : vector<1x16xf32> to vector<16x16xf32>
    %89 = arith.mulf %87, %88 : vector<16x16xf32>
    %cst_35 = arith.constant 0.000000e+00 : f32
    %90 = vector.broadcast %cst_35 : f32 to vector<16x16xf32>
    %91 = vector.extract_strided_slice %89 {offsets = [0, 15], sizes = [16, 1], strides = [1, 1]} : vector<16x16xf32> to vector<16x1xf32>
    %92 = vector.extract_strided_slice %89 {offsets = [0, 0], sizes = [16, 15], strides = [1, 1]} : vector<16x16xf32> to vector<16x15xf32>
    %93 = tpu.concatenate %91, %92 in 1 : vector<16x1xf32>, vector<16x15xf32> -> vector<16x16xf32>
    %94 = vector.broadcast %29 : vector<1x16xf32> to vector<16x16xf32>
    %95 = arith.mulf %93, %94 : vector<16x16xf32>
    %96 = vector.extract_strided_slice %89 {offsets = [0, 1], sizes = [16, 15], strides = [1, 1]} : vector<16x16xf32> to vector<16x15xf32>
    %97 = vector.extract_strided_slice %89 {offsets = [0, 0], sizes = [16, 1], strides = [1, 1]} : vector<16x16xf32> to vector<16x1xf32>
    %98 = tpu.concatenate %96, %97 in 1 : vector<16x15xf32>, vector<16x1xf32> -> vector<16x16xf32>
    %99 = vector.broadcast %40 : vector<1x16xf32> to vector<16x16xf32>
    %100 = arith.mulf %98, %99 : vector<16x16xf32>
    %101 = tpu.concatenate %95, %89, %100 in 0 : vector<16x16xf32>, vector<16x16xf32>, vector<16x16xf32> -> vector<48x16xf32>
    %c0_36 = arith.constant 0 : index
    %c0_37 = arith.constant 0 : index
    %c0_38 = arith.constant 0 : index
    %102 = vector.load %arg8[%c0_36, %c0_37, %c0_38] : memref<4x32x48xf32, #tpu.memory_space<vmem>>, vector<1x32x48xf32>
    %103 = vector.shape_cast %102 : vector<1x32x48xf32> to vector<32x48xf32>
    %cst_39 = arith.constant dense<0.000000e+00> : vector<32x16xf32>
    %104 = tpu.matmul %103, %101, %cst_39 {dimension_numbers = #tpu.dot_dimension_numbers<[1], [0], [0], [1], [0, 0, 1, 1], [], []>} : vector<32x48xf32>, vector<48x16xf32>, vector<32x16xf32> -> vector<32x16xf32>
    %c0_40 = arith.constant 0 : index
    %c0_41 = arith.constant 0 : index
    %c0_42 = arith.constant 0 : index
    %105 = vector.load %arg9[%c0_40, %c0_41, %c0_42] : memref<4x32x1xf32, #tpu.memory_space<vmem>>, vector<1x32x1xf32>
    %106 = vector.shape_cast %105 : vector<1x32x1xf32> to vector<32x1xf32>
    %107 = vector.broadcast %106 : vector<32x1xf32> to vector<32x16xf32>
    %108 = arith.addf %104, %107 : vector<32x16xf32>
    %109 = vector.extract_strided_slice %108 {offsets = [0, 0], sizes = [16, 16], strides = [1, 1]} : vector<32x16xf32> to vector<16x16xf32>
    %110 = math.tanh %109 : vector<16x16xf32>
    %111 = vector.extract_strided_slice %108 {offsets = [16, 0], sizes = [16, 16], strides = [1, 1]} : vector<32x16xf32> to vector<16x16xf32>
    %112 = arith.negf %111 : vector<16x16xf32>
    %113 = math.exp %112 : vector<16x16xf32>
    %cst_43 = arith.constant 1.000000e+00 : f32
    %114 = vector.broadcast %cst_43 : f32 to vector<16x16xf32>
    %115 = arith.addf %114, %113 : vector<16x16xf32>
    %116 = arith.divf %114, %115 : vector<16x16xf32>
    %117 = arith.mulf %110, %116 : vector<16x16xf32>
    %c0_44 = arith.constant 0 : index
    %c0_45 = arith.constant 0 : index
    %c0_46 = arith.constant 0 : index
    %118 = vector.load %arg10[%c0_44, %c0_45, %c0_46] : memref<4x32x16xf32, #tpu.memory_space<vmem>>, vector<1x32x16xf32>
    %119 = vector.shape_cast %118 : vector<1x32x16xf32> to vector<32x16xf32>
    %cst_47 = arith.constant dense<0.000000e+00> : vector<32x16xf32>
    %120 = tpu.matmul %119, %117, %cst_47 {dimension_numbers = #tpu.dot_dimension_numbers<[1], [0], [0], [1], [0, 0, 1, 1], [], []>} : vector<32x16xf32>, vector<16x16xf32>, vector<32x16xf32> -> vector<32x16xf32>
    %c0_48 = arith.constant 0 : index
    %c0_49 = arith.constant 0 : index
    %c0_50 = arith.constant 0 : index
    %121 = vector.load %arg11[%c0_48, %c0_49, %c0_50] : memref<4x32x1xf32, #tpu.memory_space<vmem>>, vector<1x32x1xf32>
    %122 = vector.shape_cast %121 : vector<1x32x1xf32> to vector<32x1xf32>
    %123 = vector.broadcast %122 : vector<32x1xf32> to vector<32x16xf32>
    %124 = arith.addf %120, %123 : vector<32x16xf32>
    %125 = vector.extract_strided_slice %124 {offsets = [0, 0], sizes = [16, 16], strides = [1, 1]} : vector<32x16xf32> to vector<16x16xf32>
    %126 = arith.addf %89, %125 : vector<16x16xf32>
    %127 = vector.broadcast %1 : vector<1x16xf32> to vector<16x16xf32>
    %128 = arith.mulf %126, %127 : vector<16x16xf32>
    %129 = vector.extract_strided_slice %124 {offsets = [16, 0], sizes = [16, 16], strides = [1, 1]} : vector<32x16xf32> to vector<16x16xf32>
    %130 = arith.addf %90, %129 : vector<16x16xf32>
    %131 = vector.extract_strided_slice %128 {offsets = [0, 14], sizes = [16, 2], strides = [1, 1]} : vector<16x16xf32> to vector<16x2xf32>
    %132 = vector.extract_strided_slice %128 {offsets = [0, 0], sizes = [16, 14], strides = [1, 1]} : vector<16x16xf32> to vector<16x14xf32>
    %133 = tpu.concatenate %131, %132 in 1 : vector<16x2xf32>, vector<16x14xf32> -> vector<16x16xf32>
    %134 = vector.broadcast %51 : vector<1x16xf32> to vector<16x16xf32>
    %135 = arith.mulf %133, %134 : vector<16x16xf32>
    %136 = vector.extract_strided_slice %128 {offsets = [0, 2], sizes = [16, 14], strides = [1, 1]} : vector<16x16xf32> to vector<16x14xf32>
    %137 = vector.extract_strided_slice %128 {offsets = [0, 0], sizes = [16, 2], strides = [1, 1]} : vector<16x16xf32> to vector<16x2xf32>
    %138 = tpu.concatenate %136, %137 in 1 : vector<16x14xf32>, vector<16x2xf32> -> vector<16x16xf32>
    %139 = vector.broadcast %62 : vector<1x16xf32> to vector<16x16xf32>
    %140 = arith.mulf %138, %139 : vector<16x16xf32>
    %141 = tpu.concatenate %135, %128, %140 in 0 : vector<16x16xf32>, vector<16x16xf32>, vector<16x16xf32> -> vector<48x16xf32>
    %c1 = arith.constant 1 : index
    %c0_51 = arith.constant 0 : index
    %c0_52 = arith.constant 0 : index
    %142 = vector.load %arg8[%c1, %c0_51, %c0_52] : memref<4x32x48xf32, #tpu.memory_space<vmem>>, vector<1x32x48xf32>
    %143 = vector.shape_cast %142 : vector<1x32x48xf32> to vector<32x48xf32>
    %cst_53 = arith.constant dense<0.000000e+00> : vector<32x16xf32>
    %144 = tpu.matmul %143, %141, %cst_53 {dimension_numbers = #tpu.dot_dimension_numbers<[1], [0], [0], [1], [0, 0, 1, 1], [], []>} : vector<32x48xf32>, vector<48x16xf32>, vector<32x16xf32> -> vector<32x16xf32>
    %c1_54 = arith.constant 1 : index
    %c0_55 = arith.constant 0 : index
    %c0_56 = arith.constant 0 : index
    %145 = vector.load %arg9[%c1_54, %c0_55, %c0_56] : memref<4x32x1xf32, #tpu.memory_space<vmem>>, vector<1x32x1xf32>
    %146 = vector.shape_cast %145 : vector<1x32x1xf32> to vector<32x1xf32>
    %147 = vector.broadcast %146 : vector<32x1xf32> to vector<32x16xf32>
    %148 = arith.addf %144, %147 : vector<32x16xf32>
    %149 = vector.extract_strided_slice %148 {offsets = [0, 0], sizes = [16, 16], strides = [1, 1]} : vector<32x16xf32> to vector<16x16xf32>
    %150 = math.tanh %149 : vector<16x16xf32>
    %151 = vector.extract_strided_slice %148 {offsets = [16, 0], sizes = [16, 16], strides = [1, 1]} : vector<32x16xf32> to vector<16x16xf32>
    %152 = arith.negf %151 : vector<16x16xf32>
    %153 = math.exp %152 : vector<16x16xf32>
    %cst_57 = arith.constant 1.000000e+00 : f32
    %154 = vector.broadcast %cst_57 : f32 to vector<16x16xf32>
    %155 = arith.addf %154, %153 : vector<16x16xf32>
    %156 = arith.divf %154, %155 : vector<16x16xf32>
    %157 = arith.mulf %150, %156 : vector<16x16xf32>
    %c1_58 = arith.constant 1 : index
    %c0_59 = arith.constant 0 : index
    %c0_60 = arith.constant 0 : index
    %158 = vector.load %arg10[%c1_58, %c0_59, %c0_60] : memref<4x32x16xf32, #tpu.memory_space<vmem>>, vector<1x32x16xf32>
    %159 = vector.shape_cast %158 : vector<1x32x16xf32> to vector<32x16xf32>
    %cst_61 = arith.constant dense<0.000000e+00> : vector<32x16xf32>
    %160 = tpu.matmul %159, %157, %cst_61 {dimension_numbers = #tpu.dot_dimension_numbers<[1], [0], [0], [1], [0, 0, 1, 1], [], []>} : vector<32x16xf32>, vector<16x16xf32>, vector<32x16xf32> -> vector<32x16xf32>
    %c1_62 = arith.constant 1 : index
    %c0_63 = arith.constant 0 : index
    %c0_64 = arith.constant 0 : index
    %161 = vector.load %arg11[%c1_62, %c0_63, %c0_64] : memref<4x32x1xf32, #tpu.memory_space<vmem>>, vector<1x32x1xf32>
    %162 = vector.shape_cast %161 : vector<1x32x1xf32> to vector<32x1xf32>
    %163 = vector.broadcast %162 : vector<32x1xf32> to vector<32x16xf32>
    %164 = arith.addf %160, %163 : vector<32x16xf32>
    %165 = vector.extract_strided_slice %164 {offsets = [0, 0], sizes = [16, 16], strides = [1, 1]} : vector<32x16xf32> to vector<16x16xf32>
    %166 = arith.addf %130, %165 : vector<16x16xf32>
    %167 = vector.broadcast %1 : vector<1x16xf32> to vector<16x16xf32>
    %168 = arith.mulf %166, %167 : vector<16x16xf32>
    %c0_65 = arith.constant 0 : index
    %c0_66 = arith.constant 0 : index
    %c0_67 = arith.constant 0 : index
    %169 = vector.load %arg12[%c0_65, %c0_66, %c0_67] : memref<2x8x16xf32, #tpu.memory_space<vmem>>, vector<1x8x16xf32>
    %170 = vector.shape_cast %169 : vector<1x8x16xf32> to vector<8x16xf32>
    %cst_68 = arith.constant dense<0.000000e+00> : vector<8x16xf32>
    %171 = tpu.matmul %170, %168, %cst_68 {dimension_numbers = #tpu.dot_dimension_numbers<[1], [0], [0], [1], [0, 0, 1, 1], [], []>} : vector<8x16xf32>, vector<16x16xf32>, vector<8x16xf32> -> vector<8x16xf32>
    %c0_69 = arith.constant 0 : index
    %c0_70 = arith.constant 0 : index
    %c0_71 = arith.constant 0 : index
    %172 = vector.load %arg13[%c0_69, %c0_70, %c0_71] : memref<2x8x1xf32, #tpu.memory_space<vmem>>, vector<1x8x1xf32>
    %173 = vector.shape_cast %172 : vector<1x8x1xf32> to vector<8x1xf32>
    %174 = vector.broadcast %173 : vector<8x1xf32> to vector<8x16xf32>
    %175 = arith.addf %171, %174 : vector<8x16xf32>
    %176 = vector.extract_strided_slice %175 {offsets = [0, 0], sizes = [4, 16], strides = [1, 1]} : vector<8x16xf32> to vector<4x16xf32>
    %177 = vector.extract_strided_slice %175 {offsets = [4, 0], sizes = [4, 16], strides = [1, 1]} : vector<8x16xf32> to vector<4x16xf32>
    %178 = math.exp %177 : vector<4x16xf32>
    %179 = arith.mulf %178, %80 : vector<4x16xf32>
    %180 = arith.addf %176, %179 : vector<4x16xf32>
    %181 = vector.broadcast %1 : vector<1x16xf32> to vector<4x16xf32>
    %182 = arith.mulf %180, %181 : vector<4x16xf32>
    %183 = vector.broadcast %1 : vector<1x16xf32> to vector<4x16xf32>
    %184 = arith.mulf %177, %183 : vector<4x16xf32>
    %cst_72 = arith.constant dense<0.000000e+00> : vector<16xf32>
    %185 = vector.multi_reduction <add>, %184, %cst_72 [0] : vector<4x16xf32> to vector<16xf32>
    %186 = vector.shape_cast %185 : vector<16xf32> to vector<1x16xf32>
    %c0_73 = arith.constant 0 : index
    %c0_74 = arith.constant 0 : index
    %c0_75 = arith.constant 0 : index
    %187 = vector.load %arg15[%c0_73, %c0_74, %c0_75] : memref<2x1x16xf32, #tpu.memory_space<vmem>>, vector<1x1x16xf32>
    %188 = vector.shape_cast %187 : vector<1x1x16xf32> to vector<1x16xf32>
    %189 = vector.shape_cast %186 : vector<1x16xf32> to vector<1x1x16xf32>
    tpu.vector_store %arg15[%c0_73, %c0_74, %c0_75], %189 {strides = array<i32>} : memref<2x1x16xf32, #tpu.memory_space<vmem>>, vector<1x1x16xf32>,
    %190 = tpu.concatenate %79, %182 in 0 : vector<4x16xf32>, vector<4x16xf32> -> vector<8x16xf32>
    %c1_76 = arith.constant 1 : index
    %c0_77 = arith.constant 0 : index
    %c0_78 = arith.constant 0 : index
    %191 = vector.load %arg4[%c1_76, %c0_77, %c0_78] : memref<2x8x1xf32, #tpu.memory_space<vmem>>, vector<1x8x1xf32>
    %192 = vector.shape_cast %191 : vector<1x8x1xf32> to vector<8x1xf32>
    %c1_79 = arith.constant 1 : index
    %c0_80 = arith.constant 0 : index
    %c0_81 = arith.constant 0 : index
    %193 = vector.load %arg3[%c1_79, %c0_80, %c0_81] : memref<2x8x1xf32, #tpu.memory_space<vmem>>, vector<1x8x1xf32>
    %194 = vector.shape_cast %193 : vector<1x8x1xf32> to vector<8x1xf32>
    %195 = math.exp %194 : vector<8x1xf32>
    %196 = vector.broadcast %195 : vector<8x1xf32> to vector<8x16xf32>
    %197 = arith.mulf %196, %190 : vector<8x16xf32>
    %198 = vector.broadcast %192 : vector<8x1xf32> to vector<8x16xf32>
    %199 = arith.addf %198, %197 : vector<8x16xf32>
    %200 = vector.broadcast %1 : vector<1x16xf32> to vector<8x16xf32>
    %201 = arith.mulf %199, %200 : vector<8x16xf32>
    %c1_82 = arith.constant 1 : index
    %c0_83 = arith.constant 0 : index
    %c0_84 = arith.constant 0 : index
    %202 = vector.load %arg5[%c1_82, %c0_83, %c0_84] : memref<2x8x8xf32, #tpu.memory_space<vmem>>, vector<1x8x8xf32>
    %203 = vector.shape_cast %202 : vector<1x8x8xf32> to vector<8x8xf32>
    %cst_85 = arith.constant dense<0.000000e+00> : vector<8x16xf32>
    %204 = tpu.matmul %203, %201, %cst_85 {dimension_numbers = #tpu.dot_dimension_numbers<[1], [0], [0], [1], [0, 0, 1, 1], [], []>} : vector<8x8xf32>, vector<8x16xf32>, vector<8x16xf32> -> vector<8x16xf32>
    %205 = vector.broadcast %1 : vector<1x16xf32> to vector<8x16xf32>
    %206 = arith.mulf %204, %205 : vector<8x16xf32>
    %207 = vector.extract_strided_slice %206 {offsets = [0, 0], sizes = [4, 16], strides = [1, 1]} : vector<8x16xf32> to vector<4x16xf32>
    %208 = vector.extract_strided_slice %206 {offsets = [4, 0], sizes = [4, 16], strides = [1, 1]} : vector<8x16xf32> to vector<4x16xf32>
    %c1_86 = arith.constant 1 : index
    %c0_87 = arith.constant 0 : index
    %c0_88 = arith.constant 0 : index
    %209 = vector.load %arg6[%c1_86, %c0_87, %c0_88] : memref<2x16x4xf32, #tpu.memory_space<vmem>>, vector<1x16x4xf32>
    %210 = vector.shape_cast %209 : vector<1x16x4xf32> to vector<16x4xf32>
    %cst_89 = arith.constant dense<0.000000e+00> : vector<16x16xf32>
    %211 = tpu.matmul %210, %207, %cst_89 {dimension_numbers = #tpu.dot_dimension_numbers<[1], [0], [0], [1], [0, 0, 1, 1], [], []>} : vector<16x4xf32>, vector<4x16xf32>, vector<16x16xf32> -> vector<16x16xf32>
    %c1_90 = arith.constant 1 : index
    %c0_91 = arith.constant 0 : index
    %c0_92 = arith.constant 0 : index
    %212 = vector.load %arg7[%c1_90, %c0_91, %c0_92] : memref<2x16x1xf32, #tpu.memory_space<vmem>>, vector<1x16x1xf32>
    %213 = vector.shape_cast %212 : vector<1x16x1xf32> to vector<16x1xf32>
    %214 = vector.broadcast %213 : vector<16x1xf32> to vector<16x16xf32>
    %215 = arith.addf %211, %214 : vector<16x16xf32>
    %216 = vector.broadcast %1 : vector<1x16xf32> to vector<16x16xf32>
    %217 = arith.mulf %215, %216 : vector<16x16xf32>
    %cst_93 = arith.constant 0.000000e+00 : f32
    %218 = vector.broadcast %cst_93 : f32 to vector<16x16xf32>
    %219 = vector.extract_strided_slice %217 {offsets = [0, 15], sizes = [16, 1], strides = [1, 1]} : vector<16x16xf32> to vector<16x1xf32>
    %220 = vector.extract_strided_slice %217 {offsets = [0, 0], sizes = [16, 15], strides = [1, 1]} : vector<16x16xf32> to vector<16x15xf32>
    %221 = tpu.concatenate %219, %220 in 1 : vector<16x1xf32>, vector<16x15xf32> -> vector<16x16xf32>
    %222 = vector.broadcast %29 : vector<1x16xf32> to vector<16x16xf32>
    %223 = arith.mulf %221, %222 : vector<16x16xf32>
    %224 = vector.extract_strided_slice %217 {offsets = [0, 1], sizes = [16, 15], strides = [1, 1]} : vector<16x16xf32> to vector<16x15xf32>
    %225 = vector.extract_strided_slice %217 {offsets = [0, 0], sizes = [16, 1], strides = [1, 1]} : vector<16x16xf32> to vector<16x1xf32>
    %226 = tpu.concatenate %224, %225 in 1 : vector<16x15xf32>, vector<16x1xf32> -> vector<16x16xf32>
    %227 = vector.broadcast %40 : vector<1x16xf32> to vector<16x16xf32>
    %228 = arith.mulf %226, %227 : vector<16x16xf32>
    %229 = tpu.concatenate %223, %217, %228 in 0 : vector<16x16xf32>, vector<16x16xf32>, vector<16x16xf32> -> vector<48x16xf32>
    %c2 = arith.constant 2 : index
    %c0_94 = arith.constant 0 : index
    %c0_95 = arith.constant 0 : index
    %230 = vector.load %arg8[%c2, %c0_94, %c0_95] : memref<4x32x48xf32, #tpu.memory_space<vmem>>, vector<1x32x48xf32>
    %231 = vector.shape_cast %230 : vector<1x32x48xf32> to vector<32x48xf32>
    %cst_96 = arith.constant dense<0.000000e+00> : vector<32x16xf32>
    %232 = tpu.matmul %231, %229, %cst_96 {dimension_numbers = #tpu.dot_dimension_numbers<[1], [0], [0], [1], [0, 0, 1, 1], [], []>} : vector<32x48xf32>, vector<48x16xf32>, vector<32x16xf32> -> vector<32x16xf32>
    %c2_97 = arith.constant 2 : index
    %c0_98 = arith.constant 0 : index
    %c0_99 = arith.constant 0 : index
    %233 = vector.load %arg9[%c2_97, %c0_98, %c0_99] : memref<4x32x1xf32, #tpu.memory_space<vmem>>, vector<1x32x1xf32>
    %234 = vector.shape_cast %233 : vector<1x32x1xf32> to vector<32x1xf32>
    %235 = vector.broadcast %234 : vector<32x1xf32> to vector<32x16xf32>
    %236 = arith.addf %232, %235 : vector<32x16xf32>
    %237 = vector.extract_strided_slice %236 {offsets = [0, 0], sizes = [16, 16], strides = [1, 1]} : vector<32x16xf32> to vector<16x16xf32>
    %238 = math.tanh %237 : vector<16x16xf32>
    %239 = vector.extract_strided_slice %236 {offsets = [16, 0], sizes = [16, 16], strides = [1, 1]} : vector<32x16xf32> to vector<16x16xf32>
    %240 = arith.negf %239 : vector<16x16xf32>
    %241 = math.exp %240 : vector<16x16xf32>
    %cst_100 = arith.constant 1.000000e+00 : f32
    %242 = vector.broadcast %cst_100 : f32 to vector<16x16xf32>
    %243 = arith.addf %242, %241 : vector<16x16xf32>
    %244 = arith.divf %242, %243 : vector<16x16xf32>
    %245 = arith.mulf %238, %244 : vector<16x16xf32>
    %c2_101 = arith.constant 2 : index
    %c0_102 = arith.constant 0 : index
    %c0_103 = arith.constant 0 : index
    %246 = vector.load %arg10[%c2_101, %c0_102, %c0_103] : memref<4x32x16xf32, #tpu.memory_space<vmem>>, vector<1x32x16xf32>
    %247 = vector.shape_cast %246 : vector<1x32x16xf32> to vector<32x16xf32>
    %cst_104 = arith.constant dense<0.000000e+00> : vector<32x16xf32>
    %248 = tpu.matmul %247, %245, %cst_104 {dimension_numbers = #tpu.dot_dimension_numbers<[1], [0], [0], [1], [0, 0, 1, 1], [], []>} : vector<32x16xf32>, vector<16x16xf32>, vector<32x16xf32> -> vector<32x16xf32>
    %c2_105 = arith.constant 2 : index
    %c0_106 = arith.constant 0 : index
    %c0_107 = arith.constant 0 : index
    %249 = vector.load %arg11[%c2_105, %c0_106, %c0_107] : memref<4x32x1xf32, #tpu.memory_space<vmem>>, vector<1x32x1xf32>
    %250 = vector.shape_cast %249 : vector<1x32x1xf32> to vector<32x1xf32>
    %251 = vector.broadcast %250 : vector<32x1xf32> to vector<32x16xf32>
    %252 = arith.addf %248, %251 : vector<32x16xf32>
    %253 = vector.extract_strided_slice %252 {offsets = [0, 0], sizes = [16, 16], strides = [1, 1]} : vector<32x16xf32> to vector<16x16xf32>
    %254 = arith.addf %217, %253 : vector<16x16xf32>
    %255 = vector.broadcast %1 : vector<1x16xf32> to vector<16x16xf32>
    %256 = arith.mulf %254, %255 : vector<16x16xf32>
    %257 = vector.extract_strided_slice %252 {offsets = [16, 0], sizes = [16, 16], strides = [1, 1]} : vector<32x16xf32> to vector<16x16xf32>
    %258 = arith.addf %218, %257 : vector<16x16xf32>
    %259 = vector.extract_strided_slice %256 {offsets = [0, 14], sizes = [16, 2], strides = [1, 1]} : vector<16x16xf32> to vector<16x2xf32>
    %260 = vector.extract_strided_slice %256 {offsets = [0, 0], sizes = [16, 14], strides = [1, 1]} : vector<16x16xf32> to vector<16x14xf32>
    %261 = tpu.concatenate %259, %260 in 1 : vector<16x2xf32>, vector<16x14xf32> -> vector<16x16xf32>
    %262 = vector.broadcast %51 : vector<1x16xf32> to vector<16x16xf32>
    %263 = arith.mulf %261, %262 : vector<16x16xf32>
    %264 = vector.extract_strided_slice %256 {offsets = [0, 2], sizes = [16, 14], strides = [1, 1]} : vector<16x16xf32> to vector<16x14xf32>
    %265 = vector.extract_strided_slice %256 {offsets = [0, 0], sizes = [16, 2], strides = [1, 1]} : vector<16x16xf32> to vector<16x2xf32>
    %266 = tpu.concatenate %264, %265 in 1 : vector<16x14xf32>, vector<16x2xf32> -> vector<16x16xf32>
    %267 = vector.broadcast %62 : vector<1x16xf32> to vector<16x16xf32>
    %268 = arith.mulf %266, %267 : vector<16x16xf32>
    %269 = tpu.concatenate %263, %256, %268 in 0 : vector<16x16xf32>, vector<16x16xf32>, vector<16x16xf32> -> vector<48x16xf32>
    %c3 = arith.constant 3 : index
    %c0_108 = arith.constant 0 : index
    %c0_109 = arith.constant 0 : index
    %270 = vector.load %arg8[%c3, %c0_108, %c0_109] : memref<4x32x48xf32, #tpu.memory_space<vmem>>, vector<1x32x48xf32>
    %271 = vector.shape_cast %270 : vector<1x32x48xf32> to vector<32x48xf32>
    %cst_110 = arith.constant dense<0.000000e+00> : vector<32x16xf32>
    %272 = tpu.matmul %271, %269, %cst_110 {dimension_numbers = #tpu.dot_dimension_numbers<[1], [0], [0], [1], [0, 0, 1, 1], [], []>} : vector<32x48xf32>, vector<48x16xf32>, vector<32x16xf32> -> vector<32x16xf32>
    %c3_111 = arith.constant 3 : index
    %c0_112 = arith.constant 0 : index
    %c0_113 = arith.constant 0 : index
    %273 = vector.load %arg9[%c3_111, %c0_112, %c0_113] : memref<4x32x1xf32, #tpu.memory_space<vmem>>, vector<1x32x1xf32>
    %274 = vector.shape_cast %273 : vector<1x32x1xf32> to vector<32x1xf32>
    %275 = vector.broadcast %274 : vector<32x1xf32> to vector<32x16xf32>
    %276 = arith.addf %272, %275 : vector<32x16xf32>
    %277 = vector.extract_strided_slice %276 {offsets = [0, 0], sizes = [16, 16], strides = [1, 1]} : vector<32x16xf32> to vector<16x16xf32>
    %278 = math.tanh %277 : vector<16x16xf32>
    %279 = vector.extract_strided_slice %276 {offsets = [16, 0], sizes = [16, 16], strides = [1, 1]} : vector<32x16xf32> to vector<16x16xf32>
    %280 = arith.negf %279 : vector<16x16xf32>
    %281 = math.exp %280 : vector<16x16xf32>
    %cst_114 = arith.constant 1.000000e+00 : f32
    %282 = vector.broadcast %cst_114 : f32 to vector<16x16xf32>
    %283 = arith.addf %282, %281 : vector<16x16xf32>
    %284 = arith.divf %282, %283 : vector<16x16xf32>
    %285 = arith.mulf %278, %284 : vector<16x16xf32>
    %c3_115 = arith.constant 3 : index
    %c0_116 = arith.constant 0 : index
    %c0_117 = arith.constant 0 : index
    %286 = vector.load %arg10[%c3_115, %c0_116, %c0_117] : memref<4x32x16xf32, #tpu.memory_space<vmem>>, vector<1x32x16xf32>
    %287 = vector.shape_cast %286 : vector<1x32x16xf32> to vector<32x16xf32>
    %cst_118 = arith.constant dense<0.000000e+00> : vector<32x16xf32>
    %288 = tpu.matmul %287, %285, %cst_118 {dimension_numbers = #tpu.dot_dimension_numbers<[1], [0], [0], [1], [0, 0, 1, 1], [], []>} : vector<32x16xf32>, vector<16x16xf32>, vector<32x16xf32> -> vector<32x16xf32>
    %c3_119 = arith.constant 3 : index
    %c0_120 = arith.constant 0 : index
    %c0_121 = arith.constant 0 : index
    %289 = vector.load %arg11[%c3_119, %c0_120, %c0_121] : memref<4x32x1xf32, #tpu.memory_space<vmem>>, vector<1x32x1xf32>
    %290 = vector.shape_cast %289 : vector<1x32x1xf32> to vector<32x1xf32>
    %291 = vector.broadcast %290 : vector<32x1xf32> to vector<32x16xf32>
    %292 = arith.addf %288, %291 : vector<32x16xf32>
    %293 = vector.extract_strided_slice %292 {offsets = [0, 0], sizes = [16, 16], strides = [1, 1]} : vector<32x16xf32> to vector<16x16xf32>
    %294 = arith.addf %258, %293 : vector<16x16xf32>
    %295 = vector.broadcast %1 : vector<1x16xf32> to vector<16x16xf32>
    %296 = arith.mulf %294, %295 : vector<16x16xf32>
    %c1_122 = arith.constant 1 : index
    %c0_123 = arith.constant 0 : index
    %c0_124 = arith.constant 0 : index
    %297 = vector.load %arg12[%c1_122, %c0_123, %c0_124] : memref<2x8x16xf32, #tpu.memory_space<vmem>>, vector<1x8x16xf32>
    %298 = vector.shape_cast %297 : vector<1x8x16xf32> to vector<8x16xf32>
    %cst_125 = arith.constant dense<0.000000e+00> : vector<8x16xf32>
    %299 = tpu.matmul %298, %296, %cst_125 {dimension_numbers = #tpu.dot_dimension_numbers<[1], [0], [0], [1], [0, 0, 1, 1], [], []>} : vector<8x16xf32>, vector<16x16xf32>, vector<8x16xf32> -> vector<8x16xf32>
    %c1_126 = arith.constant 1 : index
    %c0_127 = arith.constant 0 : index
    %c0_128 = arith.constant 0 : index
    %300 = vector.load %arg13[%c1_126, %c0_127, %c0_128] : memref<2x8x1xf32, #tpu.memory_space<vmem>>, vector<1x8x1xf32>
    %301 = vector.shape_cast %300 : vector<1x8x1xf32> to vector<8x1xf32>
    %302 = vector.broadcast %301 : vector<8x1xf32> to vector<8x16xf32>
    %303 = arith.addf %299, %302 : vector<8x16xf32>
    %304 = vector.extract_strided_slice %303 {offsets = [0, 0], sizes = [4, 16], strides = [1, 1]} : vector<8x16xf32> to vector<4x16xf32>
    %305 = vector.extract_strided_slice %303 {offsets = [4, 0], sizes = [4, 16], strides = [1, 1]} : vector<8x16xf32> to vector<4x16xf32>
    %306 = math.exp %305 : vector<4x16xf32>
    %307 = arith.mulf %306, %208 : vector<4x16xf32>
    %308 = arith.addf %304, %307 : vector<4x16xf32>
    %309 = vector.broadcast %1 : vector<1x16xf32> to vector<4x16xf32>
    %310 = arith.mulf %308, %309 : vector<4x16xf32>
    %311 = vector.broadcast %1 : vector<1x16xf32> to vector<4x16xf32>
    %312 = arith.mulf %305, %311 : vector<4x16xf32>
    %cst_129 = arith.constant dense<0.000000e+00> : vector<16xf32>
    %313 = vector.multi_reduction <add>, %312, %cst_129 [0] : vector<4x16xf32> to vector<16xf32>
    %314 = vector.shape_cast %313 : vector<16xf32> to vector<1x16xf32>
    %c1_130 = arith.constant 1 : index
    %c0_131 = arith.constant 0 : index
    %c0_132 = arith.constant 0 : index
    %315 = vector.load %arg15[%c1_130, %c0_131, %c0_132] : memref<2x1x16xf32, #tpu.memory_space<vmem>>, vector<1x1x16xf32>
    %316 = vector.shape_cast %315 : vector<1x1x16xf32> to vector<1x16xf32>
    %317 = vector.shape_cast %314 : vector<1x16xf32> to vector<1x1x16xf32>
    tpu.vector_store %arg15[%c1_130, %c0_131, %c0_132], %317 {strides = array<i32>} : memref<2x1x16xf32, #tpu.memory_space<vmem>>, vector<1x1x16xf32>,
    %c0_133 = arith.constant 0 : index
    %c0_134 = arith.constant 0 : index
    %318 = vector.load %arg14[%c0_133, %c0_134] : memref<8x16xf32, #tpu.memory_space<vmem>>, vector<4x16xf32>
    tpu.vector_store %arg14[%c0_133, %c0_134], %207 {strides = array<i32>} : memref<8x16xf32, #tpu.memory_space<vmem>>, vector<4x16xf32>,
    %c4 = arith.constant 4 : index
    %c0_135 = arith.constant 0 : index
    %319 = vector.load %arg14[%c4, %c0_135] : memref<8x16xf32, #tpu.memory_space<vmem>>, vector<4x16xf32>
    tpu.vector_store %arg14[%c4, %c0_135], %310 {strides = array<i32>} : memref<8x16xf32, #tpu.memory_space<vmem>>, vector<4x16xf32>,
    return
  }
  func.func @transform_0(%arg0: i32) -> (i32, i32) {
    %c0_i32 = arith.constant 0 : i32
    %c0_i32_0 = arith.constant 0 : i32
    %c0_i32_1 = arith.constant 0 : i32
    return %c0_i32, %c0_i32_0 : i32, i32
  }
  func.func @transform_1(%arg0: i32) -> (i32, i32) {
    %c0_i32 = arith.constant 0 : i32
    %c0_i32_0 = arith.constant 0 : i32
    %c0_i32_1 = arith.constant 0 : i32
    return %c0_i32, %c0_i32_0 : i32, i32
  }
  func.func @transform_2(%arg0: i32) -> (i32, i32, i32) {
    %c0_i32 = arith.constant 0 : i32
    %c0_i32_0 = arith.constant 0 : i32
    %c0_i32_1 = arith.constant 0 : i32
    %c0_i32_2 = arith.constant 0 : i32
    return %c0_i32, %c0_i32_0, %c0_i32_1 : i32, i32, i32
  }
  func.func @transform_3(%arg0: i32) -> (i32, i32, i32) {
    %c0_i32 = arith.constant 0 : i32
    %c0_i32_0 = arith.constant 0 : i32
    %c0_i32_1 = arith.constant 0 : i32
    %c0_i32_2 = arith.constant 0 : i32
    return %c0_i32, %c0_i32_0, %c0_i32_1 : i32, i32, i32
  }
  func.func @transform_4(%arg0: i32) -> (i32, i32, i32) {
    %c0_i32 = arith.constant 0 : i32
    %c0_i32_0 = arith.constant 0 : i32
    %c0_i32_1 = arith.constant 0 : i32
    %c0_i32_2 = arith.constant 0 : i32
    return %c0_i32, %c0_i32_0, %c0_i32_1 : i32, i32, i32
  }
  func.func @transform_5(%arg0: i32) -> (i32, i32, i32) {
    %c0_i32 = arith.constant 0 : i32
    %c0_i32_0 = arith.constant 0 : i32
    %c0_i32_1 = arith.constant 0 : i32
    %c0_i32_2 = arith.constant 0 : i32
    return %c0_i32, %c0_i32_0, %c0_i32_1 : i32, i32, i32
  }
  func.func @transform_6(%arg0: i32) -> (i32, i32, i32) {
    %c0_i32 = arith.constant 0 : i32
    %c0_i32_0 = arith.constant 0 : i32
    %c0_i32_1 = arith.constant 0 : i32
    %c0_i32_2 = arith.constant 0 : i32
    return %c0_i32, %c0_i32_0, %c0_i32_1 : i32, i32, i32
  }
  func.func @transform_7(%arg0: i32) -> (i32, i32, i32) {
    %c0_i32 = arith.constant 0 : i32
    %c0_i32_0 = arith.constant 0 : i32
    %c0_i32_1 = arith.constant 0 : i32
    %c0_i32_2 = arith.constant 0 : i32
    return %c0_i32, %c0_i32_0, %c0_i32_1 : i32, i32, i32
  }
  func.func @transform_8(%arg0: i32) -> (i32, i32, i32) {
    %c0_i32 = arith.constant 0 : i32
    %c0_i32_0 = arith.constant 0 : i32
    %c0_i32_1 = arith.constant 0 : i32
    %c0_i32_2 = arith.constant 0 : i32
    return %c0_i32, %c0_i32_0, %c0_i32_1 : i32, i32, i32
  }
  func.func @transform_9(%arg0: i32) -> (i32, i32, i32) {
    %c0_i32 = arith.constant 0 : i32
    %c0_i32_0 = arith.constant 0 : i32
    %c0_i32_1 = arith.constant 0 : i32
    %c0_i32_2 = arith.constant 0 : i32
    return %c0_i32, %c0_i32_0, %c0_i32_1 : i32, i32, i32
  }
  func.func @transform_10(%arg0: i32) -> (i32, i32, i32) {
    %c0_i32 = arith.constant 0 : i32
    %c0_i32_0 = arith.constant 0 : i32
    %c0_i32_1 = arith.constant 0 : i32
    %c0_i32_2 = arith.constant 0 : i32
    return %c0_i32, %c0_i32_0, %c0_i32_1 : i32, i32, i32
  }
  func.func @transform_11(%arg0: i32) -> (i32, i32, i32) {
    %c0_i32 = arith.constant 0 : i32
    %c0_i32_0 = arith.constant 0 : i32
    %c0_i32_1 = arith.constant 0 : i32
    %c0_i32_2 = arith.constant 0 : i32
    return %c0_i32, %c0_i32_0, %c0_i32_1 : i32, i32, i32
  }
  func.func @transform_12(%arg0: i32) -> (i32, i32, i32) {
    %c0_i32 = arith.constant 0 : i32
    %c0_i32_0 = arith.constant 0 : i32
    %c0_i32_1 = arith.constant 0 : i32
    %c0_i32_2 = arith.constant 0 : i32
    return %c0_i32, %c0_i32_0, %c0_i32_1 : i32, i32, i32
  }
  func.func @transform_13(%arg0: i32) -> (i32, i32) {
    %c0_i32 = arith.constant 0 : i32
    %c0_i32_0 = arith.constant 0 : i32
    %c0_i32_1 = arith.constant 0 : i32
    return %c0_i32, %c0_i32_0 : i32, i32
  }
  func.func @transform_14(%arg0: i32) -> (i32, i32, i32) {
    %c0_i32 = arith.constant 0 : i32
    %c0_i32_0 = arith.constant 0 : i32
    %c0_i32_1 = arith.constant 0 : i32
    %c0_i32_2 = arith.constant 0 : i32
    return %c0_i32, %c0_i32_0, %c0_i32_1 : i32, i32, i32
  }
}

</mosaic_0001>

<llo_original>
// kernel: mul.18
$region0: #{mul.18}
  %s0 = inlined_call_operand.vmem [shape: f32[2,8,1,2], index: 0, kind: input, shape index: {}]
  %s1 = inlined_call_operand.vmem [shape: f32[2,16], index: 1, kind: output, shape index: {}]
  $region1: #{mul.18} parent=0
    #allocation0 [shape = 'u8[4096]{0}', space=vmem, size = 0x1000, scoped, tag = 'scoped mem for output reshape']
    %s2 = smov 3
    %v3 = vld [vmem:[%s0] ss:$8 sm:%s2]
    %vm4 = vcmask 15360
    %5 = vst.msk [vmem:[#allocation0] sm:$0x3] %vm4, %v3
    %s6 = scalar_lea.vmem %s0, 7
    %s7 = smov 3
    %v8 = vld [vmem:[%s6] ss:$8 sm:%s7]
    %9 = vrot.lane.b32.xlu0 %v8, 14
    %v10 = vpop.permute.xlu0 %9
    %vm11 = vcmask 130160
    %12 = vst.msk [vmem:[#allocation0] sm:$0x3] %vm11, %v10
    %s13 = scalar_lea.vmem %s0, 6
    %s14 = smov 3
    %v15 = vld [vmem:[%s13] ss:$8 sm:%s14]
    %16 = vrot.lane.b32.xlu0 %v15, 12
    %v17 = vpop.permute.xlu0 %16
    %vm18 = vcmask 113760
    %19 = vst.msk [vmem:[#allocation0] sm:$0x3] %vm18, %v17
    %s20 = scalar_lea.vmem %s0, 5
    %s21 = smov 3
    %v22 = vld [vmem:[%s20] ss:$8 sm:%s21]
    %23 = vrot.lane.b32.xlu0 %v22, 10
    %v24 = vpop.permute.xlu0 %23
    %vm25 = vcmask 97360
    %26 = vst.msk [vmem:[#allocation0] sm:$0x3] %vm25, %v24
    %s27 = scalar_lea.vmem %s0, 4
    %s28 = smov 3
    %v29 = vld [vmem:[%s27] ss:$8 sm:%s28]
    %30 = vrot.lane.b32.xlu0 %v29, 8
    %v31 = vpop.permute.xlu0 %30
    %vm32 = vcmask 80960
    %33 = vst.msk [vmem:[#allocation0] sm:$0x3] %vm32, %v31
    %s34 = scalar_lea.vmem %s0, 3
    %s35 = smov 3
    %v36 = vld [vmem:[%s34] ss:$8 sm:%s35]
    %37 = vrot.lane.b32.xlu0 %v36, 6
    %v38 = vpop.permute.xlu0 %37
    %vm39 = vcmask 64560
    %40 = vst.msk [vmem:[#allocation0] sm:$0x3] %vm39, %v38
    %s41 = scalar_lea.vmem %s0, 2
    %s42 = smov 3
    %v43 = vld [vmem:[%s41] ss:$8 sm:%s42]
    %44 = vrot.lane.b32.xlu0 %v43, 4
    %v45 = vpop.permute.xlu0 %44
    %vm46 = vcmask 48160
    %47 = vst.msk [vmem:[#allocation0] sm:$0x3] %vm46, %v45
    %s48 = scalar_lea.vmem %s0, 1
    %s49 = smov 3
    %v50 = vld [vmem:[%s48] ss:$8 sm:%s49]
    %51 = vrot.lane.b32.xlu0 %v50, 2
    %v52 = vpop.permute.xlu0 %51
    %vm53 = vcmask 31760
    %54 = vst.msk [vmem:[#allocation0] sm:$0x3] %vm53, %v52
    %s56 = sshllo.u32 0, 2
    %v58 = vld [vmem:[#allocation0] sm:%s56]
    %s59 = sshllo.u32 0, 2
    %60 = vst [vmem:[%s1] sm:%s59] %v58

// kernel: custom-call.2
$region0: #{custom-call.2}
  %s0 = inlined_call_operand.vmem [shape: f32[2,4,4], index: 0, kind: input, shape index: {}]
  %s1 = inlined_call_operand.vmem [shape: f32[2,4,4], index: 1, kind: output, shape index: {0}]
  %s2 = inlined_call_operand.vmem [shape: s32[2,4], index: 2, kind: output, shape index: {1}]
  %s3 = inlined_call_operand.hbm [shape: s32[2,4], index: 3, kind: output, shape index: {2}]
  %4 = xla_tuple %s1, %s2, %s3
  $region1: #{custom-call.2} parent=0
    #allocation0 [shape = 'u8[4096]{0}', space=vmem, size = 0x1000, scoped, tag = 'operand span for operand 0']
    #allocation1 [shape = 'u8[4096]{0}', space=vmem, size = 0x1000, scoped, tag = 'packed  for operand 0']
    #allocation2 [shape = 'u8[4096]{0}', space=vmem, size = 0x1000, scoped, tag = 'operand span for operand 1']
    #allocation3 [shape = 'u8[4096]{0}', space=vmem, size = 0x1000, scoped, tag = 'packed  for operand 1']
    #allocation4 [shape = 'u8[4096]{0}', space=vmem, size = 0x1000, scoped, tag = 'operand span for operand 2']
    #allocation5 [shape = 'u8[2048]{0}', space=vmem, size = 0x800, scoped, tag = 'packed  for operand 2']
    #allocation6 [shape = 'u8[4096]{0}', space=vmem, size = 0x1000, scoped, tag = 'operand span for operand 3']
    #allocation7 [shape = 'u8[2048]{0}', space=vmem, size = 0x800, scoped, tag = 'packed  for operand 3']
    #allocation8 [shape = 's32[2]{0}', space=sflag, size = 0x8, scoped, tag = 'scoped memory for custom-call.2']
    %5 = vsyncpa [#allocation8], 0
    %s6 = scalar_lea.sflag [#allocation8], 1
    %7 = vsyncpa %s6, 0
    loop: start=0, step=1, limit=4
    $region2: #{custom-call.2} parent=1 // loop_pre_header
      _
    $region3: #{custom-call.2} parent=1 // loop_header
      %s9 = sphi 0, %s13
      %p10 = scmp.ge.s32.totalorder %s9, 4
      %s21 = sphi 0, %s23
      %s24 = sphi 0, %s21
      %s25 = sphi 0, %s24
      %s41 = sphi 0, %s25
      %s49 = sphi 0, %s51
      %s52 = sphi 0, %s49
      %s53 = sphi 0, %s52
      %s69 = sphi 0, %s53
    $region4: #{custom-call.2} parent=1 // loop_header_branch
      %12 = sbr.rel (%p10) target = $region8
    $region5: #{custom-call.2} parent=1 // loop_body
      %s14 = ssub.s32 %s9, 1
      %s15 = ssub.s32 %s9, 2
      %s16 = sadd.s32 %s9, 1
      %s17 = sshrl.u32 %s9, 3
      %s18 = sshrl.u32 %s16, 3
      %s19 = ssub.s32 %s17, %s18
      %p20 = scmp.eq.s32.totalorder %s19, 0
      %s22 = sadd.s32 %s21, 1
      %s23 = scalar_select %p20, %s21, %s22
      %p26 = pneg %p20
      %p27 = scmp.eq.s32.totalorder %s9, 1
      %p28 = por %p26, %p27
      %p29 = scmp.ne.s32.totalorder %s21, %s24
      %p30 = scmp.eq.s32.totalorder %s9, 0
      %p31 = por %p29, %p30
      %p32 = scmp.ne.s32.totalorder %s21, %s24
      %p33 = scmp.eq.s32.totalorder %s14, 1
      %p34 = por %p32, %p33
      %p35 = scmp.ne.s32.totalorder %s24, %s25
      %p36 = scmp.eq.s32.totalorder %s14, 0
      %p37 = por %p35, %p36
      %p38 = scmp.ne.s32.totalorder %s24, %s25
      %p39 = scmp.eq.s32.totalorder %s15, 1
      %p40 = por %p38, %p39
      %p42 = scmp.ne.s32.totalorder %s25, %s41
      %p43 = scmp.eq.s32.totalorder %s15, 0
      %p44 = por %p42, %p43
      %s45 = sshrl.u32 %s9, 3
      %s46 = sshrl.u32 %s16, 3
      %s47 = ssub.s32 %s45, %s46
      %p48 = scmp.eq.s32.totalorder %s47, 0
      %s50 = sadd.s32 %s49, 1
      %s51 = scalar_select %p48, %s49, %s50
      %p54 = pneg %p48
      %p55 = scmp.eq.s32.totalorder %s9, 1
      %p56 = por %p54, %p55
      %p57 = scmp.ne.s32.totalorder %s49, %s52
      %p58 = scmp.eq.s32.totalorder %s9, 0
      %p59 = por %p57, %p58
      %p60 = scmp.ne.s32.totalorder %s49, %s52
      %p61 = scmp.eq.s32.totalorder %s14, 1
      %p62 = por %p60, %p61
      %p63 = scmp.ne.s32.totalorder %s52, %s53
      %p64 = scmp.eq.s32.totalorder %s14, 0
      %p65 = por %p63, %p64
      %p66 = scmp.ne.s32.totalorder %s52, %s53
      %p67 = scmp.eq.s32.totalorder %s15, 1
      %p68 = por %p66, %p67
      %p70 = scmp.ne.s32.totalorder %s53, %s69
      %p71 = scmp.eq.s32.totalorder %s15, 0
      %p72 = por %p70, %p71
      %p73 = scmp.le.s32.totalorder 1, %s9
      %p74 = scmp.lt.s32.totalorder %s9, 3
      %p75 = pnand %p73, %p74
      %p76 = pneg %p75
      // Predicated region
      $region9: #{custom-call.2} parent=5 // pred_check
        _
      $region10: #{custom-call.2} parent=5 // pred_check_branch
        %78 = sbr.rel (%p75) target = $region12
      $region11: #{custom-call.2} parent=5 // pred_region
        %s79 = ssub.s32 %s9, 1
      $region12: #{custom-call.2} parent=5 // pred_fallthru
        _
      %p80 = scmp.lt.s32.totalorder %s9, 2
      // Predicated region
      $region13: #{custom-call.2} parent=5 // pred_check
        %p81 = pneg %p80
      $region14: #{custom-call.2} parent=5 // pred_check_branch
        %83 = sbr.rel (%p81) target = $region16
      $region15: #{custom-call.2} parent=5 // pred_region
        %s84 = sand.u32 %s9, 1
        %s85 = sand.u32 %s9, 1
        %s86 = smul.addr %s85, 4
        %s87 = scalar_lea.vmem [#allocation1], %s86
        %s88 = smul.addr %s9, 4
        %s89 = scalar_lea.vmem %s0, %s88
        // Predicated region
        $region17: #{custom-call.2} parent=15 // pred_check
          _
        $region18: #{custom-call.2} parent=15 // pred_check_branch
          %91 = sbr.rel (0) target = $region20
        $region19: #{custom-call.2} parent=15 // pred_region
          // Predicated region
          $region21: #{custom-call.2} parent=19 // pred_check
            _
          $region22: #{custom-call.2} parent=19 // pred_check_branch
            %93 = sbr.rel target = $region24
          $region23: #{custom-call.2} parent=19 // pred_region
            // Predicated region
            $region36: #{custom-call.2} parent=23 // pred_check
              _
            $region37: #{custom-call.2} parent=23 // pred_check_branch
              %108 = sbr.rel (0) target = $region39
            $region38: #{custom-call.2} parent=23 // pred_region
              loop: start=0, step=1, limit=1
              $region40: #{custom-call.2} parent=38 // loop_pre_header
                _
              $region41: #{custom-call.2} parent=38 // loop_header
                %s111 = sphi 0, %s115
                %p112 = scmp.ge.s32.totalorder %s111, 1
                %s116 = sphi %s89, %s89
                %s117 = sphi %s87, %s87
              $region42: #{custom-call.2} parent=38 // loop_header_branch
                %114 = sbr.rel (%p112) target = $region46
              $region43: #{custom-call.2} parent=38 // loop_body
                %v118 = vld [vmem:[%s116] sm:$0xf]
                %119 = vst [vmem:[%s117] sm:$0xf] %v118
              $region44: #{custom-call.2} parent=38 // loop_footer
                %s115 = sadd.s32 1, %s111
              $region45: #{custom-call.2} parent=38 // loop_footer_branch
                %110 = sbr.rel target = $region41
              $region46: #{custom-call.2} parent=38 // loop_exit
                _
            $region39: #{custom-call.2} parent=23 // pred_fallthru
              _
          $region24: #{custom-call.2} parent=19 // pred_fallthru
            _
          // Predicated region
          $region25: #{custom-call.2} parent=19 // pred_check
            _
          $region26: #{custom-call.2} parent=19 // pred_check_branch
            %95 = sbr.rel (0) target = $region28
          $region27: #{custom-call.2} parent=19 // pred_region
            loop: start=0, step=1, limit=1
            $region29: #{custom-call.2} parent=27 // loop_pre_header
              _
            $region30: #{custom-call.2} parent=27 // loop_header
              %s98 = sphi 0, %s102
              %p99 = scmp.ge.s32.totalorder %s98, 1
              %s103 = sphi %s89, %s89
              %s104 = sphi %s87, %s87
            $region31: #{custom-call.2} parent=27 // loop_header_branch
              %101 = sbr.rel (%p99) target = $region35
            $region32: #{custom-call.2} parent=27 // loop_body
              %v105 = vld [vmem:[%s103] sm:$0xf]
              %106 = vst [vmem:[%s104] sm:$0xf] %v105
            $region33: #{custom-call.2} parent=27 // loop_footer
              %s102 = sadd.s32 1, %s98
            $region34: #{custom-call.2} parent=27 // loop_footer_branch
              %97 = sbr.rel target = $region30
            $region35: #{custom-call.2} parent=27 // loop_exit
              _
          $region28: #{custom-call.2} parent=19 // pred_fallthru
            _
        $region20: #{custom-call.2} parent=15 // pred_fallthru
          _
        %120 = vnop
      $region16: #{custom-call.2} parent=5 // pred_fallthru
        _
      %p121 = scmp.le.s32.totalorder 1, %s9
      %p122 = scmp.lt.s32.totalorder %s9, 3
      %p123 = pnand %p121, %p122
      %p124 = pneg %p123
      // Predicated region
      $region47: #{custom-call.2} parent=5 // pred_check
        _
      $region48: #{custom-call.2} parent=5 // pred_check_branch
        %126 = sbr.rel (%p123) target = $region50
      $region49: #{custom-call.2} parent=5 // pred_region
        #allocation9 [shape = 's32[4,128]{1,0}', space=vmem, size = 0x1000, scoped, tag = 'scratch for permutations']
        %s127 = ssub.s32 %s9, 1
        %s128 = sand.u32 %s14, 1
        %s129 = sand.u32 %s14, 1
        %s130 = smul.addr %s129, 4
        %s131 = scalar_lea.vmem [#allocation1], %s130
        %s132 = sand.u32 %s14, 1
        %s133 = sand.u32 %s14, 1
        %s134 = smul.addr %s133, 4
        %s135 = scalar_lea.vmem [#allocation1], %s134
        %s136 = sand.u32 %s14, 1
        %s137 = sand.u32 %s14, 1
        %s138 = smul.addr %s137, 4
        %s139 = scalar_lea.vmem [#allocation3], %s138
        %p140 = pneg %p37
        %p141 = pneg %p34
        %s142 = sand.u32 %s24, 1
        %s143 = sand.u32 %s24, 1
        %s144 = smul.addr %s143, 2
        %s145 = scalar_lea.vmem [#allocation5], %s144
        %p146 = pneg %p65
        %p147 = pneg %p62
        %s148 = sand.u32 %s52, 1
        %s149 = scalar_lea.sflag [#allocation8], %s148
        %s150 = sand.u32 %s52, 1
        %s151 = smul.addr %s150, 2
        %s152 = scalar_lea.vmem [#allocation7], %s151
        %s154 = sshllo.u32 0, 4
        %v155 = vld [vmem:[%s135] sm:%s154]
        %156 = vst [vmem:[#allocation0] sm:%s154] %v155
        %s157 = sshrl.u32 %s14, 3
        %s158 = sshrl.u32 %s14, 3
        %v159 = vld [vmem:[#allocation0] sm:$0xff]
        %160 = vst [vmem:[#allocation2] sm:$0xff] %v159
        %s161 = sand.u32 %s14, 7
        %s162 = scalar_lea.vmem [#allocation4], %s161
        %s163 = sand.u32 %s14, 7
        %s164 = scalar_lea.vmem [#allocation6], %s163
        %165 = vst [vmem:[%s162] sm:$0x1] 0
        %v166 = vlaneseq
        %v167 = vshrl.u32 %v166, 7
        %v168 = vmov %v167
        %170 = vst [vmem:[#allocation9] sm:$0xff] %v168
        loop: start=0, step=1, limit=4
        $region52: #{custom-call.2} parent=49 // loop_pre_header
          _
        $region53: #{custom-call.2} parent=49 // loop_header
          %s172 = sphi 0, %s176
          %p173 = scmp.ge.s32.totalorder %s172, 4
        $region54: #{custom-call.2} parent=49 // loop_header_branch
          %175 = sbr.rel (%p173) target = $region58
        $region55: #{custom-call.2} parent=49 // loop_body
          %v177 = vstv %s172
          %v178 = vlaneseq
          %v179 = vshrl.u32 %v178, 7
          %v180 = vmov %v179
          %v181 = vld [vmem:[#allocation2] sm:$0xff]
          %v182 = vand.u32 2147483647, %v181
          %v184 = vstv %s172
          %vm185 = vcmp.ge.s32.totalorder %v180, %v184
          %vm186 = vcmp.lt.s32.totalorder %v180, 4
          %vm187 = vmand %vm185, %vm186
          %vm188 = vcmp.lt.f32.partialorder -inf, %v182
          %vm189 = vmand %vm187, %vm188
          %v190 = vsel %vm189, %v180, %v177
          %v191 = vsel %vm189, %v182, -inf
          %v192 = vrot.slane %v191, 1
          %v193 = vrot.slane %v190, 1
          %vm194 = vcmp.ge.f32.partialorder %v192, %v191
          %v195 = vsel %vm194, %v192, %v191
          %v196 = vsel %vm194, %v193, %v190
          %v197 = vrot.slane %v192, 1
          %v198 = vrot.slane %v193, 1
          %vm199 = vcmp.ge.f32.partialorder %v197, %v195
          %v200 = vsel %vm199, %v197, %v195
          %v201 = vsel %vm199, %v198, %v196
          %v202 = vrot.slane %v197, 1
          %v203 = vrot.slane %v198, 1
          %vm204 = vcmp.ge.f32.partialorder %v202, %v200
          %v205 = vsel %vm204, %v202, %v200
          %v206 = vsel %vm204, %v203, %v201
          %v207 = vrot.slane %v202, 1
          %v208 = vrot.slane %v203, 1
          %vm209 = vcmp.ge.f32.partialorder %v207, %v205
          %v210 = vsel %vm209, %v207, %v205
          %v211 = vsel %vm209, %v208, %v206
          %v212 = vrot.slane %v207, 1
          %v213 = vrot.slane %v208, 1
          %vm214 = vcmp.ge.f32.partialorder %v212, %v210
          %v215 = vsel %vm214, %v212, %v210
          %v216 = vsel %vm214, %v213, %v211
          %v217 = vrot.slane %v212, 1
          %v218 = vrot.slane %v213, 1
          %vm219 = vcmp.ge.f32.partialorder %v217, %v215
          %v220 = vsel %vm219, %v217, %v215
          %v221 = vsel %vm219, %v218, %v216
          %v222 = vrot.slane %v217, 1
          %v223 = vrot.slane %v218, 1
          %vm224 = vcmp.ge.f32.partialorder %v222, %v220
          %v225 = vsel %vm224, %v222, %v220
          %v226 = vsel %vm224, %v223, %v221
          %s227 = ssub.s32 128, %s172
          %228 = vrot.lane.b32.xlu0 %v226, %s227
          %v229 = vpop.permute.xlu0 %228
          %s230 = vtos %v229
          %v231 = vstv %s172
          %v232 = vlaneseq
          %v233 = vand.u32 %v232, 127
          %vm234 = vcmp.eq.s32.totalorder %v233, %v231
          %v235 = vstv %s230
          %v236 = vld [vmem:[%s162] ss:$0 sm:$0xff]
          %v237 = vsel %vm234, %v235, %v236
          %238 = vst [vmem:[%s162] sm:$0x1] %v237
          %s239 = scalar_lea.vmem [#allocation2], %s172
          %s240 = scalar_lea.vmem [#allocation2], %s230
          %v241 = vld [vmem:[%s239] ss:$0 sm:$0xff]
          %v242 = vld [vmem:[%s240] ss:$0 sm:$0xff]
          %243 = vst [vmem:[%s240] sm:$0x1] %v241
          %244 = vst [vmem:[%s239] sm:$0x1] %v242
          %s245 = scalar_lea.vmem [#allocation9], %s172
          %s246 = scalar_lea.vmem [#allocation9], %s230
          %v247 = vld [vmem:[%s245] ss:$0 sm:$0xff]
          %v248 = vld [vmem:[%s246] ss:$0 sm:$0xff]
          %249 = vst [vmem:[%s246] sm:$0x1] %v247
          %250 = vst [vmem:[%s245] sm:$0x1] %v248
          %vm251 = vcmp.ne.f32.partialorder %v242, 0.0
          %vm252 = vmand %vm234, %vm251
          %v253 = vsel %vm252, %v242, 1.0
          %v254 = vlaneseq
          %v255 = vand.u32 %v254, 127
          %v256 = vstv %s172
          %vm257 = vcmp.gt.s32.totalorder %v255, %v256
          %v258 = vsel %vm257, %v242, 0.0
          %v259 = vlaneseq
          %v260 = vshrl.u32 %v259, 7
          %v261 = vmov %v260
          %v262 = vld [vmem:[#allocation2] sm:$0xff]
          %v264 = vstv %s172
          %vm265 = vcmp.gt.s32.totalorder %v261, %v264
          %v266 = vsel %vm265, %v253, 1.0
          %v267 = vrcp.pop %v266
          %v268 = vmul.f32 %v262, %v267
          %vm269 = vmand %vm265, %vm234
          %v270 = vsel %vm269, %v268, 0.0
          %271 = vadd.xlane.f32.xlu0 %v270
          %v272 = vpop.xlane.xlu0 %271
          %v273 = vmul.f32 %v272, %v258
          %v274 = vsub.f32 %v268, %v273
          %275 = vst [vmem:[#allocation2] sm:$0xff] %v274
        $region56: #{custom-call.2} parent=49 // loop_footer
          %s176 = sadd.s32 1, %s172
        $region57: #{custom-call.2} parent=49 // loop_footer_branch
          %171 = sbr.rel target = $region53
        $region58: #{custom-call.2} parent=49 // loop_exit
          _
        %v276 = vld [vmem:[#allocation9] sm:$0xff]
        %s277 = scalar_lea.vmem [#allocation9], 8
        %s278 = scalar_lea.vmem [#allocation9], 16
        %s279 = scalar_lea.vmem [#allocation9], 24
        %s280 = scalar_lea.vmem [#allocation9], 32
        %s281 = scalar_lea.vmem [#allocation9], 40
        %s282 = scalar_lea.vmem [#allocation9], 48
        %s283 = scalar_lea.vmem [#allocation9], 56
        %s284 = scalar_lea.vmem [#allocation9], 64
        %s285 = scalar_lea.vmem [#allocation9], 72
        %s286 = scalar_lea.vmem [#allocation9], 80
        %s287 = scalar_lea.vmem [#allocation9], 88
        %s288 = scalar_lea.vmem [#allocation9], 96
        %s289 = scalar_lea.vmem [#allocation9], 104
        %s290 = scalar_lea.vmem [#allocation9], 112
        %s291 = scalar_lea.vmem [#allocation9], 120
        %292 = vxpose.xlu0.b32.start [1/16] %v276, 128
        %293 = vxpose.xlu0.b32.cont [2/16] 0, 128
        %294 = vxpose.xlu0.b32.cont [3/16] 0, 128
        %295 = vxpose.xlu0.b32.cont [4/16] 0, 128
        %296 = vxpose.xlu0.b32.cont [5/16] 0, 128
        %297 = vxpose.xlu0.b32.cont [6/16] 0, 128
        %298 = vxpose.xlu0.b32.cont [7/16] 0, 128
        %299 = vxpose.xlu0.b32.cont [8/16] 0, 128
        %300 = vxpose.xlu0.b32.cont [9/16] 0, 128
        %301 = vxpose.xlu0.b32.cont [10/16] 0, 128
        %302 = vxpose.xlu0.b32.cont [11/16] 0, 128
        %303 = vxpose.xlu0.b32.cont [12/16] 0, 128
        %304 = vxpose.xlu0.b32.cont [13/16] 0, 128
        %305 = vxpose.xlu0.b32.cont [14/16] 0, 128
        %306 = vxpose.xlu0.b32.cont [15/16] 0, 128
        %307 = vxpose.xlu0.b32.end [16/16] 0, 128
        %v308 = vpop.trf.xlu0
        %v309 = vpop.trf.xlu0
        %v310 = vpop.trf.xlu0
        %v311 = vpop.trf.xlu0
        %v312 = vpop.trf.xlu0
        %v313 = vpop.trf.xlu0
        %v314 = vpop.trf.xlu0
        %v315 = vpop.trf.xlu0
        %v316 = vpop.trf.xlu0
        %v317 = vpop.trf.xlu0
        %v318 = vpop.trf.xlu0
        %v319 = vpop.trf.xlu0
        %v320 = vpop.trf.xlu0
        %v321 = vpop.trf.xlu0
        %v322 = vpop.trf.xlu0
        %v323 = vpop.trf.xlu0
        %324 = vst [vmem:[%s164] sm:$0x1] %v308
        %s326 = sshllo.u32 0, 4
        %v328 = vld [vmem:[#allocation2] sm:%s326]
        %s329 = sshllo.u32 0, 4
        %330 = vst [vmem:[%s139] sm:%s329] %v328
        %s332 = sshllo.u32 0, 2
        %v334 = vld [vmem:[#allocation4] sm:%s332]
        %s335 = sshllo.u32 0, 2
        %336 = vst [vmem:[%s145] sm:%s335] %v334
        %s338 = sshllo.u32 0, 2
        %v340 = vld [vmem:[#allocation6] sm:%s338]
        %s341 = sshllo.u32 0, 2
        %342 = vst [vmem:[%s152] sm:%s341] %v340
        %s343 = sand.u32 %s14, 1
        %s344 = sand.u32 %s14, 1
        %s345 = smul.addr %s344, 4
        %s346 = scalar_lea.vmem [#allocation3], %s345
        %s347 = sand.u32 %s24, 1
        %s348 = sand.u32 %s24, 1
        %s349 = smul.addr %s348, 2
        %s350 = scalar_lea.vmem [#allocation5], %s349
        %s351 = sand.u32 %s52, 1
        %s352 = scalar_lea.sflag [#allocation8], %s351
        %s353 = sand.u32 %s52, 1
        %s354 = smul.addr %s353, 2
        %s355 = scalar_lea.vmem [#allocation7], %s354
        %s356 = smul.addr %s14, 4
        %s357 = scalar_lea.vmem %s1, %s356
        // Predicated region
        $region59: #{custom-call.2} parent=49 // pred_check
          _
        $region60: #{custom-call.2} parent=49 // pred_check_branch
          %359 = sbr.rel (0) target = $region62
        $region61: #{custom-call.2} parent=49 // pred_region
          // Predicated region
          $region63: #{custom-call.2} parent=61 // pred_check
            _
          $region64: #{custom-call.2} parent=61 // pred_check_branch
            %361 = sbr.rel target = $region66
          $region65: #{custom-call.2} parent=61 // pred_region
            // Predicated region
            $region78: #{custom-call.2} parent=65 // pred_check
              _
            $region79: #{custom-call.2} parent=65 // pred_check_branch
              %376 = sbr.rel (0) target = $region81
            $region80: #{custom-call.2} parent=65 // pred_region
              loop: start=0, step=1, limit=1
              $region82: #{custom-call.2} parent=80 // loop_pre_header
                _
              $region83: #{custom-call.2} parent=80 // loop_header
                %s379 = sphi 0, %s383
                %p380 = scmp.ge.s32.totalorder %s379, 1
                %s384 = sphi %s346, %s346
                %s385 = sphi %s357, %s357
              $region84: #{custom-call.2} parent=80 // loop_header_branch
                %382 = sbr.rel (%p380) target = $region88
              $region85: #{custom-call.2} parent=80 // loop_body
                %v386 = vld [vmem:[%s384] sm:$0xf]
                %387 = vst [vmem:[%s385] sm:$0xf] %v386
              $region86: #{custom-call.2} parent=80 // loop_footer
                %s383 = sadd.s32 1, %s379
              $region87: #{custom-call.2} parent=80 // loop_footer_branch
                %378 = sbr.rel target = $region83
              $region88: #{custom-call.2} parent=80 // loop_exit
                _
            $region81: #{custom-call.2} parent=65 // pred_fallthru
              _
          $region66: #{custom-call.2} parent=61 // pred_fallthru
            _
          // Predicated region
          $region67: #{custom-call.2} parent=61 // pred_check
            _
          $region68: #{custom-call.2} parent=61 // pred_check_branch
            %363 = sbr.rel (0) target = $region70
          $region69: #{custom-call.2} parent=61 // pred_region
            loop: start=0, step=1, limit=1
            $region71: #{custom-call.2} parent=69 // loop_pre_header
              _
            $region72: #{custom-call.2} parent=69 // loop_header
              %s366 = sphi 0, %s370
              %p367 = scmp.ge.s32.totalorder %s366, 1
              %s371 = sphi %s346, %s346
              %s372 = sphi %s357, %s357
            $region73: #{custom-call.2} parent=69 // loop_header_branch
              %369 = sbr.rel (%p367) target = $region77
            $region74: #{custom-call.2} parent=69 // loop_body
              %v373 = vld [vmem:[%s371] sm:$0xf]
              %374 = vst [vmem:[%s372] sm:$0xf] %v373
            $region75: #{custom-call.2} parent=69 // loop_footer
              %s370 = sadd.s32 1, %s366
            $region76: #{custom-call.2} parent=69 // loop_footer_branch
              %365 = sbr.rel target = $region72
            $region77: #{custom-call.2} parent=69 // loop_exit
              _
          $region70: #{custom-call.2} parent=61 // pred_fallthru
            _
        $region62: #{custom-call.2} parent=49 // pred_fallthru
          _
        %388 = vnop
        // Predicated region
        $region89: #{custom-call.2} parent=49 // pred_check
          %p389 = pneg %p34
        $region90: #{custom-call.2} parent=49 // pred_check_branch
          %391 = sbr.rel (%p389) target = $region92
        $region91: #{custom-call.2} parent=49 // pred_region
          %s392 = sshrl.u32 %s14, 3
          %s393 = smul.addr %s392, 2
          %s394 = scalar_lea.vmem %s2, %s393
          // Predicated region
          $region93: #{custom-call.2} parent=91 // pred_check
            _
          $region94: #{custom-call.2} parent=91 // pred_check_branch
            %396 = sbr.rel (0) target = $region96
          $region95: #{custom-call.2} parent=91 // pred_region
            // Predicated region
            $region97: #{custom-call.2} parent=95 // pred_check
              _
            $region98: #{custom-call.2} parent=95 // pred_check_branch
              %398 = sbr.rel target = $region100
            $region99: #{custom-call.2} parent=95 // pred_region
              // Predicated region
              $region112: #{custom-call.2} parent=99 // pred_check
                _
              $region113: #{custom-call.2} parent=99 // pred_check_branch
                %413 = sbr.rel (0) target = $region115
              $region114: #{custom-call.2} parent=99 // pred_region
                loop: start=0, step=1, limit=1
                $region116: #{custom-call.2} parent=114 // loop_pre_header
                  _
                $region117: #{custom-call.2} parent=114 // loop_header
                  %s416 = sphi 0, %s420
                  %p417 = scmp.ge.s32.totalorder %s416, 1
                  %s421 = sphi %s350, %s350
                  %s422 = sphi %s394, %s394
                $region118: #{custom-call.2} parent=114 // loop_header_branch
                  %419 = sbr.rel (%p417) target = $region122
                $region119: #{custom-call.2} parent=114 // loop_body
                  %v423 = vld [vmem:[%s421] sm:$0x3]
                  %424 = vst [vmem:[%s422] sm:$0x3] %v423
                $region120: #{custom-call.2} parent=114 // loop_footer
                  %s420 = sadd.s32 1, %s416
                $region121: #{custom-call.2} parent=114 // loop_footer_branch
                  %415 = sbr.rel target = $region117
                $region122: #{custom-call.2} parent=114 // loop_exit
                  _
              $region115: #{custom-call.2} parent=99 // pred_fallthru
                _
            $region100: #{custom-call.2} parent=95 // pred_fallthru
              _
            // Predicated region
            $region101: #{custom-call.2} parent=95 // pred_check
              _
            $region102: #{custom-call.2} parent=95 // pred_check_branch
              %400 = sbr.rel (0) target = $region104
            $region103: #{custom-call.2} parent=95 // pred_region
              loop: start=0, step=1, limit=1
              $region105: #{custom-call.2} parent=103 // loop_pre_header
                _
              $region106: #{custom-call.2} parent=103 // loop_header
                %s403 = sphi 0, %s407
                %p404 = scmp.ge.s32.totalorder %s403, 1
                %s408 = sphi %s350, %s350
                %s409 = sphi %s394, %s394
              $region107: #{custom-call.2} parent=103 // loop_header_branch
                %406 = sbr.rel (%p404) target = $region111
              $region108: #{custom-call.2} parent=103 // loop_body
                %v410 = vld [vmem:[%s408] sm:$0x3]
                %411 = vst [vmem:[%s409] sm:$0x3] %v410
              $region109: #{custom-call.2} parent=103 // loop_footer
                %s407 = sadd.s32 1, %s403
              $region110: #{custom-call.2} parent=103 // loop_footer_branch
                %402 = sbr.rel target = $region106
              $region111: #{custom-call.2} parent=103 // loop_exit
                _
            $region104: #{custom-call.2} parent=95 // pred_fallthru
              _
          $region96: #{custom-call.2} parent=91 // pred_fallthru
            _
          %425 = vnop
        $region92: #{custom-call.2} parent=49 // pred_fallthru
          _
        // Predicated region
        $region123: #{custom-call.2} parent=49 // pred_check
          %p426 = pneg %p62
        $region124: #{custom-call.2} parent=49 // pred_check_branch
          %428 = sbr.rel (%p426) target = $region126
        $region125: #{custom-call.2} parent=49 // pred_region
          %s429 = sshrl.u32 %s14, 3
          %s431 = ssub.s32 32, 32
          %432 = vsyncadd %s352, %s431
          %s433 = smul.addr %s429, 32
          %s434 = scalar_lea.hbm %s3, %s433
          %s436 = sshll.u32 %s355, 4
          %s437 = int_to_ptr.vmem [resolvable:$true] %s436
          %439 = dma.vmem_to_hbm [thread:$0]  %s437, 32, %s434, %s352
        $region126: #{custom-call.2} parent=49 // pred_fallthru
          _
      $region50: #{custom-call.2} parent=5 // pred_fallthru
        _
      %p440 = scmp.le.s32.totalorder 2, %s9
      // Predicated region
      $region127: #{custom-call.2} parent=5 // pred_check
        %p441 = pneg %p440
      $region128: #{custom-call.2} parent=5 // pred_check_branch
        %443 = sbr.rel (%p441) target = $region130
      $region129: #{custom-call.2} parent=5 // pred_region
        %s444 = ssub.s32 %s9, 2
        %s445 = sand.u32 %s15, 1
        %s446 = sand.u32 %s15, 1
        %s447 = smul.addr %s446, 4
        %s448 = scalar_lea.vmem [#allocation3], %s447
        // Predicated region
        $region131: #{custom-call.2} parent=129 // pred_check
          %p449 = pneg %p40
        $region132: #{custom-call.2} parent=129 // pred_check_branch
          %451 = sbr.rel (%p449) target = $region134
        $region133: #{custom-call.2} parent=129 // pred_region
          %s452 = sand.u32 %s25, 1
          %s453 = sand.u32 %s25, 1
          %s454 = smul.addr %s453, 2
          %s455 = scalar_lea.vmem [#allocation5], %s454
        $region134: #{custom-call.2} parent=129 // pred_fallthru
          _
        // Predicated region
        $region135: #{custom-call.2} parent=129 // pred_check
          %p456 = pneg %p68
        $region136: #{custom-call.2} parent=129 // pred_check_branch
          %458 = sbr.rel (%p456) target = $region138
        $region137: #{custom-call.2} parent=129 // pred_region
          %s459 = sand.u32 %s53, 1
          %s460 = scalar_lea.sflag [#allocation8], %s459
          %s461 = sand.u32 %s53, 1
          %s462 = smul.addr %s461, 2
          %s463 = scalar_lea.vmem [#allocation7], %s462
          %464 = dma.done %s460, 32
        $region138: #{custom-call.2} parent=129 // pred_fallthru
          _
      $region130: #{custom-call.2} parent=5 // pred_fallthru
        _
    $region6: #{custom-call.2} parent=1 // loop_footer
      %s13 = sadd.s32 1, %s9
    $region7: #{custom-call.2} parent=1 // loop_footer_branch
      %8 = sbr.rel target = $region3
    $region8: #{custom-call.2} parent=1 // loop_exit
      _
    %465 = vsyncpa [#allocation8], 1
    %s466 = scalar_lea.sflag [#allocation8], 1
    %467 = vsyncpa %s466, 1

// kernel: decoder_forward.1
$region0: #{decoder_forward.1}
  #allocation0 [shape = 'u32[]', space=smem, size = 0x4, offset = 0x4, fixed_abs, tag = 'smem constant byte address 0x4 - core index']
  #allocation1 [shape = 'u32[144,128]{1,0:T(1,128)}', space=vmem, size = 0x12000, scoped, tag = 'internal scratch']
  %s0 = inlined_call_operand.vmem [shape: f32[8,16], index: 0, kind: input, shape index: {}]
  %s1 = inlined_call_operand.vmem [shape: f32[1,16], index: 1, kind: input, shape index: {}]
  %s2 = inlined_call_operand.vmem [shape: f32[2,8,1], index: 2, kind: input, shape index: {}]
  %s3 = inlined_call_operand.vmem [shape: f32[2,8,1], index: 3, kind: input, shape index: {}]
  %s4 = inlined_call_operand.vmem [shape: f32[2,8,8], index: 4, kind: input, shape index: {}]
  %s5 = inlined_call_operand.vmem [shape: f32[2,16,4], index: 5, kind: input, shape index: {}]
  %s6 = inlined_call_operand.vmem [shape: f32[2,16,1], index: 6, kind: input, shape index: {}]
  %s7 = inlined_call_operand.vmem [shape: f32[4,32,48], index: 7, kind: input, shape index: {}]
  %s8 = inlined_call_operand.vmem [shape: f32[4,32,1], index: 8, kind: input, shape index: {}]
  %s9 = inlined_call_operand.vmem [shape: f32[4,32,16], index: 9, kind: input, shape index: {}]
  %s10 = inlined_call_operand.vmem [shape: f32[4,32,1], index: 10, kind: input, shape index: {}]
  %s11 = inlined_call_operand.vmem [shape: f32[2,8,16], index: 11, kind: input, shape index: {}]
  %s12 = inlined_call_operand.vmem [shape: f32[2,8,1], index: 12, kind: input, shape index: {}]
  %s13 = inlined_call_operand.vmem [shape: f32[8,16], index: 13, kind: output, shape index: {0}]
  %s14 = inlined_call_operand.vmem [shape: f32[2,1,16], index: 14, kind: output, shape index: {1}]
  %15 = xla_tuple %s13, %s14
  %s16 = sld [smem:[#allocation0]]
  $region70: #{decoder_forward.1} parent=0
    _
  %s18 = ssub.s32 1, %s16
  %s19 = scalar_select 0, %s18, %s16
  // Predicated region
  $region2: #{decoder_forward.1} parent=0 // pred_check
    _
  $region3: #{decoder_forward.1} parent=0 // pred_check_branch
    %21 = sbr.rel (0) target = $region5
  $region4: #{decoder_forward.1} parent=0 // pred_region
    _
  $region5: #{decoder_forward.1} parent=0 // pred_fallthru
    _
  // Predicated region
  $region6: #{decoder_forward.1} parent=0 // pred_check
    _
  $region7: #{decoder_forward.1} parent=0 // pred_check_branch
    %23 = sbr.rel (0) target = $region9
  $region8: #{decoder_forward.1} parent=0 // pred_region
    _
  $region9: #{decoder_forward.1} parent=0 // pred_fallthru
    _
  // Predicated region
  $region10: #{decoder_forward.1} parent=0 // pred_check
    _
  $region11: #{decoder_forward.1} parent=0 // pred_check_branch
    %25 = sbr.rel (0) target = $region13
  $region12: #{decoder_forward.1} parent=0 // pred_region
    _
  $region13: #{decoder_forward.1} parent=0 // pred_fallthru
    _
  // Predicated region
  $region14: #{decoder_forward.1} parent=0 // pred_check
    _
  $region15: #{decoder_forward.1} parent=0 // pred_check_branch
    %27 = sbr.rel (0) target = $region17
  $region16: #{decoder_forward.1} parent=0 // pred_region
    _
  $region17: #{decoder_forward.1} parent=0 // pred_fallthru
    _
  // Predicated region
  $region18: #{decoder_forward.1} parent=0 // pred_check
    _
  $region19: #{decoder_forward.1} parent=0 // pred_check_branch
    %29 = sbr.rel (0) target = $region21
  $region20: #{decoder_forward.1} parent=0 // pred_region
    _
  $region21: #{decoder_forward.1} parent=0 // pred_fallthru
    _
  // Predicated region
  $region22: #{decoder_forward.1} parent=0 // pred_check
    _
  $region23: #{decoder_forward.1} parent=0 // pred_check_branch
    %31 = sbr.rel (0) target = $region25
  $region24: #{decoder_forward.1} parent=0 // pred_region
    _
  $region25: #{decoder_forward.1} parent=0 // pred_fallthru
    _
  // Predicated region
  $region26: #{decoder_forward.1} parent=0 // pred_check
    _
  $region27: #{decoder_forward.1} parent=0 // pred_check_branch
    %33 = sbr.rel (0) target = $region29
  $region28: #{decoder_forward.1} parent=0 // pred_region
    _
  $region29: #{decoder_forward.1} parent=0 // pred_fallthru
    _
  // Predicated region
  $region30: #{decoder_forward.1} parent=0 // pred_check
    _
  $region31: #{decoder_forward.1} parent=0 // pred_check_branch
    %35 = sbr.rel (0) target = $region33
  $region32: #{decoder_forward.1} parent=0 // pred_region
    _
  $region33: #{decoder_forward.1} parent=0 // pred_fallthru
    _
  // Predicated region
  $region34: #{decoder_forward.1} parent=0 // pred_check
    _
  $region35: #{decoder_forward.1} parent=0 // pred_check_branch
    %37 = sbr.rel (0) target = $region37
  $region36: #{decoder_forward.1} parent=0 // pred_region
    _
  $region37: #{decoder_forward.1} parent=0 // pred_fallthru
    _
  // Predicated region
  $region38: #{decoder_forward.1} parent=0 // pred_check
    _
  $region39: #{decoder_forward.1} parent=0 // pred_check_branch
    %39 = sbr.rel (0) target = $region41
  $region40: #{decoder_forward.1} parent=0 // pred_region
    _
  $region41: #{decoder_forward.1} parent=0 // pred_fallthru
    _
  // Predicated region
  $region42: #{decoder_forward.1} parent=0 // pred_check
    _
  $region43: #{decoder_forward.1} parent=0 // pred_check_branch
    %41 = sbr.rel (0) target = $region45
  $region44: #{decoder_forward.1} parent=0 // pred_region
    _
  $region45: #{decoder_forward.1} parent=0 // pred_fallthru
    _
  // Predicated region
  $region46: #{decoder_forward.1} parent=0 // pred_check
    _
  $region47: #{decoder_forward.1} parent=0 // pred_check_branch
    %43 = sbr.rel (0) target = $region49
  $region48: #{decoder_forward.1} parent=0 // pred_region
    _
  $region49: #{decoder_forward.1} parent=0 // pred_fallthru
    _
  // Predicated region
  $region50: #{decoder_forward.1} parent=0 // pred_check
    _
  $region51: #{decoder_forward.1} parent=0 // pred_check_branch
    %45 = sbr.rel (0) target = $region53
  $region52: #{decoder_forward.1} parent=0 // pred_region
    _
  $region53: #{decoder_forward.1} parent=0 // pred_fallthru
    _
  %v46 = vld [vmem:[%s0] sm:$0xff]
  %v47 = vld [vmem:[%s1] sm:$0x1]
  %v48 = vlaneseq
  %v49 = vand.u32 %v48, 127
  %vm50 = vcmp.lt.s32.totalorder %v49, 0
  %v51 = vsub.s32 0, %v49
  %v52 = vsel %vm50, %v51, %v49
  %v53 = vshrl.u32 %v52, 3
  %v54 = vand.u32 %v52, 7
  %v55 = vsub.s32 0, %v54
  %v56 = vsel %vm50, %v55, %v54
  %vm57 = vcmp.ne.s32.totalorder %v56, 0
  %vm58 = vcmp.lt.s32.totalorder %v56, 0
  %vm59 = vmand %vm58, %vm57
  %v60 = vadd.s32 %v56, 8
  %v61 = vsel %vm59, %v60, %v56
  %v62 = vadd.s32 %v61, 4294967295
  %vm63 = vcmp.ge.s32.totalorder %v62, 0
  %vm64 = vcmp.lt.s32.totalorder %v62, 8
  %vm65 = vmand %vm63, %vm64
  %v66 = vsel %vm65, 1, 0
  %v67 = vcvt.s32.f32 %v66
  %v68 = vadd.s32 %v61, 1
  %vm69 = vcmp.ge.s32.totalorder %v68, 0
  %vm70 = vcmp.lt.s32.totalorder %v68, 8
  %vm71 = vmand %vm69, %vm70
  %v72 = vsel %vm71, 1, 0
  %v73 = vcvt.s32.f32 %v72
  %v74 = vadd.s32 %v61, 4294967294
  %vm75 = vcmp.ge.s32.totalorder %v74, 0
  %vm76 = vcmp.lt.s32.totalorder %v74, 8
  %vm77 = vmand %vm75, %vm76
  %v78 = vsel %vm77, 1, 0
  %v79 = vcvt.s32.f32 %v78
  %v80 = vadd.s32 %v61, 2
  %vm81 = vcmp.ge.s32.totalorder %v80, 0
  %vm82 = vcmp.lt.s32.totalorder %v80, 8
  %vm83 = vmand %vm81, %vm82
  %v84 = vsel %vm83, 1, 0
  %v85 = vcvt.s32.f32 %v84
  %v86 = vld [vmem:[%s3] sm:$0xff]
  %v87 = vld [vmem:[%s2] sm:$0xff]
  %v88 = vmul.f32 %v87, 1.442695
  %v89 = vpow.pop %v88
  %91 = vset.pattern.permute.xlu0 0
  %92 = vperm.xlu0 %91, %v89
  %v93 = vpop.permute.xlu0 %92
  %v95 = vmul.f32 %v93, %v46
  %97 = vset.pattern.permute.xlu0 0
  %98 = vperm.xlu0 %97, %v86
  %v99 = vpop.permute.xlu0 %98
  %v101 = vadd.f32 %v99, %v95
  %v103 = vlaneseq
  %v104 = vshrl.u32 %v103, 7
  %v105 = vsub.s32 0, %v104
  %v106 = vrot.slane %v47, %v105
  %v108 = vmul.f32 %v101, %v106
  %v109 = vld [vmem:[%s4] sm:$0xff]
  %vm110 = vcmask 64512
  %v112 = vsel %vm110, %v109, 0
  %114 = vmatprep.subr.mxu0 0.0
  %115 = vmatpush1.msra.mxu0 %v108
  %116 = vmatprep.subr.mxu0 0.0
  %117 = vmatpush1.msra.mxu0 0.0
  %118 = vmatprep.subr.mxu0 0.0
  %119 = vmatpush1.msra.mxu0 0.0
  %120 = vmatprep.subr.mxu0 0.0
  %121 = vmatpush1.msra.mxu0 0.0
  %122 = vmatprep.subr.mxu0 0.0
  %123 = vmatpush1.msra.mxu0 0.0
  %124 = vmatprep.subr.mxu0 0.0
  %125 = vmatpush1.msra.mxu0 0.0
  %126 = vmatprep.subr.mxu0 0.0
  %127 = vmatpush1.msra.mxu0 0.0
  %128 = vmatprep.subr.mxu0 0.0
  %129 = vmatpush1.msra.mxu0 0.0
  %130 = vmatprep.subr.mxu0 0.0
  %131 = vmatpush1.msra.mxu0 0.0
  %132 = vmatprep.subr.mxu0 0.0
  %133 = vmatpush1.msra.mxu0 0.0
  %134 = vmatprep.subr.mxu0 0.0
  %135 = vmatpush1.msra.mxu0 0.0
  %136 = vmatprep.subr.mxu0 0.0
  %137 = vmatpush1.msra.mxu0 0.0
  %138 = vmatprep.subr.mxu0 0.0
  %139 = vmatpush1.msra.mxu0 0.0
  %140 = vmatprep.subr.mxu0 0.0
  %141 = vmatpush1.msra.mxu0 0.0
  %142 = vmatprep.subr.mxu0 0.0
  %143 = vmatpush1.msra.mxu0 0.0
  %144 = vmatprep.subr.mxu0 0.0
  %145 = vmatpush1.msra.mxu0 0.0
  %146 = vmatprep.subr.mxu0 0.0
  %147 = vmatpush1.msra.mxu0 0.0
  %148 = vmatprep.subr.mxu0 0.0
  %149 = vmatpush1.msra.mxu0 0.0
  %150 = vmatprep.subr.mxu0 0.0
  %151 = vmatpush1.msra.mxu0 0.0
  %152 = vmatprep.subr.mxu0 0.0
  %153 = vmatpush1.msra.mxu0 0.0
  %154 = vmatprep.subr.mxu0 0.0
  %155 = vmatpush1.msra.mxu0 0.0
  %156 = vmatprep.subr.mxu0 0.0
  %157 = vmatpush1.msra.mxu0 0.0
  %158 = vmatprep.subr.mxu0 0.0
  %159 = vmatpush1.msra.mxu0 0.0
  %160 = vmatprep.subr.mxu0 0.0
  %161 = vmatpush1.msra.mxu0 0.0
  %162 = vmatprep.subr.mxu0 0.0
  %163 = vmatpush1.msra.mxu0 0.0
  %164 = vmatprep.subr.mxu0 0.0
  %165 = vmatpush1.msra.mxu0 0.0
  %166 = vmatprep.subr.mxu0 0.0
  %167 = vmatpush1.msra.mxu0 0.0
  %168 = vmatprep.subr.mxu0 0.0
  %169 = vmatpush1.msra.mxu0 0.0
  %170 = vmatprep.subr.mxu0 0.0
  %171 = vmatpush1.msra.mxu0 0.0
  %172 = vmatprep.subr.mxu0 0.0
  %173 = vmatpush1.msra.mxu0 0.0
  %174 = vmatprep.subr.mxu0 0.0
  %175 = vmatpush1.msra.mxu0 0.0
  %176 = vmatprep.subr.mxu0 0.0
  %177 = vmatpush1.msra.mxu0 0.0
  %178 = vmatprep.mubr.f32.mxu0 0.0
  %179 = vmatmul.mubr.f32.gmra.mrb[0].mxu0 %v112
  %v180 = vpop.f32.mrb[0].mxu0
  %v181 = vadd.f32 0.0, %v180
  %v182 = vpop.f32.mrb[0].mxu0
  %183 = vdwg.mxu0
  %v184 = vmul.f32 %v181, %v106
  %v185 = vld [vmem:[%s5] sm:$0xff]
  %v186 = vld [vmem:[%s5 + $0x8] sm:$0xff]
  %v187 = vld [vmem:[%s6] sm:$0xff]
  %v188 = vld [vmem:[%s6 + $0x8] sm:$0xff]
  %190 = vset.pattern.permute.xlu0 0
  %191 = vperm.xlu0 %190, %v187
  %v192 = vpop.permute.xlu0 %191
  %195 = vset.pattern.permute.xlu0 0
  %196 = vperm.xlu0 %195, %v188
  %v197 = vpop.permute.xlu0 %196
  %vm199 = vcmask 31744
  %v201 = vsel %vm199, %v185, 0
  %v204 = vsel %vm199, %v186, 0
  %vm206 = vcmask 1043456
  %v208 = vsel %vm206, %v184, 0
  %210 = vmatprep.subr.mxu0 0.0
  %211 = vmatpush1.msra.mxu0 %v208
  %212 = vmatprep.subr.mxu0 0.0
  %213 = vmatpush1.msra.mxu0 0.0
  %214 = vmatprep.subr.mxu0 0.0
  %215 = vmatpush1.msra.mxu0 0.0
  %216 = vmatprep.subr.mxu0 0.0
  %217 = vmatpush1.msra.mxu0 0.0
  %218 = vmatprep.subr.mxu0 0.0
  %219 = vmatpush1.msra.mxu0 0.0
  %220 = vmatprep.subr.mxu0 0.0
  %221 = vmatpush1.msra.mxu0 0.0
  %222 = vmatprep.subr.mxu0 0.0
  %223 = vmatpush1.msra.mxu0 0.0
  %224 = vmatprep.subr.mxu0 0.0
  %225 = vmatpush1.msra.mxu0 0.0
  %226 = vmatprep.subr.mxu0 0.0
  %227 = vmatpush1.msra.mxu0 0.0
  %228 = vmatprep.subr.mxu0 0.0
  %229 = vmatpush1.msra.mxu0 0.0
  %230 = vmatprep.subr.mxu0 0.0
  %231 = vmatpush1.msra.mxu0 0.0
  %232 = vmatprep.subr.mxu0 0.0
  %233 = vmatpush1.msra.mxu0 0.0
  %234 = vmatprep.subr.mxu0 0.0
  %235 = vmatpush1.msra.mxu0 0.0
  %236 = vmatprep.subr.mxu0 0.0
  %237 = vmatpush1.msra.mxu0 0.0
  %238 = vmatprep.subr.mxu0 0.0
  %239 = vmatpush1.msra.mxu0 0.0
  %240 = vmatprep.subr.mxu0 0.0
  %241 = vmatpush1.msra.mxu0 0.0
  %242 = vmatprep.subr.mxu0 0.0
  %243 = vmatpush1.msra.mxu0 0.0
  %244 = vmatprep.subr.mxu0 0.0
  %245 = vmatpush1.msra.mxu0 0.0
  %246 = vmatprep.subr.mxu0 0.0
  %247 = vmatpush1.msra.mxu0 0.0
  %248 = vmatprep.subr.mxu0 0.0
  %249 = vmatpush1.msra.mxu0 0.0
  %250 = vmatprep.subr.mxu0 0.0
  %251 = vmatpush1.msra.mxu0 0.0
  %252 = vmatprep.subr.mxu0 0.0
  %253 = vmatpush1.msra.mxu0 0.0
  %254 = vmatprep.subr.mxu0 0.0
  %255 = vmatpush1.msra.mxu0 0.0
  %256 = vmatprep.subr.mxu0 0.0
  %257 = vmatpush1.msra.mxu0 0.0
  %258 = vmatprep.subr.mxu0 0.0
  %259 = vmatpush1.msra.mxu0 0.0
  %260 = vmatprep.subr.mxu0 0.0
  %261 = vmatpush1.msra.mxu0 0.0
  %262 = vmatprep.subr.mxu0 0.0
  %263 = vmatpush1.msra.mxu0 0.0
  %264 = vmatprep.subr.mxu0 0.0
  %265 = vmatpush1.msra.mxu0 0.0
  %266 = vmatprep.subr.mxu0 0.0
  %267 = vmatpush1.msra.mxu0 0.0
  %268 = vmatprep.subr.mxu0 0.0
  %269 = vmatpush1.msra.mxu0 0.0
  %270 = vmatprep.subr.mxu0 0.0
  %271 = vmatpush1.msra.mxu0 0.0
  %272 = vmatprep.subr.mxu0 0.0
  %273 = vmatpush1.msra.mxu0 0.0
  %274 = vmatprep.mubr.f32.mxu0 0.0
  %275 = vmatmul.mubr.f32.gmra.mrb[0].mxu0 %v201
  %v276 = vpop.f32.mrb[0].mxu0
  %v277 = vadd.f32 %v192, %v276
  %v278 = vpop.f32.mrb[0].mxu0
  %279 = vmatprep.mubr.f32.mxu0 0.0
  %280 = vmatmul.mubr.f32.gmra.mrb[0].mxu0 %v204
  %v281 = vpop.f32.mrb[0].mxu0
  %v282 = vadd.f32 %v197, %v281
  %v283 = vpop.f32.mrb[0].mxu0
  %284 = vdwg.mxu0
  %v285 = vmul.f32 %v277, %v106
  %v286 = vmul.f32 %v282, %v106
  %289 = vrot.lane.b32.xlu0 %v285, 113
  %v290 = vpop.permute.xlu0 %289
  %291 = vrot.lane.b32.xlu0 %v286, 113
  %v292 = vpop.permute.xlu0 %291
  %295 = vrot.lane.b32.xlu0 %v285, 1
  %v296 = vpop.permute.xlu0 %295
  %297 = vrot.lane.b32.xlu0 %v286, 1
  %v298 = vpop.permute.xlu0 %297
  %vm301 = vcmask 7168
  %v302 = vsel %vm301, %v290, %v296
  %v303 = vsel %vm301, %v292, %v298
  %v304 = vmul.f32 %v302, %v67
  %v305 = vmul.f32 %v303, %v67
  %306 = vrot.lane.b32.xlu0 %v285, 127
  %v307 = vpop.permute.xlu0 %306
  %308 = vrot.lane.b32.xlu0 %v286, 127
  %v309 = vpop.permute.xlu0 %308
  %312 = vrot.lane.b32.xlu0 %v285, 15
  %v313 = vpop.permute.xlu0 %312
  %314 = vrot.lane.b32.xlu0 %v286, 15
  %v315 = vpop.permute.xlu0 %314
  %vm318 = vcmask 121856
  %v319 = vsel %vm318, %v307, %v313
  %v320 = vsel %vm318, %v309, %v315
  %v321 = vmul.f32 %v319, %v73
  %v322 = vmul.f32 %v320, %v73
  %v323 = vld [vmem:[%s7] sm:$0xff]
  %v324 = vld [vmem:[%s7 + $0x8] sm:$0xff]
  %v325 = vld [vmem:[%s7 + $0x10] sm:$0xff]
  %v326 = vld [vmem:[%s7 + $0x18] sm:$0xff]
  %v327 = vld [vmem:[%s8] sm:$0xff]
  %v328 = vld [vmem:[%s8 + $0x8] sm:$0xff]
  %v329 = vld [vmem:[%s8 + $0x10] sm:$0xff]
  %v330 = vld [vmem:[%s8 + $0x18] sm:$0xff]
  %332 = vset.pattern.permute.xlu0 0
  %333 = vperm.xlu0 %332, %v327
  %v334 = vpop.permute.xlu0 %333
  %337 = vset.pattern.permute.xlu0 0
  %338 = vperm.xlu0 %337, %v328
  %v339 = vpop.permute.xlu0 %338
  %342 = vset.pattern.permute.xlu0 0
  %343 = vperm.xlu0 %342, %v329
  %v344 = vpop.permute.xlu0 %343
  %347 = vset.pattern.permute.xlu0 0
  %348 = vperm.xlu0 %347, %v330
  %v349 = vpop.permute.xlu0 %348
  %vm351 = vcmask 392192
  %v353 = vsel %vm351, %v323, 0
  %v356 = vsel %vm351, %v324, 0
  %v359 = vsel %vm351, %v325, 0
  %v362 = vsel %vm351, %v326, 0
  %364 = vmatprep.subr.mxu0 0.0
  %365 = vmatpush1.msra.mxu0 %v304
  %366 = vmatprep.subr.mxu0 0.0
  %367 = vmatpush1.msra.mxu0 %v305
  %368 = vmatprep.subr.mxu0 0.0
  %369 = vmatpush1.msra.mxu0 %v285
  %370 = vmatprep.subr.mxu0 0.0
  %371 = vmatpush1.msra.mxu0 %v286
  %372 = vmatprep.subr.mxu0 0.0
  %373 = vmatpush1.msra.mxu0 %v321
  %374 = vmatprep.subr.mxu0 0.0
  %375 = vmatpush1.msra.mxu0 %v322
  %376 = vmatprep.subr.mxu0 0.0
  %377 = vmatpush1.msra.mxu0 0.0
  %378 = vmatprep.subr.mxu0 0.0
  %379 = vmatpush1.msra.mxu0 0.0
  %380 = vmatprep.subr.mxu0 0.0
  %381 = vmatpush1.msra.mxu0 0.0
  %382 = vmatprep.subr.mxu0 0.0
  %383 = vmatpush1.msra.mxu0 0.0
  %384 = vmatprep.subr.mxu0 0.0
  %385 = vmatpush1.msra.mxu0 0.0
  %386 = vmatprep.subr.mxu0 0.0
  %387 = vmatpush1.msra.mxu0 0.0
  %388 = vmatprep.subr.mxu0 0.0
  %389 = vmatpush1.msra.mxu0 0.0
  %390 = vmatprep.subr.mxu0 0.0
  %391 = vmatpush1.msra.mxu0 0.0
  %392 = vmatprep.subr.mxu0 0.0
  %393 = vmatpush1.msra.mxu0 0.0
  %394 = vmatprep.subr.mxu0 0.0
  %395 = vmatpush1.msra.mxu0 0.0
  %396 = vmatprep.subr.mxu0 0.0
  %397 = vmatpush1.msra.mxu0 0.0
  %398 = vmatprep.subr.mxu0 0.0
  %399 = vmatpush1.msra.mxu0 0.0
  %400 = vmatprep.subr.mxu0 0.0
  %401 = vmatpush1.msra.mxu0 0.0
  %402 = vmatprep.subr.mxu0 0.0
  %403 = vmatpush1.msra.mxu0 0.0
  %404 = vmatprep.subr.mxu0 0.0
  %405 = vmatpush1.msra.mxu0 0.0
  %406 = vmatprep.subr.mxu0 0.0
  %407 = vmatpush1.msra.mxu0 0.0
  %408 = vmatprep.subr.mxu0 0.0
  %409 = vmatpush1.msra.mxu0 0.0
  %410 = vmatprep.subr.mxu0 0.0
  %411 = vmatpush1.msra.mxu0 0.0
  %412 = vmatprep.subr.mxu0 0.0
  %413 = vmatpush1.msra.mxu0 0.0
  %414 = vmatprep.subr.mxu0 0.0
  %415 = vmatpush1.msra.mxu0 0.0
  %416 = vmatprep.subr.mxu0 0.0
  %417 = vmatpush1.msra.mxu0 0.0
  %418 = vmatprep.subr.mxu0 0.0
  %419 = vmatpush1.msra.mxu0 0.0
  %420 = vmatprep.subr.mxu0 0.0
  %421 = vmatpush1.msra.mxu0 0.0
  %422 = vmatprep.subr.mxu0 0.0
  %423 = vmatpush1.msra.mxu0 0.0
  %424 = vmatprep.subr.mxu0 0.0
  %425 = vmatpush1.msra.mxu0 0.0
  %426 = vmatprep.subr.mxu0 0.0
  %427 = vmatpush1.msra.mxu0 0.0
  %428 = vmatprep.mubr.f32.mxu0 0.0
  %429 = vmatmul.mubr.f32.gmra.mrb[0].mxu0 %v353
  %v430 = vpop.f32.mrb[0].mxu0
  %v431 = vadd.f32 %v334, %v430
  %v432 = vpop.f32.mrb[0].mxu0
  %433 = vmatprep.mubr.f32.mxu0 0.0
  %434 = vmatmul.mubr.f32.gmra.mrb[0].mxu0 %v356
  %v435 = vpop.f32.mrb[0].mxu0
  %v436 = vadd.f32 %v339, %v435
  %v437 = vpop.f32.mrb[0].mxu0
  %438 = vmatprep.mubr.f32.mxu0 0.0
  %439 = vmatmul.mubr.f32.gmra.mrb[0].mxu0 %v359
  %v440 = vpop.f32.mrb[0].mxu0
  %v441 = vadd.f32 %v344, %v440
  %v442 = vpop.f32.mrb[0].mxu0
  %443 = vmatprep.mubr.f32.mxu0 0.0
  %444 = vmatmul.mubr.f32.gmra.mrb[0].mxu0 %v362
  %v445 = vpop.f32.mrb[0].mxu0
  %v446 = vadd.f32 %v349, %v445
  %v447 = vpop.f32.mrb[0].mxu0
  %448 = vdwg.mxu0
  %v449 = vtanh.pop %v431
  %v450 = vtanh.pop %v436
  %v451 = vxor.u32 %v441, 2147483648
  %v452 = vxor.u32 %v446, 2147483648
  %v453 = vmul.f32 %v451, 1.442695
  %v454 = vpow.pop %v453
  %v455 = vmul.f32 %v452, 1.442695
  %v456 = vpow.pop %v455
  %v457 = vadd.f32 %v454, 1.0
  %v458 = vadd.f32 %v456, 1.0
  %v459 = vrcp.pop %v457
  %v460 = vmul.f32 1.0, %v459
  %v461 = vrcp.pop %v458
  %v462 = vmul.f32 1.0, %v461
  %v463 = vmul.f32 %v449, %v460
  %v464 = vmul.f32 %v450, %v462
  %v465 = vld [vmem:[%s9] sm:$0xff]
  %v466 = vld [vmem:[%s9 + $0x8] sm:$0xff]
  %v467 = vld [vmem:[%s9 + $0x10] sm:$0xff]
  %v468 = vld [vmem:[%s9 + $0x18] sm:$0xff]
  %v469 = vld [vmem:[%s10] sm:$0xff]
  %v470 = vld [vmem:[%s10 + $0x8] sm:$0xff]
  %v471 = vld [vmem:[%s10 + $0x10] sm:$0xff]
  %v472 = vld [vmem:[%s10 + $0x18] sm:$0xff]
  %474 = vset.pattern.permute.xlu0 0
  %475 = vperm.xlu0 %474, %v469
  %v476 = vpop.permute.xlu0 %475
  %479 = vset.pattern.permute.xlu0 0
  %480 = vperm.xlu0 %479, %v470
  %v481 = vpop.permute.xlu0 %480
  %484 = vset.pattern.permute.xlu0 0
  %485 = vperm.xlu0 %484, %v471
  %v486 = vpop.permute.xlu0 %485
  %489 = vset.pattern.permute.xlu0 0
  %490 = vperm.xlu0 %489, %v472
  %v491 = vpop.permute.xlu0 %490
  %vm493 = vcmask 130048
  %v495 = vsel %vm493, %v465, 0
  %v498 = vsel %vm493, %v466, 0
  %v501 = vsel %vm493, %v467, 0
  %v504 = vsel %vm493, %v468, 0
  %506 = vmatprep.subr.mxu0 0.0
  %507 = vmatpush1.msra.mxu0 %v463
  %508 = vmatprep.subr.mxu0 0.0
  %509 = vmatpush1.msra.mxu0 %v464
  %510 = vmatprep.subr.mxu0 0.0
  %511 = vmatpush1.msra.mxu0 0.0
  %512 = vmatprep.subr.mxu0 0.0
  %513 = vmatpush1.msra.mxu0 0.0
  %514 = vmatprep.subr.mxu0 0.0
  %515 = vmatpush1.msra.mxu0 0.0
  %516 = vmatprep.subr.mxu0 0.0
  %517 = vmatpush1.msra.mxu0 0.0
  %518 = vmatprep.subr.mxu0 0.0
  %519 = vmatpush1.msra.mxu0 0.0
  %520 = vmatprep.subr.mxu0 0.0
  %521 = vmatpush1.msra.mxu0 0.0
  %522 = vmatprep.subr.mxu0 0.0
  %523 = vmatpush1.msra.mxu0 0.0
  %524 = vmatprep.subr.mxu0 0.0
  %525 = vmatpush1.msra.mxu0 0.0
  %526 = vmatprep.subr.mxu0 0.0
  %527 = vmatpush1.msra.mxu0 0.0
  %528 = vmatprep.subr.mxu0 0.0
  %529 = vmatpush1.msra.mxu0 0.0
  %530 = vmatprep.subr.mxu0 0.0
  %531 = vmatpush1.msra.mxu0 0.0
  %532 = vmatprep.subr.mxu0 0.0
  %533 = vmatpush1.msra.mxu0 0.0
  %534 = vmatprep.subr.mxu0 0.0
  %535 = vmatpush1.msra.mxu0 0.0
  %536 = vmatprep.subr.mxu0 0.0
  %537 = vmatpush1.msra.mxu0 0.0
  %538 = vmatprep.subr.mxu0 0.0
  %539 = vmatpush1.msra.mxu0 0.0
  %540 = vmatprep.subr.mxu0 0.0
  %541 = vmatpush1.msra.mxu0 0.0
  %542 = vmatprep.subr.mxu0 0.0
  %543 = vmatpush1.msra.mxu0 0.0
  %544 = vmatprep.subr.mxu0 0.0
  %545 = vmatpush1.msra.mxu0 0.0
  %546 = vmatprep.subr.mxu0 0.0
  %547 = vmatpush1.msra.mxu0 0.0
  %548 = vmatprep.subr.mxu0 0.0
  %549 = vmatpush1.msra.mxu0 0.0
  %550 = vmatprep.subr.mxu0 0.0
  %551 = vmatpush1.msra.mxu0 0.0
  %552 = vmatprep.subr.mxu0 0.0
  %553 = vmatpush1.msra.mxu0 0.0
  %554 = vmatprep.subr.mxu0 0.0
  %555 = vmatpush1.msra.mxu0 0.0
  %556 = vmatprep.subr.mxu0 0.0
  %557 = vmatpush1.msra.mxu0 0.0
  %558 = vmatprep.subr.mxu0 0.0
  %559 = vmatpush1.msra.mxu0 0.0
  %560 = vmatprep.subr.mxu0 0.0
  %561 = vmatpush1.msra.mxu0 0.0
  %562 = vmatprep.subr.mxu0 0.0
  %563 = vmatpush1.msra.mxu0 0.0
  %564 = vmatprep.subr.mxu0 0.0
  %565 = vmatpush1.msra.mxu0 0.0
  %566 = vmatprep.subr.mxu0 0.0
  %567 = vmatpush1.msra.mxu0 0.0
  %568 = vmatprep.subr.mxu0 0.0
  %569 = vmatpush1.msra.mxu0 0.0
  %570 = vmatprep.mubr.f32.mxu0 0.0
  %571 = vmatmul.mubr.f32.gmra.mrb[0].mxu0 %v495
  %v572 = vpop.f32.mrb[0].mxu0
  %v573 = vadd.f32 %v476, %v572
  %v574 = vpop.f32.mrb[0].mxu0
  %575 = vmatprep.mubr.f32.mxu0 0.0
  %576 = vmatmul.mubr.f32.gmra.mrb[0].mxu0 %v498
  %v577 = vpop.f32.mrb[0].mxu0
  %v578 = vadd.f32 %v481, %v577
  %v579 = vpop.f32.mrb[0].mxu0
  %580 = vmatprep.mubr.f32.mxu0 0.0
  %581 = vmatmul.mubr.f32.gmra.mrb[0].mxu0 %v501
  %v582 = vpop.f32.mrb[0].mxu0
  %v583 = vadd.f32 %v486, %v582
  %v584 = vpop.f32.mrb[0].mxu0
  %585 = vmatprep.mubr.f32.mxu0 0.0
  %586 = vmatmul.mubr.f32.gmra.mrb[0].mxu0 %v504
  %v587 = vpop.f32.mrb[0].mxu0
  %v588 = vadd.f32 %v491, %v587
  %v589 = vpop.f32.mrb[0].mxu0
  %590 = vdwg.mxu0
  %v591 = vadd.f32 %v285, %v573
  %v592 = vadd.f32 %v286, %v578
  %v593 = vmul.f32 %v591, %v106
  %v594 = vmul.f32 %v592, %v106
  %v595 = vadd.f32 %v583, 0.0
  %v596 = vadd.f32 %v588, 0.0
  %599 = vrot.lane.b32.xlu0 %v593, 114
  %v600 = vpop.permute.xlu0 %599
  %601 = vrot.lane.b32.xlu0 %v594, 114
  %v602 = vpop.permute.xlu0 %601
  %605 = vrot.lane.b32.xlu0 %v593, 2
  %v606 = vpop.permute.xlu0 %605
  %607 = vrot.lane.b32.xlu0 %v594, 2
  %v608 = vpop.permute.xlu0 %607
  %vm611 = vcmask 15360
  %v612 = vsel %vm611, %v600, %v606
  %v613 = vsel %vm611, %v602, %v608
  %v614 = vmul.f32 %v612, %v79
  %v615 = vmul.f32 %v613, %v79
  %616 = vrot.lane.b32.xlu0 %v593, 126
  %v617 = vpop.permute.xlu0 %616
  %618 = vrot.lane.b32.xlu0 %v594, 126
  %v619 = vpop.permute.xlu0 %618
  %622 = vrot.lane.b32.xlu0 %v593, 14
  %v623 = vpop.permute.xlu0 %622
  %624 = vrot.lane.b32.xlu0 %v594, 14
  %v625 = vpop.permute.xlu0 %624
  %vm628 = vcmask 113664
  %v629 = vsel %vm628, %v617, %v623
  %v630 = vsel %vm628, %v619, %v625
  %v631 = vmul.f32 %v629, %v85
  %v632 = vmul.f32 %v630, %v85
  %s633 = scalar_lea.vmem %s7, 32
  %v634 = vld [vmem:[%s633] sm:$0xff]
  %v635 = vld [vmem:[%s633 + $0x8] sm:$0xff]
  %v636 = vld [vmem:[%s633 + $0x10] sm:$0xff]
  %v637 = vld [vmem:[%s633 + $0x18] sm:$0xff]
  %s638 = scalar_lea.vmem %s8, 32
  %v639 = vld [vmem:[%s638] sm:$0xff]
  %v640 = vld [vmem:[%s638 + $0x8] sm:$0xff]
  %v641 = vld [vmem:[%s638 + $0x10] sm:$0xff]
  %v642 = vld [vmem:[%s638 + $0x18] sm:$0xff]
  %644 = vset.pattern.permute.xlu0 0
  %645 = vperm.xlu0 %644, %v639
  %v646 = vpop.permute.xlu0 %645
  %649 = vset.pattern.permute.xlu0 0
  %650 = vperm.xlu0 %649, %v640
  %v651 = vpop.permute.xlu0 %650
  %654 = vset.pattern.permute.xlu0 0
  %655 = vperm.xlu0 %654, %v641
  %v656 = vpop.permute.xlu0 %655
  %659 = vset.pattern.permute.xlu0 0
  %660 = vperm.xlu0 %659, %v642
  %v661 = vpop.permute.xlu0 %660
  %v664 = vsel %vm351, %v634, 0
  %v667 = vsel %vm351, %v635, 0
  %v670 = vsel %vm351, %v636, 0
  %v673 = vsel %vm351, %v637, 0
  %675 = vmatprep.subr.mxu0 0.0
  %676 = vmatpush1.msra.mxu0 %v614
  %677 = vmatprep.subr.mxu0 0.0
  %678 = vmatpush1.msra.mxu0 %v615
  %679 = vmatprep.subr.mxu0 0.0
  %680 = vmatpush1.msra.mxu0 %v593
  %681 = vmatprep.subr.mxu0 0.0
  %682 = vmatpush1.msra.mxu0 %v594
  %683 = vmatprep.subr.mxu0 0.0
  %684 = vmatpush1.msra.mxu0 %v631
  %685 = vmatprep.subr.mxu0 0.0
  %686 = vmatpush1.msra.mxu0 %v632
  %687 = vmatprep.subr.mxu0 0.0
  %688 = vmatpush1.msra.mxu0 0.0
  %689 = vmatprep.subr.mxu0 0.0
  %690 = vmatpush1.msra.mxu0 0.0
  %691 = vmatprep.subr.mxu0 0.0
  %692 = vmatpush1.msra.mxu0 0.0
  %693 = vmatprep.subr.mxu0 0.0
  %694 = vmatpush1.msra.mxu0 0.0
  %695 = vmatprep.subr.mxu0 0.0
  %696 = vmatpush1.msra.mxu0 0.0
  %697 = vmatprep.subr.mxu0 0.0
  %698 = vmatpush1.msra.mxu0 0.0
  %699 = vmatprep.subr.mxu0 0.0
  %700 = vmatpush1.msra.mxu0 0.0
  %701 = vmatprep.subr.mxu0 0.0
  %702 = vmatpush1.msra.mxu0 0.0
  %703 = vmatprep.subr.mxu0 0.0
  %704 = vmatpush1.msra.mxu0 0.0
  %705 = vmatprep.subr.mxu0 0.0
  %706 = vmatpush1.msra.mxu0 0.0
  %707 = vmatprep.subr.mxu0 0.0
  %708 = vmatpush1.msra.mxu0 0.0
  %709 = vmatprep.subr.mxu0 0.0
  %710 = vmatpush1.msra.mxu0 0.0
  %711 = vmatprep.subr.mxu0 0.0
  %712 = vmatpush1.msra.mxu0 0.0
  %713 = vmatprep.subr.mxu0 0.0
  %714 = vmatpush1.msra.mxu0 0.0
  %715 = vmatprep.subr.mxu0 0.0
  %716 = vmatpush1.msra.mxu0 0.0
  %717 = vmatprep.subr.mxu0 0.0
  %718 = vmatpush1.msra.mxu0 0.0
  %719 = vmatprep.subr.mxu0 0.0
  %720 = vmatpush1.msra.mxu0 0.0
  %721 = vmatprep.subr.mxu0 0.0
  %722 = vmatpush1.msra.mxu0 0.0
  %723 = vmatprep.subr.mxu0 0.0
  %724 = vmatpush1.msra.mxu0 0.0
  %725 = vmatprep.subr.mxu0 0.0
  %726 = vmatpush1.msra.mxu0 0.0
  %727 = vmatprep.subr.mxu0 0.0
  %728 = vmatpush1.msra.mxu0 0.0
  %729 = vmatprep.subr.mxu0 0.0
  %730 = vmatpush1.msra.mxu0 0.0
  %731 = vmatprep.subr.mxu0 0.0
  %732 = vmatpush1.msra.mxu0 0.0
  %733 = vmatprep.subr.mxu0 0.0
  %734 = vmatpush1.msra.mxu0 0.0
  %735 = vmatprep.subr.mxu0 0.0
  %736 = vmatpush1.msra.mxu0 0.0
  %737 = vmatprep.subr.mxu0 0.0
  %738 = vmatpush1.msra.mxu0 0.0
  %739 = vmatprep.mubr.f32.mxu0 0.0
  %740 = vmatmul.mubr.f32.gmra.mrb[0].mxu0 %v664
  %v741 = vpop.f32.mrb[0].mxu0
  %v742 = vadd.f32 %v646, %v741
  %v743 = vpop.f32.mrb[0].mxu0
  %744 = vmatprep.mubr.f32.mxu0 0.0
  %745 = vmatmul.mubr.f32.gmra.mrb[0].mxu0 %v667
  %v746 = vpop.f32.mrb[0].mxu0
  %v747 = vadd.f32 %v651, %v746
  %v748 = vpop.f32.mrb[0].mxu0
  %749 = vmatprep.mubr.f32.mxu0 0.0
  %750 = vmatmul.mubr.f32.gmra.mrb[0].mxu0 %v670
  %v751 = vpop.f32.mrb[0].mxu0
  %v752 = vadd.f32 %v656, %v751
  %v753 = vpop.f32.mrb[0].mxu0
  %754 = vmatprep.mubr.f32.mxu0 0.0
  %755 = vmatmul.mubr.f32.gmra.mrb[0].mxu0 %v673
  %v756 = vpop.f32.mrb[0].mxu0
  %v757 = vadd.f32 %v661, %v756
  %v758 = vpop.f32.mrb[0].mxu0
  %759 = vdwg.mxu0
  %v760 = vtanh.pop %v742
  %v761 = vtanh.pop %v747
  %v762 = vxor.u32 %v752, 2147483648
  %v763 = vxor.u32 %v757, 2147483648
  %v764 = vmul.f32 %v762, 1.442695
  %v765 = vpow.pop %v764
  %v766 = vmul.f32 %v763, 1.442695
  %v767 = vpow.pop %v766
  %v768 = vadd.f32 %v765, 1.0
  %v769 = vadd.f32 %v767, 1.0
  %v770 = vrcp.pop %v768
  %v771 = vmul.f32 1.0, %v770
  %v772 = vrcp.pop %v769
  %v773 = vmul.f32 1.0, %v772
  %v774 = vmul.f32 %v760, %v771
  %v775 = vmul.f32 %v761, %v773
  %s776 = scalar_lea.vmem %s9, 32
  %v777 = vld [vmem:[%s776] sm:$0xff]
  %v778 = vld [vmem:[%s776 + $0x8] sm:$0xff]
  %v779 = vld [vmem:[%s776 + $0x10] sm:$0xff]
  %v780 = vld [vmem:[%s776 + $0x18] sm:$0xff]
  %s781 = scalar_lea.vmem %s10, 32
  %v782 = vld [vmem:[%s781] sm:$0xff]
  %v783 = vld [vmem:[%s781 + $0x8] sm:$0xff]
  %v784 = vld [vmem:[%s781 + $0x10] sm:$0xff]
  %v785 = vld [vmem:[%s781 + $0x18] sm:$0xff]
  %787 = vset.pattern.permute.xlu0 0
  %788 = vperm.xlu0 %787, %v782
  %v789 = vpop.permute.xlu0 %788
  %792 = vset.pattern.permute.xlu0 0
  %793 = vperm.xlu0 %792, %v783
  %v794 = vpop.permute.xlu0 %793
  %797 = vset.pattern.permute.xlu0 0
  %798 = vperm.xlu0 %797, %v784
  %v799 = vpop.permute.xlu0 %798
  %801 = vset.pattern.permute.xlu0 0
  %802 = vperm.xlu0 %801, %v785
  %v803 = vpop.permute.xlu0 %802
  %v805 = vsel %vm493, %v777, 0
  %v808 = vsel %vm493, %v778, 0
  %v811 = vsel %vm493, %v779, 0
  %v814 = vsel %vm493, %v780, 0
  %816 = vmatprep.subr.mxu0 0.0
  %817 = vmatpush1.msra.mxu0 %v774
  %818 = vmatprep.subr.mxu0 0.0
  %819 = vmatpush1.msra.mxu0 %v775
  %820 = vmatprep.subr.mxu0 0.0
  %821 = vmatpush1.msra.mxu0 0.0
  %822 = vmatprep.subr.mxu0 0.0
  %823 = vmatpush1.msra.mxu0 0.0
  %824 = vmatprep.subr.mxu0 0.0
  %825 = vmatpush1.msra.mxu0 0.0
  %826 = vmatprep.subr.mxu0 0.0
  %827 = vmatpush1.msra.mxu0 0.0
  %828 = vmatprep.subr.mxu0 0.0
  %829 = vmatpush1.msra.mxu0 0.0
  %830 = vmatprep.subr.mxu0 0.0
  %831 = vmatpush1.msra.mxu0 0.0
  %832 = vmatprep.subr.mxu0 0.0
  %833 = vmatpush1.msra.mxu0 0.0
  %834 = vmatprep.subr.mxu0 0.0
  %835 = vmatpush1.msra.mxu0 0.0
  %836 = vmatprep.subr.mxu0 0.0
  %837 = vmatpush1.msra.mxu0 0.0
  %838 = vmatprep.subr.mxu0 0.0
  %839 = vmatpush1.msra.mxu0 0.0
  %840 = vmatprep.subr.mxu0 0.0
  %841 = vmatpush1.msra.mxu0 0.0
  %842 = vmatprep.subr.mxu0 0.0
  %843 = vmatpush1.msra.mxu0 0.0
  %844 = vmatprep.subr.mxu0 0.0
  %845 = vmatpush1.msra.mxu0 0.0
  %846 = vmatprep.subr.mxu0 0.0
  %847 = vmatpush1.msra.mxu0 0.0
  %848 = vmatprep.subr.mxu0 0.0
  %849 = vmatpush1.msra.mxu0 0.0
  %850 = vmatprep.subr.mxu0 0.0
  %851 = vmatpush1.msra.mxu0 0.0
  %852 = vmatprep.subr.mxu0 0.0
  %853 = vmatpush1.msra.mxu0 0.0
  %854 = vmatprep.subr.mxu0 0.0
  %855 = vmatpush1.msra.mxu0 0.0
  %856 = vmatprep.subr.mxu0 0.0
  %857 = vmatpush1.msra.mxu0 0.0
  %858 = vmatprep.subr.mxu0 0.0
  %859 = vmatpush1.msra.mxu0 0.0
  %860 = vmatprep.subr.mxu0 0.0
  %861 = vmatpush1.msra.mxu0 0.0
  %862 = vmatprep.subr.mxu0 0.0
  %863 = vmatpush1.msra.mxu0 0.0
  %864 = vmatprep.subr.mxu0 0.0
  %865 = vmatpush1.msra.mxu0 0.0
  %866 = vmatprep.subr.mxu0 0.0
  %867 = vmatpush1.msra.mxu0 0.0
  %868 = vmatprep.subr.mxu0 0.0
  %869 = vmatpush1.msra.mxu0 0.0
  %870 = vmatprep.subr.mxu0 0.0
  %871 = vmatpush1.msra.mxu0 0.0
  %872 = vmatprep.subr.mxu0 0.0
  %873 = vmatpush1.msra.mxu0 0.0
  %874 = vmatprep.subr.mxu0 0.0
  %875 = vmatpush1.msra.mxu0 0.0
  %876 = vmatprep.subr.mxu0 0.0
  %877 = vmatpush1.msra.mxu0 0.0
  %878 = vmatprep.subr.mxu0 0.0
  %879 = vmatpush1.msra.mxu0 0.0
  %880 = vmatprep.mubr.f32.mxu0 0.0
  %881 = vmatmul.mubr.f32.gmra.mrb[0].mxu0 %v805
  %v882 = vpop.f32.mrb[0].mxu0
  %v883 = vadd.f32 %v789, %v882
  %v884 = vpop.f32.mrb[0].mxu0
  %885 = vmatprep.mubr.f32.mxu0 0.0
  %886 = vmatmul.mubr.f32.gmra.mrb[0].mxu0 %v808
  %v887 = vpop.f32.mrb[0].mxu0
  %v888 = vadd.f32 %v794, %v887
  %v889 = vpop.f32.mrb[0].mxu0
  %890 = vmatprep.mubr.f32.mxu0 0.0
  %891 = vmatmul.mubr.f32.gmra.mrb[0].mxu0 %v811
  %v892 = vpop.f32.mrb[0].mxu0
  %v893 = vpop.f32.mrb[0].mxu0
  %894 = vmatprep.mubr.f32.mxu0 0.0
  %895 = vmatmul.mubr.f32.gmra.mrb[0].mxu0 %v814
  %v896 = vpop.f32.mrb[0].mxu0
  %v897 = vpop.f32.mrb[0].mxu0
  %898 = vdwg.mxu0
  %v899 = vadd.f32 %v595, %v883
  %v900 = vadd.f32 %v596, %v888
  %v901 = vmul.f32 %v899, %v106
  %v902 = vmul.f32 %v900, %v106
  %v903 = vld [vmem:[%s11] sm:$0xff]
  %v904 = vld [vmem:[%s12] sm:$0xff]
  %906 = vset.pattern.permute.xlu0 0
  %907 = vperm.xlu0 %906, %v904
  %v908 = vpop.permute.xlu0 %907
  %v911 = vsel %vm493, %v903, 0
  %913 = vmatprep.subr.mxu0 0.0
  %914 = vmatpush1.msra.mxu0 %v901
  %915 = vmatprep.subr.mxu0 0.0
  %916 = vmatpush1.msra.mxu0 %v902
  %917 = vmatprep.subr.mxu0 0.0
  %918 = vmatpush1.msra.mxu0 0.0
  %919 = vmatprep.subr.mxu0 0.0
  %920 = vmatpush1.msra.mxu0 0.0
  %921 = vmatprep.subr.mxu0 0.0
  %922 = vmatpush1.msra.mxu0 0.0
  %923 = vmatprep.subr.mxu0 0.0
  %924 = vmatpush1.msra.mxu0 0.0
  %925 = vmatprep.subr.mxu0 0.0
  %926 = vmatpush1.msra.mxu0 0.0
  %927 = vmatprep.subr.mxu0 0.0
  %928 = vmatpush1.msra.mxu0 0.0
  %929 = vmatprep.subr.mxu0 0.0
  %930 = vmatpush1.msra.mxu0 0.0
  %931 = vmatprep.subr.mxu0 0.0
  %932 = vmatpush1.msra.mxu0 0.0
  %933 = vmatprep.subr.mxu0 0.0
  %934 = vmatpush1.msra.mxu0 0.0
  %935 = vmatprep.subr.mxu0 0.0
  %936 = vmatpush1.msra.mxu0 0.0
  %937 = vmatprep.subr.mxu0 0.0
  %938 = vmatpush1.msra.mxu0 0.0
  %939 = vmatprep.subr.mxu0 0.0
  %940 = vmatpush1.msra.mxu0 0.0
  %941 = vmatprep.subr.mxu0 0.0
  %942 = vmatpush1.msra.mxu0 0.0
  %943 = vmatprep.subr.mxu0 0.0
  %944 = vmatpush1.msra.mxu0 0.0
  %945 = vmatprep.subr.mxu0 0.0
  %946 = vmatpush1.msra.mxu0 0.0
  %947 = vmatprep.subr.mxu0 0.0
  %948 = vmatpush1.msra.mxu0 0.0
  %949 = vmatprep.subr.mxu0 0.0
  %950 = vmatpush1.msra.mxu0 0.0
  %951 = vmatprep.subr.mxu0 0.0
  %952 = vmatpush1.msra.mxu0 0.0
  %953 = vmatprep.subr.mxu0 0.0
  %954 = vmatpush1.msra.mxu0 0.0
  %955 = vmatprep.subr.mxu0 0.0
  %956 = vmatpush1.msra.mxu0 0.0
  %957 = vmatprep.subr.mxu0 0.0
  %958 = vmatpush1.msra.mxu0 0.0
  %959 = vmatprep.subr.mxu0 0.0
  %960 = vmatpush1.msra.mxu0 0.0
  %961 = vmatprep.subr.mxu0 0.0
  %962 = vmatpush1.msra.mxu0 0.0
  %963 = vmatprep.subr.mxu0 0.0
  %964 = vmatpush1.msra.mxu0 0.0
  %965 = vmatprep.subr.mxu0 0.0
  %966 = vmatpush1.msra.mxu0 0.0
  %967 = vmatprep.subr.mxu0 0.0
  %968 = vmatpush1.msra.mxu0 0.0
  %969 = vmatprep.subr.mxu0 0.0
  %970 = vmatpush1.msra.mxu0 0.0
  %971 = vmatprep.subr.mxu0 0.0
  %972 = vmatpush1.msra.mxu0 0.0
  %973 = vmatprep.subr.mxu0 0.0
  %974 = vmatpush1.msra.mxu0 0.0
  %975 = vmatprep.subr.mxu0 0.0
  %976 = vmatpush1.msra.mxu0 0.0
  %977 = vmatprep.mubr.f32.mxu0 0.0
  %978 = vmatmul.mubr.f32.gmra.mrb[0].mxu0 %v911
  %v979 = vpop.f32.mrb[0].mxu0
  %v980 = vadd.f32 %v908, %v979
  %v981 = vpop.f32.mrb[0].mxu0
  %982 = vdwg.mxu0
  %v983 = vmul.f32 %v980, 1.442695
  %v984 = vpow.pop %v983
  %v985 = vmul.f32 %v984, %v184
  %v987 = vrot.slane %v985, 4
  %v989 = vadd.f32 %v980, %v987
  %v990 = vmul.f32 %v989, %v106
  %v991 = vmul.f32 %v980, %v106
  %v993 = vrot.slane %v991, 4
  %vm995 = vcmask 125952
  %v996 = vsel %vm995, %v993, 0.0
  %v997 = vrot.slane %v996, 4
  %v998 = vadd.f32 %v996, %v997
  %v999 = vrot.slane %v998, 2
  %v1000 = vadd.f32 %v998, %v999
  %v1001 = vrot.slane %v1000, 1
  %v1002 = vadd.f32 %v1000, %v1001
  %vm1003 = vcmask 122880
  %1004 = vst.msk [vmem:[%s14] sm:$0x1] %vm1003, %v1002
  %v1006 = vrot.slane %v990, 4
  %v1008 = vsel %vm206, %v184, %v1006
  %s1009 = scalar_lea.vmem %s3, 8
  %v1010 = vld [vmem:[%s1009] sm:$0xff]
  %s1011 = scalar_lea.vmem %s2, 8
  %v1012 = vld [vmem:[%s1011] sm:$0xff]
  %v1013 = vmul.f32 %v1012, 1.442695
  %v1014 = vpow.pop %v1013
  %1016 = vset.pattern.permute.xlu0 0
  %1017 = vperm.xlu0 %1016, %v1014
  %v1018 = vpop.permute.xlu0 %1017
  %v1020 = vmul.f32 %v1018, %v1008
  %1022 = vset.pattern.permute.xlu0 0
  %1023 = vperm.xlu0 %1022, %v1010
  %v1024 = vpop.permute.xlu0 %1023
  %v1026 = vadd.f32 %v1024, %v1020
  %v1027 = vmul.f32 %v1026, %v106
  %s1028 = scalar_lea.vmem %s4, 8
  %v1029 = vld [vmem:[%s1028] sm:$0xff]
  %v1031 = vsel %vm110, %v1029, 0
  %1033 = vmatprep.subr.mxu0 0.0
  %1034 = vmatpush1.msra.mxu0 %v1027
  %1035 = vmatprep.subr.mxu0 0.0
  %1036 = vmatpush1.msra.mxu0 0.0
  %1037 = vmatprep.subr.mxu0 0.0
  %1038 = vmatpush1.msra.mxu0 0.0
  %1039 = vmatprep.subr.mxu0 0.0
  %1040 = vmatpush1.msra.mxu0 0.0
  %1041 = vmatprep.subr.mxu0 0.0
  %1042 = vmatpush1.msra.mxu0 0.0
  %1043 = vmatprep.subr.mxu0 0.0
  %1044 = vmatpush1.msra.mxu0 0.0
  %1045 = vmatprep.subr.mxu0 0.0
  %1046 = vmatpush1.msra.mxu0 0.0
  %1047 = vmatprep.subr.mxu0 0.0
  %1048 = vmatpush1.msra.mxu0 0.0
  %1049 = vmatprep.subr.mxu0 0.0
  %1050 = vmatpush1.msra.mxu0 0.0
  %1051 = vmatprep.subr.mxu0 0.0
  %1052 = vmatpush1.msra.mxu0 0.0
  %1053 = vmatprep.subr.mxu0 0.0
  %1054 = vmatpush1.msra.mxu0 0.0
  %1055 = vmatprep.subr.mxu0 0.0
  %1056 = vmatpush1.msra.mxu0 0.0
  %1057 = vmatprep.subr.mxu0 0.0
  %1058 = vmatpush1.msra.mxu0 0.0
  %1059 = vmatprep.subr.mxu0 0.0
  %1060 = vmatpush1.msra.mxu0 0.0
  %1061 = vmatprep.subr.mxu0 0.0
  %1062 = vmatpush1.msra.mxu0 0.0
  %1063 = vmatprep.subr.mxu0 0.0
  %1064 = vmatpush1.msra.mxu0 0.0
  %1065 = vmatprep.subr.mxu0 0.0
  %1066 = vmatpush1.msra.mxu0 0.0
  %1067 = vmatprep.subr.mxu0 0.0
  %1068 = vmatpush1.msra.mxu0 0.0
  %1069 = vmatprep.subr.mxu0 0.0
  %1070 = vmatpush1.msra.mxu0 0.0
  %1071 = vmatprep.subr.mxu0 0.0
  %1072 = vmatpush1.msra.mxu0 0.0
  %1073 = vmatprep.subr.mxu0 0.0
  %1074 = vmatpush1.msra.mxu0 0.0
  %1075 = vmatprep.subr.mxu0 0.0
  %1076 = vmatpush1.msra.mxu0 0.0
  %1077 = vmatprep.subr.mxu0 0.0
  %1078 = vmatpush1.msra.mxu0 0.0
  %1079 = vmatprep.subr.mxu0 0.0
  %1080 = vmatpush1.msra.mxu0 0.0
  %1081 = vmatprep.subr.mxu0 0.0
  %1082 = vmatpush1.msra.mxu0 0.0
  %1083 = vmatprep.subr.mxu0 0.0
  %1084 = vmatpush1.msra.mxu0 0.0
  %1085 = vmatprep.subr.mxu0 0.0
  %1086 = vmatpush1.msra.mxu0 0.0
  %1087 = vmatprep.subr.mxu0 0.0
  %1088 = vmatpush1.msra.mxu0 0.0
  %1089 = vmatprep.subr.mxu0 0.0
  %1090 = vmatpush1.msra.mxu0 0.0
  %1091 = vmatprep.subr.mxu0 0.0
  %1092 = vmatpush1.msra.mxu0 0.0
  %1093 = vmatprep.subr.mxu0 0.0
  %1094 = vmatpush1.msra.mxu0 0.0
  %1095 = vmatprep.subr.mxu0 0.0
  %1096 = vmatpush1.msra.mxu0 0.0
  %1097 = vmatprep.mubr.f32.mxu0 0.0
  %1098 = vmatmul.mubr.f32.gmra.mrb[0].mxu0 %v1031
  %v1099 = vpop.f32.mrb[0].mxu0
  %v1100 = vadd.f32 0.0, %v1099
  %v1101 = vpop.f32.mrb[0].mxu0
  %1102 = vdwg.mxu0
  %v1103 = vmul.f32 %v1100, %v106
  %s1104 = scalar_lea.vmem %s5, 16
  %v1105 = vld [vmem:[%s1104] sm:$0xff]
  %v1106 = vld [vmem:[%s1104 + $0x8] sm:$0xff]
  %s1107 = scalar_lea.vmem %s6, 16
  %v1108 = vld [vmem:[%s1107] sm:$0xff]
  %v1109 = vld [vmem:[%s1107 + $0x8] sm:$0xff]
  %1111 = vset.pattern.permute.xlu0 0
  %1112 = vperm.xlu0 %1111, %v1108
  %v1113 = vpop.permute.xlu0 %1112
  %1116 = vset.pattern.permute.xlu0 0
  %1117 = vperm.xlu0 %1116, %v1109
  %v1118 = vpop.permute.xlu0 %1117
  %v1121 = vsel %vm199, %v1105, 0
  %v1124 = vsel %vm199, %v1106, 0
  %v1127 = vsel %vm206, %v1103, 0
  %1129 = vmatprep.subr.mxu0 0.0
  %1130 = vmatpush1.msra.mxu0 %v1127
  %1131 = vmatprep.subr.mxu0 0.0
  %1132 = vmatpush1.msra.mxu0 0.0
  %1133 = vmatprep.subr.mxu0 0.0
  %1134 = vmatpush1.msra.mxu0 0.0
  %1135 = vmatprep.subr.mxu0 0.0
  %1136 = vmatpush1.msra.mxu0 0.0
  %1137 = vmatprep.subr.mxu0 0.0
  %1138 = vmatpush1.msra.mxu0 0.0
  %1139 = vmatprep.subr.mxu0 0.0
  %1140 = vmatpush1.msra.mxu0 0.0
  %1141 = vmatprep.subr.mxu0 0.0
  %1142 = vmatpush1.msra.mxu0 0.0
  %1143 = vmatprep.subr.mxu0 0.0
  %1144 = vmatpush1.msra.mxu0 0.0
  %1145 = vmatprep.subr.mxu0 0.0
  %1146 = vmatpush1.msra.mxu0 0.0
  %1147 = vmatprep.subr.mxu0 0.0
  %1148 = vmatpush1.msra.mxu0 0.0
  %1149 = vmatprep.subr.mxu0 0.0
  %1150 = vmatpush1.msra.mxu0 0.0
  %1151 = vmatprep.subr.mxu0 0.0
  %1152 = vmatpush1.msra.mxu0 0.0
  %1153 = vmatprep.subr.mxu0 0.0
  %1154 = vmatpush1.msra.mxu0 0.0
  %1155 = vmatprep.subr.mxu0 0.0
  %1156 = vmatpush1.msra.mxu0 0.0
  %1157 = vmatprep.subr.mxu0 0.0
  %1158 = vmatpush1.msra.mxu0 0.0
  %1159 = vmatprep.subr.mxu0 0.0
  %1160 = vmatpush1.msra.mxu0 0.0
  %1161 = vmatprep.subr.mxu0 0.0
  %1162 = vmatpush1.msra.mxu0 0.0
  %1163 = vmatprep.subr.mxu0 0.0
  %1164 = vmatpush1.msra.mxu0 0.0
  %1165 = vmatprep.subr.mxu0 0.0
  %1166 = vmatpush1.msra.mxu0 0.0
  %1167 = vmatprep.subr.mxu0 0.0
  %1168 = vmatpush1.msra.mxu0 0.0
  %1169 = vmatprep.subr.mxu0 0.0
  %1170 = vmatpush1.msra.mxu0 0.0
  %1171 = vmatprep.subr.mxu0 0.0
  %1172 = vmatpush1.msra.mxu0 0.0
  %1173 = vmatprep.subr.mxu0 0.0
  %1174 = vmatpush1.msra.mxu0 0.0
  %1175 = vmatprep.subr.mxu0 0.0
  %1176 = vmatpush1.msra.mxu0 0.0
  %1177 = vmatprep.subr.mxu0 0.0
  %1178 = vmatpush1.msra.mxu0 0.0
  %1179 = vmatprep.subr.mxu0 0.0
  %1180 = vmatpush1.msra.mxu0 0.0
  %1181 = vmatprep.subr.mxu0 0.0
  %1182 = vmatpush1.msra.mxu0 0.0
  %1183 = vmatprep.subr.mxu0 0.0
  %1184 = vmatpush1.msra.mxu0 0.0
  %1185 = vmatprep.subr.mxu0 0.0
  %1186 = vmatpush1.msra.mxu0 0.0
  %1187 = vmatprep.subr.mxu0 0.0
  %1188 = vmatpush1.msra.mxu0 0.0
  %1189 = vmatprep.subr.mxu0 0.0
  %1190 = vmatpush1.msra.mxu0 0.0
  %1191 = vmatprep.subr.mxu0 0.0
  %1192 = vmatpush1.msra.mxu0 0.0
  %1193 = vmatprep.mubr.f32.mxu0 0.0
  %1194 = vmatmul.mubr.f32.gmra.mrb[0].mxu0 %v1121
  %v1195 = vpop.f32.mrb[0].mxu0
  %v1196 = vadd.f32 %v1113, %v1195
  %v1197 = vpop.f32.mrb[0].mxu0
  %1198 = vmatprep.mubr.f32.mxu0 0.0
  %1199 = vmatmul.mubr.f32.gmra.mrb[0].mxu0 %v1124
  %v1200 = vpop.f32.mrb[0].mxu0
  %v1201 = vadd.f32 %v1118, %v1200
  %v1202 = vpop.f32.mrb[0].mxu0
  %1203 = vdwg.mxu0
  %v1204 = vmul.f32 %v1196, %v106
  %v1205 = vmul.f32 %v1201, %v106
  %1208 = vrot.lane.b32.xlu0 %v1204, 113
  %v1209 = vpop.permute.xlu0 %1208
  %1210 = vrot.lane.b32.xlu0 %v1205, 113
  %v1211 = vpop.permute.xlu0 %1210
  %1214 = vrot.lane.b32.xlu0 %v1204, 1
  %v1215 = vpop.permute.xlu0 %1214
  %1216 = vrot.lane.b32.xlu0 %v1205, 1
  %v1217 = vpop.permute.xlu0 %1216
  %v1220 = vsel %vm301, %v1209, %v1215
  %v1221 = vsel %vm301, %v1211, %v1217
  %v1222 = vmul.f32 %v1220, %v67
  %v1223 = vmul.f32 %v1221, %v67
  %1224 = vrot.lane.b32.xlu0 %v1204, 127
  %v1225 = vpop.permute.xlu0 %1224
  %1226 = vrot.lane.b32.xlu0 %v1205, 127
  %v1227 = vpop.permute.xlu0 %1226
  %1230 = vrot.lane.b32.xlu0 %v1204, 15
  %v1231 = vpop.permute.xlu0 %1230
  %1232 = vrot.lane.b32.xlu0 %v1205, 15
  %v1233 = vpop.permute.xlu0 %1232
  %v1236 = vsel %vm318, %v1225, %v1231
  %v1237 = vsel %vm318, %v1227, %v1233
  %v1238 = vmul.f32 %v1236, %v73
  %v1239 = vmul.f32 %v1237, %v73
  %s1240 = scalar_lea.vmem %s7, 64
  %v1241 = vld [vmem:[%s1240] sm:$0xff]
  %v1242 = vld [vmem:[%s1240 + $0x8] sm:$0xff]
  %v1243 = vld [vmem:[%s1240 + $0x10] sm:$0xff]
  %v1244 = vld [vmem:[%s1240 + $0x18] sm:$0xff]
  %s1245 = scalar_lea.vmem %s8, 64
  %v1246 = vld [vmem:[%s1245] sm:$0xff]
  %v1247 = vld [vmem:[%s1245 + $0x8] sm:$0xff]
  %v1248 = vld [vmem:[%s1245 + $0x10] sm:$0xff]
  %v1249 = vld [vmem:[%s1245 + $0x18] sm:$0xff]
  %1251 = vset.pattern.permute.xlu0 0
  %1252 = vperm.xlu0 %1251, %v1246
  %v1253 = vpop.permute.xlu0 %1252
  %1256 = vset.pattern.permute.xlu0 0
  %1257 = vperm.xlu0 %1256, %v1247
  %v1258 = vpop.permute.xlu0 %1257
  %1261 = vset.pattern.permute.xlu0 0
  %1262 = vperm.xlu0 %1261, %v1248
  %v1263 = vpop.permute.xlu0 %1262
  %1266 = vset.pattern.permute.xlu0 0
  %1267 = vperm.xlu0 %1266, %v1249
  %v1268 = vpop.permute.xlu0 %1267
  %v1271 = vsel %vm351, %v1241, 0
  %v1274 = vsel %vm351, %v1242, 0
  %v1277 = vsel %vm351, %v1243, 0
  %v1280 = vsel %vm351, %v1244, 0
  %1282 = vmatprep.subr.mxu0 0.0
  %1283 = vmatpush1.msra.mxu0 %v1222
  %1284 = vmatprep.subr.mxu0 0.0
  %1285 = vmatpush1.msra.mxu0 %v1223
  %1286 = vmatprep.subr.mxu0 0.0
  %1287 = vmatpush1.msra.mxu0 %v1204
  %1288 = vmatprep.subr.mxu0 0.0
  %1289 = vmatpush1.msra.mxu0 %v1205
  %1290 = vmatprep.subr.mxu0 0.0
  %1291 = vmatpush1.msra.mxu0 %v1238
  %1292 = vmatprep.subr.mxu0 0.0
  %1293 = vmatpush1.msra.mxu0 %v1239
  %1294 = vmatprep.subr.mxu0 0.0
  %1295 = vmatpush1.msra.mxu0 0.0
  %1296 = vmatprep.subr.mxu0 0.0
  %1297 = vmatpush1.msra.mxu0 0.0
  %1298 = vmatprep.subr.mxu0 0.0
  %1299 = vmatpush1.msra.mxu0 0.0
  %1300 = vmatprep.subr.mxu0 0.0
  %1301 = vmatpush1.msra.mxu0 0.0
  %1302 = vmatprep.subr.mxu0 0.0
  %1303 = vmatpush1.msra.mxu0 0.0
  %1304 = vmatprep.subr.mxu0 0.0
  %1305 = vmatpush1.msra.mxu0 0.0
  %1306 = vmatprep.subr.mxu0 0.0
  %1307 = vmatpush1.msra.mxu0 0.0
  %1308 = vmatprep.subr.mxu0 0.0
  %1309 = vmatpush1.msra.mxu0 0.0
  %1310 = vmatprep.subr.mxu0 0.0
  %1311 = vmatpush1.msra.mxu0 0.0
  %1312 = vmatprep.subr.mxu0 0.0
  %1313 = vmatpush1.msra.mxu0 0.0
  %1314 = vmatprep.subr.mxu0 0.0
  %1315 = vmatpush1.msra.mxu0 0.0
  %1316 = vmatprep.subr.mxu0 0.0
  %1317 = vmatpush1.msra.mxu0 0.0
  %1318 = vmatprep.subr.mxu0 0.0
  %1319 = vmatpush1.msra.mxu0 0.0
  %1320 = vmatprep.subr.mxu0 0.0
  %1321 = vmatpush1.msra.mxu0 0.0
  %1322 = vmatprep.subr.mxu0 0.0
  %1323 = vmatpush1.msra.mxu0 0.0
  %1324 = vmatprep.subr.mxu0 0.0
  %1325 = vmatpush1.msra.mxu0 0.0
  %1326 = vmatprep.subr.mxu0 0.0
  %1327 = vmatpush1.msra.mxu0 0.0
  %1328 = vmatprep.subr.mxu0 0.0
  %1329 = vmatpush1.msra.mxu0 0.0
  %1330 = vmatprep.subr.mxu0 0.0
  %1331 = vmatpush1.msra.mxu0 0.0
  %1332 = vmatprep.subr.mxu0 0.0
  %1333 = vmatpush1.msra.mxu0 0.0
  %1334 = vmatprep.subr.mxu0 0.0
  %1335 = vmatpush1.msra.mxu0 0.0
  %1336 = vmatprep.subr.mxu0 0.0
  %1337 = vmatpush1.msra.mxu0 0.0
  %1338 = vmatprep.subr.mxu0 0.0
  %1339 = vmatpush1.msra.mxu0 0.0
  %1340 = vmatprep.subr.mxu0 0.0
  %1341 = vmatpush1.msra.mxu0 0.0
  %1342 = vmatprep.subr.mxu0 0.0
  %1343 = vmatpush1.msra.mxu0 0.0
  %1344 = vmatprep.subr.mxu0 0.0
  %1345 = vmatpush1.msra.mxu0 0.0
  %1346 = vmatprep.mubr.f32.mxu0 0.0
  %1347 = vmatmul.mubr.f32.gmra.mrb[0].mxu0 %v1271
  %v1348 = vpop.f32.mrb[0].mxu0
  %v1349 = vadd.f32 %v1253, %v1348
  %v1350 = vpop.f32.mrb[0].mxu0
  %1351 = vmatprep.mubr.f32.mxu0 0.0
  %1352 = vmatmul.mubr.f32.gmra.mrb[0].mxu0 %v1274
  %v1353 = vpop.f32.mrb[0].mxu0
  %v1354 = vadd.f32 %v1258, %v1353
  %v1355 = vpop.f32.mrb[0].mxu0
  %1356 = vmatprep.mubr.f32.mxu0 0.0
  %1357 = vmatmul.mubr.f32.gmra.mrb[0].mxu0 %v1277
  %v1358 = vpop.f32.mrb[0].mxu0
  %v1359 = vadd.f32 %v1263, %v1358
  %v1360 = vpop.f32.mrb[0].mxu0
  %1361 = vmatprep.mubr.f32.mxu0 0.0
  %1362 = vmatmul.mubr.f32.gmra.mrb[0].mxu0 %v1280
  %v1363 = vpop.f32.mrb[0].mxu0
  %v1364 = vadd.f32 %v1268, %v1363
  %v1365 = vpop.f32.mrb[0].mxu0
  %1366 = vdwg.mxu0
  %v1367 = vtanh.pop %v1349
  %v1368 = vtanh.pop %v1354
  %v1369 = vxor.u32 %v1359, 2147483648
  %v1370 = vxor.u32 %v1364, 2147483648
  %v1371 = vmul.f32 %v1369, 1.442695
  %v1372 = vpow.pop %v1371
  %v1373 = vmul.f32 %v1370, 1.442695
  %v1374 = vpow.pop %v1373
  %v1375 = vadd.f32 %v1372, 1.0
  %v1376 = vadd.f32 %v1374, 1.0
  %v1377 = vrcp.pop %v1375
  %v1378 = vmul.f32 1.0, %v1377
  %v1379 = vrcp.pop %v1376
  %v1380 = vmul.f32 1.0, %v1379
  %v1381 = vmul.f32 %v1367, %v1378
  %v1382 = vmul.f32 %v1368, %v1380
  %s1383 = scalar_lea.vmem %s9, 64
  %v1384 = vld [vmem:[%s1383] sm:$0xff]
  %v1385 = vld [vmem:[%s1383 + $0x8] sm:$0xff]
  %v1386 = vld [vmem:[%s1383 + $0x10] sm:$0xff]
  %v1387 = vld [vmem:[%s1383 + $0x18] sm:$0xff]
  %s1388 = scalar_lea.vmem %s10, 64
  %v1389 = vld [vmem:[%s1388] sm:$0xff]
  %v1390 = vld [vmem:[%s1388 + $0x8] sm:$0xff]
  %v1391 = vld [vmem:[%s1388 + $0x10] sm:$0xff]
  %v1392 = vld [vmem:[%s1388 + $0x18] sm:$0xff]
  %1394 = vset.pattern.permute.xlu0 0
  %1395 = vperm.xlu0 %1394, %v1389
  %v1396 = vpop.permute.xlu0 %1395
  %1399 = vset.pattern.permute.xlu0 0
  %1400 = vperm.xlu0 %1399, %v1390
  %v1401 = vpop.permute.xlu0 %1400
  %1404 = vset.pattern.permute.xlu0 0
  %1405 = vperm.xlu0 %1404, %v1391
  %v1406 = vpop.permute.xlu0 %1405
  %1409 = vset.pattern.permute.xlu0 0
  %1410 = vperm.xlu0 %1409, %v1392
  %v1411 = vpop.permute.xlu0 %1410
  %v1414 = vsel %vm493, %v1384, 0
  %v1417 = vsel %vm493, %v1385, 0
  %v1420 = vsel %vm493, %v1386, 0
  %v1423 = vsel %vm493, %v1387, 0
  %1425 = vmatprep.subr.mxu0 0.0
  %1426 = vmatpush1.msra.mxu0 %v1381
  %1427 = vmatprep.subr.mxu0 0.0
  %1428 = vmatpush1.msra.mxu0 %v1382
  %1429 = vmatprep.subr.mxu0 0.0
  %1430 = vmatpush1.msra.mxu0 0.0
  %1431 = vmatprep.subr.mxu0 0.0
  %1432 = vmatpush1.msra.mxu0 0.0
  %1433 = vmatprep.subr.mxu0 0.0
  %1434 = vmatpush1.msra.mxu0 0.0
  %1435 = vmatprep.subr.mxu0 0.0
  %1436 = vmatpush1.msra.mxu0 0.0
  %1437 = vmatprep.subr.mxu0 0.0
  %1438 = vmatpush1.msra.mxu0 0.0
  %1439 = vmatprep.subr.mxu0 0.0
  %1440 = vmatpush1.msra.mxu0 0.0
  %1441 = vmatprep.subr.mxu0 0.0
  %1442 = vmatpush1.msra.mxu0 0.0
  %1443 = vmatprep.subr.mxu0 0.0
  %1444 = vmatpush1.msra.mxu0 0.0
  %1445 = vmatprep.subr.mxu0 0.0
  %1446 = vmatpush1.msra.mxu0 0.0
  %1447 = vmatprep.subr.mxu0 0.0
  %1448 = vmatpush1.msra.mxu0 0.0
  %1449 = vmatprep.subr.mxu0 0.0
  %1450 = vmatpush1.msra.mxu0 0.0
  %1451 = vmatprep.subr.mxu0 0.0
  %1452 = vmatpush1.msra.mxu0 0.0
  %1453 = vmatprep.subr.mxu0 0.0
  %1454 = vmatpush1.msra.mxu0 0.0
  %1455 = vmatprep.subr.mxu0 0.0
  %1456 = vmatpush1.msra.mxu0 0.0
  %1457 = vmatprep.subr.mxu0 0.0
  %1458 = vmatpush1.msra.mxu0 0.0
  %1459 = vmatprep.subr.mxu0 0.0
  %1460 = vmatpush1.msra.mxu0 0.0
  %1461 = vmatprep.subr.mxu0 0.0
  %1462 = vmatpush1.msra.mxu0 0.0
  %1463 = vmatprep.subr.mxu0 0.0
  %1464 = vmatpush1.msra.mxu0 0.0
  %1465 = vmatprep.subr.mxu0 0.0
  %1466 = vmatpush1.msra.mxu0 0.0
  %1467 = vmatprep.subr.mxu0 0.0
  %1468 = vmatpush1.msra.mxu0 0.0
  %1469 = vmatprep.subr.mxu0 0.0
  %1470 = vmatpush1.msra.mxu0 0.0
  %1471 = vmatprep.subr.mxu0 0.0
  %1472 = vmatpush1.msra.mxu0 0.0
  %1473 = vmatprep.subr.mxu0 0.0
  %1474 = vmatpush1.msra.mxu0 0.0
  %1475 = vmatprep.subr.mxu0 0.0
  %1476 = vmatpush1.msra.mxu0 0.0
  %1477 = vmatprep.subr.mxu0 0.0
  %1478 = vmatpush1.msra.mxu0 0.0
  %1479 = vmatprep.subr.mxu0 0.0
  %1480 = vmatpush1.msra.mxu0 0.0
  %1481 = vmatprep.subr.mxu0 0.0
  %1482 = vmatpush1.msra.mxu0 0.0
  %1483 = vmatprep.subr.mxu0 0.0
  %1484 = vmatpush1.msra.mxu0 0.0
  %1485 = vmatprep.subr.mxu0 0.0
  %1486 = vmatpush1.msra.mxu0 0.0
  %1487 = vmatprep.subr.mxu0 0.0
  %1488 = vmatpush1.msra.mxu0 0.0
  %1489 = vmatprep.mubr.f32.mxu0 0.0
  %1490 = vmatmul.mubr.f32.gmra.mrb[0].mxu0 %v1414
  %v1491 = vpop.f32.mrb[0].mxu0
  %v1492 = vadd.f32 %v1396, %v1491
  %v1493 = vpop.f32.mrb[0].mxu0
  %1494 = vmatprep.mubr.f32.mxu0 0.0
  %1495 = vmatmul.mubr.f32.gmra.mrb[0].mxu0 %v1417
  %v1496 = vpop.f32.mrb[0].mxu0
  %v1497 = vadd.f32 %v1401, %v1496
  %v1498 = vpop.f32.mrb[0].mxu0
  %1499 = vmatprep.mubr.f32.mxu0 0.0
  %1500 = vmatmul.mubr.f32.gmra.mrb[0].mxu0 %v1420
  %v1501 = vpop.f32.mrb[0].mxu0
  %v1502 = vadd.f32 %v1406, %v1501
  %v1503 = vpop.f32.mrb[0].mxu0
  %1504 = vmatprep.mubr.f32.mxu0 0.0
  %1505 = vmatmul.mubr.f32.gmra.mrb[0].mxu0 %v1423
  %v1506 = vpop.f32.mrb[0].mxu0
  %v1507 = vadd.f32 %v1411, %v1506
  %v1508 = vpop.f32.mrb[0].mxu0
  %1509 = vdwg.mxu0
  %v1510 = vadd.f32 %v1204, %v1492
  %v1511 = vadd.f32 %v1205, %v1497
  %v1512 = vmul.f32 %v1510, %v106
  %v1513 = vmul.f32 %v1511, %v106
  %v1514 = vadd.f32 %v1502, 0.0
  %v1515 = vadd.f32 %v1507, 0.0
  %1518 = vrot.lane.b32.xlu0 %v1512, 114
  %v1519 = vpop.permute.xlu0 %1518
  %1520 = vrot.lane.b32.xlu0 %v1513, 114
  %v1521 = vpop.permute.xlu0 %1520
  %1524 = vrot.lane.b32.xlu0 %v1512, 2
  %v1525 = vpop.permute.xlu0 %1524
  %1526 = vrot.lane.b32.xlu0 %v1513, 2
  %v1527 = vpop.permute.xlu0 %1526
  %v1530 = vsel %vm611, %v1519, %v1525
  %v1531 = vsel %vm611, %v1521, %v1527
  %v1532 = vmul.f32 %v1530, %v79
  %v1533 = vmul.f32 %v1531, %v79
  %1534 = vrot.lane.b32.xlu0 %v1512, 126
  %v1535 = vpop.permute.xlu0 %1534
  %1536 = vrot.lane.b32.xlu0 %v1513, 126
  %v1537 = vpop.permute.xlu0 %1536
  %1540 = vrot.lane.b32.xlu0 %v1512, 14
  %v1541 = vpop.permute.xlu0 %1540
  %1542 = vrot.lane.b32.xlu0 %v1513, 14
  %v1543 = vpop.permute.xlu0 %1542
  %v1546 = vsel %vm628, %v1535, %v1541
  %v1547 = vsel %vm628, %v1537, %v1543
  %v1548 = vmul.f32 %v1546, %v85
  %v1549 = vmul.f32 %v1547, %v85
  %s1550 = scalar_lea.vmem %s7, 96
  %v1551 = vld [vmem:[%s1550] sm:$0xff]
  %v1552 = vld [vmem:[%s1550 + $0x8] sm:$0xff]
  %v1553 = vld [vmem:[%s1550 + $0x10] sm:$0xff]
  %v1554 = vld [vmem:[%s1550 + $0x18] sm:$0xff]
  %s1555 = scalar_lea.vmem %s8, 96
  %v1556 = vld [vmem:[%s1555] sm:$0xff]
  %v1557 = vld [vmem:[%s1555 + $0x8] sm:$0xff]
  %v1558 = vld [vmem:[%s1555 + $0x10] sm:$0xff]
  %v1559 = vld [vmem:[%s1555 + $0x18] sm:$0xff]
  %1561 = vset.pattern.permute.xlu0 0
  %1562 = vperm.xlu0 %1561, %v1556
  %v1563 = vpop.permute.xlu0 %1562
  %1566 = vset.pattern.permute.xlu0 0
  %1567 = vperm.xlu0 %1566, %v1557
  %v1568 = vpop.permute.xlu0 %1567
  %1571 = vset.pattern.permute.xlu0 0
  %1572 = vperm.xlu0 %1571, %v1558
  %v1573 = vpop.permute.xlu0 %1572
  %1576 = vset.pattern.permute.xlu0 0
  %1577 = vperm.xlu0 %1576, %v1559
  %v1578 = vpop.permute.xlu0 %1577
  %v1581 = vsel %vm351, %v1551, 0
  %v1584 = vsel %vm351, %v1552, 0
  %v1587 = vsel %vm351, %v1553, 0
  %v1590 = vsel %vm351, %v1554, 0
  %1592 = vmatprep.subr.mxu0 0.0
  %1593 = vmatpush1.msra.mxu0 %v1532
  %1594 = vmatprep.subr.mxu0 0.0
  %1595 = vmatpush1.msra.mxu0 %v1533
  %1596 = vmatprep.subr.mxu0 0.0
  %1597 = vmatpush1.msra.mxu0 %v1512
  %1598 = vmatprep.subr.mxu0 0.0
  %1599 = vmatpush1.msra.mxu0 %v1513
  %1600 = vmatprep.subr.mxu0 0.0
  %1601 = vmatpush1.msra.mxu0 %v1548
  %1602 = vmatprep.subr.mxu0 0.0
  %1603 = vmatpush1.msra.mxu0 %v1549
  %1604 = vmatprep.subr.mxu0 0.0
  %1605 = vmatpush1.msra.mxu0 0.0
  %1606 = vmatprep.subr.mxu0 0.0
  %1607 = vmatpush1.msra.mxu0 0.0
  %1608 = vmatprep.subr.mxu0 0.0
  %1609 = vmatpush1.msra.mxu0 0.0
  %1610 = vmatprep.subr.mxu0 0.0
  %1611 = vmatpush1.msra.mxu0 0.0
  %1612 = vmatprep.subr.mxu0 0.0
  %1613 = vmatpush1.msra.mxu0 0.0
  %1614 = vmatprep.subr.mxu0 0.0
  %1615 = vmatpush1.msra.mxu0 0.0
  %1616 = vmatprep.subr.mxu0 0.0
  %1617 = vmatpush1.msra.mxu0 0.0
  %1618 = vmatprep.subr.mxu0 0.0
  %1619 = vmatpush1.msra.mxu0 0.0
  %1620 = vmatprep.subr.mxu0 0.0
  %1621 = vmatpush1.msra.mxu0 0.0
  %1622 = vmatprep.subr.mxu0 0.0
  %1623 = vmatpush1.msra.mxu0 0.0
  %1624 = vmatprep.subr.mxu0 0.0
  %1625 = vmatpush1.msra.mxu0 0.0
  %1626 = vmatprep.subr.mxu0 0.0
  %1627 = vmatpush1.msra.mxu0 0.0
  %1628 = vmatprep.subr.mxu0 0.0
  %1629 = vmatpush1.msra.mxu0 0.0
  %1630 = vmatprep.subr.mxu0 0.0
  %1631 = vmatpush1.msra.mxu0 0.0
  %1632 = vmatprep.subr.mxu0 0.0
  %1633 = vmatpush1.msra.mxu0 0.0
  %1634 = vmatprep.subr.mxu0 0.0
  %1635 = vmatpush1.msra.mxu0 0.0
  %1636 = vmatprep.subr.mxu0 0.0
  %1637 = vmatpush1.msra.mxu0 0.0
  %1638 = vmatprep.subr.mxu0 0.0
  %1639 = vmatpush1.msra.mxu0 0.0
  %1640 = vmatprep.subr.mxu0 0.0
  %1641 = vmatpush1.msra.mxu0 0.0
  %1642 = vmatprep.subr.mxu0 0.0
  %1643 = vmatpush1.msra.mxu0 0.0
  %1644 = vmatprep.subr.mxu0 0.0
  %1645 = vmatpush1.msra.mxu0 0.0
  %1646 = vmatprep.subr.mxu0 0.0
  %1647 = vmatpush1.msra.mxu0 0.0
  %1648 = vmatprep.subr.mxu0 0.0
  %1649 = vmatpush1.msra.mxu0 0.0
  %1650 = vmatprep.subr.mxu0 0.0
  %1651 = vmatpush1.msra.mxu0 0.0
  %1652 = vmatprep.subr.mxu0 0.0
  %1653 = vmatpush1.msra.mxu0 0.0
  %1654 = vmatprep.subr.mxu0 0.0
  %1655 = vmatpush1.msra.mxu0 0.0
  %1656 = vmatprep.mubr.f32.mxu0 0.0
  %1657 = vmatmul.mubr.f32.gmra.mrb[0].mxu0 %v1581
  %v1658 = vpop.f32.mrb[0].mxu0
  %v1659 = vadd.f32 %v1563, %v1658
  %v1660 = vpop.f32.mrb[0].mxu0
  %1661 = vmatprep.mubr.f32.mxu0 0.0
  %1662 = vmatmul.mubr.f32.gmra.mrb[0].mxu0 %v1584
  %v1663 = vpop.f32.mrb[0].mxu0
  %v1664 = vadd.f32 %v1568, %v1663
  %v1665 = vpop.f32.mrb[0].mxu0
  %1666 = vmatprep.mubr.f32.mxu0 0.0
  %1667 = vmatmul.mubr.f32.gmra.mrb[0].mxu0 %v1587
  %v1668 = vpop.f32.mrb[0].mxu0
  %v1669 = vadd.f32 %v1573, %v1668
  %v1670 = vpop.f32.mrb[0].mxu0
  %1671 = vmatprep.mubr.f32.mxu0 0.0
  %1672 = vmatmul.mubr.f32.gmra.mrb[0].mxu0 %v1590
  %v1673 = vpop.f32.mrb[0].mxu0
  %v1674 = vadd.f32 %v1578, %v1673
  %v1675 = vpop.f32.mrb[0].mxu0
  %1676 = vdwg.mxu0
  %v1677 = vtanh.pop %v1659
  %v1678 = vtanh.pop %v1664
  %v1679 = vxor.u32 %v1669, 2147483648
  %v1680 = vxor.u32 %v1674, 2147483648
  %v1681 = vmul.f32 %v1679, 1.442695
  %v1682 = vpow.pop %v1681
  %v1683 = vmul.f32 %v1680, 1.442695
  %v1684 = vpow.pop %v1683
  %v1685 = vadd.f32 %v1682, 1.0
  %v1686 = vadd.f32 %v1684, 1.0
  %v1687 = vrcp.pop %v1685
  %v1688 = vmul.f32 1.0, %v1687
  %v1689 = vrcp.pop %v1686
  %v1690 = vmul.f32 1.0, %v1689
  %v1691 = vmul.f32 %v1677, %v1688
  %v1692 = vmul.f32 %v1678, %v1690
  %s1693 = scalar_lea.vmem %s9, 96
  %v1694 = vld [vmem:[%s1693] sm:$0xff]
  %v1695 = vld [vmem:[%s1693 + $0x8] sm:$0xff]
  %v1696 = vld [vmem:[%s1693 + $0x10] sm:$0xff]
  %v1697 = vld [vmem:[%s1693 + $0x18] sm:$0xff]
  %s1698 = scalar_lea.vmem %s10, 96
  %v1699 = vld [vmem:[%s1698] sm:$0xff]
  %v1700 = vld [vmem:[%s1698 + $0x8] sm:$0xff]
  %v1701 = vld [vmem:[%s1698 + $0x10] sm:$0xff]
  %v1702 = vld [vmem:[%s1698 + $0x18] sm:$0xff]
  %1704 = vset.pattern.permute.xlu0 0
  %1705 = vperm.xlu0 %1704, %v1699
  %v1706 = vpop.permute.xlu0 %1705
  %1709 = vset.pattern.permute.xlu0 0
  %1710 = vperm.xlu0 %1709, %v1700
  %v1711 = vpop.permute.xlu0 %1710
  %1714 = vset.pattern.permute.xlu0 0
  %1715 = vperm.xlu0 %1714, %v1701
  %v1716 = vpop.permute.xlu0 %1715
  %1718 = vset.pattern.permute.xlu0 0
  %1719 = vperm.xlu0 %1718, %v1702
  %v1720 = vpop.permute.xlu0 %1719
  %v1722 = vsel %vm493, %v1694, 0
  %v1725 = vsel %vm493, %v1695, 0
  %v1728 = vsel %vm493, %v1696, 0
  %v1731 = vsel %vm493, %v1697, 0
  %1733 = vmatprep.subr.mxu0 0.0
  %1734 = vmatpush1.msra.mxu0 %v1691
  %1735 = vmatprep.subr.mxu0 0.0
  %1736 = vmatpush1.msra.mxu0 %v1692
  %1737 = vmatprep.subr.mxu0 0.0
  %1738 = vmatpush1.msra.mxu0 0.0
  %1739 = vmatprep.subr.mxu0 0.0
  %1740 = vmatpush1.msra.mxu0 0.0
  %1741 = vmatprep.subr.mxu0 0.0
  %1742 = vmatpush1.msra.mxu0 0.0
  %1743 = vmatprep.subr.mxu0 0.0
  %1744 = vmatpush1.msra.mxu0 0.0
  %1745 = vmatprep.subr.mxu0 0.0
  %1746 = vmatpush1.msra.mxu0 0.0
  %1747 = vmatprep.subr.mxu0 0.0
  %1748 = vmatpush1.msra.mxu0 0.0
  %1749 = vmatprep.subr.mxu0 0.0
  %1750 = vmatpush1.msra.mxu0 0.0
  %1751 = vmatprep.subr.mxu0 0.0
  %1752 = vmatpush1.msra.mxu0 0.0
  %1753 = vmatprep.subr.mxu0 0.0
  %1754 = vmatpush1.msra.mxu0 0.0
  %1755 = vmatprep.subr.mxu0 0.0
  %1756 = vmatpush1.msra.mxu0 0.0
  %1757 = vmatprep.subr.mxu0 0.0
  %1758 = vmatpush1.msra.mxu0 0.0
  %1759 = vmatprep.subr.mxu0 0.0
  %1760 = vmatpush1.msra.mxu0 0.0
  %1761 = vmatprep.subr.mxu0 0.0
  %1762 = vmatpush1.msra.mxu0 0.0
  %1763 = vmatprep.subr.mxu0 0.0
  %1764 = vmatpush1.msra.mxu0 0.0
  %1765 = vmatprep.subr.mxu0 0.0
  %1766 = vmatpush1.msra.mxu0 0.0
  %1767 = vmatprep.subr.mxu0 0.0
  %1768 = vmatpush1.msra.mxu0 0.0
  %1769 = vmatprep.subr.mxu0 0.0
  %1770 = vmatpush1.msra.mxu0 0.0
  %1771 = vmatprep.subr.mxu0 0.0
  %1772 = vmatpush1.msra.mxu0 0.0
  %1773 = vmatprep.subr.mxu0 0.0
  %1774 = vmatpush1.msra.mxu0 0.0
  %1775 = vmatprep.subr.mxu0 0.0
  %1776 = vmatpush1.msra.mxu0 0.0
  %1777 = vmatprep.subr.mxu0 0.0
  %1778 = vmatpush1.msra.mxu0 0.0
  %1779 = vmatprep.subr.mxu0 0.0
  %1780 = vmatpush1.msra.mxu0 0.0
  %1781 = vmatprep.subr.mxu0 0.0
  %1782 = vmatpush1.msra.mxu0 0.0
  %1783 = vmatprep.subr.mxu0 0.0
  %1784 = vmatpush1.msra.mxu0 0.0
  %1785 = vmatprep.subr.mxu0 0.0
  %1786 = vmatpush1.msra.mxu0 0.0
  %1787 = vmatprep.subr.mxu0 0.0
  %1788 = vmatpush1.msra.mxu0 0.0
  %1789 = vmatprep.subr.mxu0 0.0
  %1790 = vmatpush1.msra.mxu0 0.0
  %1791 = vmatprep.subr.mxu0 0.0
  %1792 = vmatpush1.msra.mxu0 0.0
  %1793 = vmatprep.subr.mxu0 0.0
  %1794 = vmatpush1.msra.mxu0 0.0
  %1795 = vmatprep.subr.mxu0 0.0
  %1796 = vmatpush1.msra.mxu0 0.0
  %1797 = vmatprep.mubr.f32.mxu0 0.0
  %1798 = vmatmul.mubr.f32.gmra.mrb[0].mxu0 %v1722
  %v1799 = vpop.f32.mrb[0].mxu0
  %v1800 = vadd.f32 %v1706, %v1799
  %v1801 = vpop.f32.mrb[0].mxu0
  %1802 = vmatprep.mubr.f32.mxu0 0.0
  %1803 = vmatmul.mubr.f32.gmra.mrb[0].mxu0 %v1725
  %v1804 = vpop.f32.mrb[0].mxu0
  %v1805 = vadd.f32 %v1711, %v1804
  %v1806 = vpop.f32.mrb[0].mxu0
  %1807 = vmatprep.mubr.f32.mxu0 0.0
  %1808 = vmatmul.mubr.f32.gmra.mrb[0].mxu0 %v1728
  %v1809 = vpop.f32.mrb[0].mxu0
  %v1810 = vpop.f32.mrb[0].mxu0
  %1811 = vmatprep.mubr.f32.mxu0 0.0
  %1812 = vmatmul.mubr.f32.gmra.mrb[0].mxu0 %v1731
  %v1813 = vpop.f32.mrb[0].mxu0
  %v1814 = vpop.f32.mrb[0].mxu0
  %1815 = vdwg.mxu0
  %v1816 = vadd.f32 %v1514, %v1800
  %v1817 = vadd.f32 %v1515, %v1805
  %v1818 = vmul.f32 %v1816, %v106
  %v1819 = vmul.f32 %v1817, %v106
  %s1820 = scalar_lea.vmem %s11, 8
  %v1821 = vld [vmem:[%s1820] sm:$0xff]
  %s1822 = scalar_lea.vmem %s12, 8
  %v1823 = vld [vmem:[%s1822] sm:$0xff]
  %1825 = vset.pattern.permute.xlu0 0
  %1826 = vperm.xlu0 %1825, %v1823
  %v1827 = vpop.permute.xlu0 %1826
  %v1830 = vsel %vm493, %v1821, 0
  %1832 = vmatprep.subr.mxu0 0.0
  %1833 = vmatpush1.msra.mxu0 %v1818
  %1834 = vmatprep.subr.mxu0 0.0
  %1835 = vmatpush1.msra.mxu0 %v1819
  %1836 = vmatprep.subr.mxu0 0.0
  %1837 = vmatpush1.msra.mxu0 0.0
  %1838 = vmatprep.subr.mxu0 0.0
  %1839 = vmatpush1.msra.mxu0 0.0
  %1840 = vmatprep.subr.mxu0 0.0
  %1841 = vmatpush1.msra.mxu0 0.0
  %1842 = vmatprep.subr.mxu0 0.0
  %1843 = vmatpush1.msra.mxu0 0.0
  %1844 = vmatprep.subr.mxu0 0.0
  %1845 = vmatpush1.msra.mxu0 0.0
  %1846 = vmatprep.subr.mxu0 0.0
  %1847 = vmatpush1.msra.mxu0 0.0
  %1848 = vmatprep.subr.mxu0 0.0
  %1849 = vmatpush1.msra.mxu0 0.0
  %1850 = vmatprep.subr.mxu0 0.0
  %1851 = vmatpush1.msra.mxu0 0.0
  %1852 = vmatprep.subr.mxu0 0.0
  %1853 = vmatpush1.msra.mxu0 0.0
  %1854 = vmatprep.subr.mxu0 0.0
  %1855 = vmatpush1.msra.mxu0 0.0
  %1856 = vmatprep.subr.mxu0 0.0
  %1857 = vmatpush1.msra.mxu0 0.0
  %1858 = vmatprep.subr.mxu0 0.0
  %1859 = vmatpush1.msra.mxu0 0.0
  %1860 = vmatprep.subr.mxu0 0.0
  %1861 = vmatpush1.msra.mxu0 0.0
  %1862 = vmatprep.subr.mxu0 0.0
  %1863 = vmatpush1.msra.mxu0 0.0
  %1864 = vmatprep.subr.mxu0 0.0
  %1865 = vmatpush1.msra.mxu0 0.0
  %1866 = vmatprep.subr.mxu0 0.0
  %1867 = vmatpush1.msra.mxu0 0.0
  %1868 = vmatprep.subr.mxu0 0.0
  %1869 = vmatpush1.msra.mxu0 0.0
  %1870 = vmatprep.subr.mxu0 0.0
  %1871 = vmatpush1.msra.mxu0 0.0
  %1872 = vmatprep.subr.mxu0 0.0
  %1873 = vmatpush1.msra.mxu0 0.0
  %1874 = vmatprep.subr.mxu0 0.0
  %1875 = vmatpush1.msra.mxu0 0.0
  %1876 = vmatprep.subr.mxu0 0.0
  %1877 = vmatpush1.msra.mxu0 0.0
  %1878 = vmatprep.subr.mxu0 0.0
  %1879 = vmatpush1.msra.mxu0 0.0
  %1880 = vmatprep.subr.mxu0 0.0
  %1881 = vmatpush1.msra.mxu0 0.0
  %1882 = vmatprep.subr.mxu0 0.0
  %1883 = vmatpush1.msra.mxu0 0.0
  %1884 = vmatprep.subr.mxu0 0.0
  %1885 = vmatpush1.msra.mxu0 0.0
  %1886 = vmatprep.subr.mxu0 0.0
  %1887 = vmatpush1.msra.mxu0 0.0
  %1888 = vmatprep.subr.mxu0 0.0
  %1889 = vmatpush1.msra.mxu0 0.0
  %1890 = vmatprep.subr.mxu0 0.0
  %1891 = vmatpush1.msra.mxu0 0.0
  %1892 = vmatprep.subr.mxu0 0.0
  %1893 = vmatpush1.msra.mxu0 0.0
  %1894 = vmatprep.subr.mxu0 0.0
  %1895 = vmatpush1.msra.mxu0 0.0
  %1896 = vmatprep.mubr.f32.mxu0 0.0
  %1897 = vmatmul.mubr.f32.gmra.mrb[0].mxu0 %v1830
  %v1898 = vpop.f32.mrb[0].mxu0
  %v1899 = vadd.f32 %v1827, %v1898
  %v1900 = vpop.f32.mrb[0].mxu0
  %1901 = vdwg.mxu0
  %v1902 = vmul.f32 %v1899, 1.442695
  %v1903 = vpow.pop %v1902
  %v1904 = vmul.f32 %v1903, %v1103
  %v1906 = vrot.slane %v1904, 4
  %v1908 = vadd.f32 %v1899, %v1906
  %v1909 = vmul.f32 %v1908, %v106
  %v1910 = vmul.f32 %v1899, %v106
  %v1912 = vrot.slane %v1910, 4
  %v1914 = vsel %vm995, %v1912, 0.0
  %v1915 = vrot.slane %v1914, 4
  %v1916 = vadd.f32 %v1914, %v1915
  %v1917 = vrot.slane %v1916, 2
  %v1918 = vadd.f32 %v1916, %v1917
  %v1919 = vrot.slane %v1918, 1
  %v1920 = vadd.f32 %v1918, %v1919
  %s1921 = scalar_lea.vmem %s14, 1
  %1922 = vst.msk [vmem:[%s1921] sm:$0x1] %vm1003, %v1920
  %1923 = vst.msk [vmem:[%s13] sm:$0xf] %vm995, %v1103
  %1924 = vst.msk [vmem:[%s13 + $0x4] sm:$0xf] %vm995, %v1909
  // Predicated region
  $region54: #{decoder_forward.1} parent=0 // pred_check
    _
  $region55: #{decoder_forward.1} parent=0 // pred_check_branch
    %1926 = sbr.rel (0) target = $region57
  $region56: #{decoder_forward.1} parent=0 // pred_region
    _
  $region57: #{decoder_forward.1} parent=0 // pred_fallthru
    _
  // Predicated region
  $region58: #{decoder_forward.1} parent=0 // pred_check
    _
  $region59: #{decoder_forward.1} parent=0 // pred_check_branch
    %1928 = sbr.rel (0) target = $region61
  $region60: #{decoder_forward.1} parent=0 // pred_region
    _
  $region61: #{decoder_forward.1} parent=0 // pred_fallthru
    _
  // Predicated region
  $region62: #{decoder_forward.1} parent=0 // pred_check
    _
  $region63: #{decoder_forward.1} parent=0 // pred_check_branch
    %1930 = sbr.rel (0) target = $region65
  $region64: #{decoder_forward.1} parent=0 // pred_region
    _
  $region65: #{decoder_forward.1} parent=0 // pred_fallthru
    _
  // Predicated region
  $region66: #{decoder_forward.1} parent=0 // pred_check
    _
  $region67: #{decoder_forward.1} parent=0 // pred_check_branch
    %1932 = sbr.rel (0) target = $region69
  $region68: #{decoder_forward.1} parent=0 // pred_region
    _
  $region69: #{decoder_forward.1} parent=0 // pred_fallthru
    _

</llo_original>
